<compile_context>
chip_gen: v7x
topology: tpu7x:2x2x1
jax: 0.10.0
libtpu: 0.0.40
codegen_flags: <defaults>
</compile_context>

<pallas_src>
import functools

import jax
import jax.numpy as jnp
from jax import lax
from jax.experimental import pallas as pl
from jax.experimental.pallas import tpu as pltpu


def _silu_approx(t):
    """SiLU with the divide on the EUP approximate-reciprocal slot (f32).

    Input clamped at -60 so exp() cannot overflow f32; accuracy impact is far
    below the bf16 operand rounding already accepted.
    """
    e = jnp.exp(-jnp.maximum(t, -60.0))
    return t * pl.reciprocal(1.0 + e, approx=True)


def _res_conv_block_kernel(H, W, x_ref, w1r_ref, b1_ref, w2_ref, b2r_ref,
                           o_ref, wcat_ref):
    """Row-tile kernel. Grid = (batch, row_block); both axes parallel.

    x_ref   : (1, TH+2, Wp, Cin_p)      per-tile padded input window, bf16
    w1r_ref : (Cin_p, Cb_p + Co_p)      conv1 & residual_proj 1x1 weights fused
                                        along the output dim, BN scales folded
    b1_ref  : (1, Cb_p)                 folded BN1 bias (f32)
    w2_ref  : (3, 3*Cb_p, Co_p)         3x3 conv2 weight (ky, kx*Cb_p+c, cout),
                                        BN2 scale folded, bf16
    b2r_ref : (1, Co_p)                 folded BN2 + residual-BN bias (f32)
    o_ref   : (1, TH, W_c, Co_p)        output row tile (NHWC, bf16, lane-dense)
    wcat_ref: (TH+2, W_c, 3*Cb_p)       bf16 im2col slab scratch
    """
    _, TH, W_c, Co_p = o_ref.shape
    THp, Wp, Cin_p = x_ref.shape[1], x_ref.shape[2], x_ref.shape[3]
    Cb_p = b1_ref.shape[1]
    K3 = 3 * Cb_p
    M = TH * W_c

    row0 = pl.program_id(1) * TH                 # first padded-image row of tile

    # ---- conv1 (1x1) fused with residual_proj (1x1): one MXU matmul --------
    xh = x_ref[0].reshape(THp * Wp, Cin_p)       # Wp % 8 == 0 -> free view
    tr = jnp.dot(xh, w1r_ref[...], preferred_element_type=jnp.float32)

    # conv1 lanes: bias + SiLU (f32), then zero every out-of-image position so
    # the halo / width padding behaves exactly like conv2's zero padding.
    t = _silu_approx(tr[:, :Cb_p] + b1_ref[...])
    t3 = t.reshape(THp, Wp, Cb_p)
    rows = lax.broadcasted_iota(jnp.int32, (THp, Wp, 1), 0) + row0
    cols = lax.broadcasted_iota(jnp.int32, (THp, Wp, 1), 1)
    inside = (rows >= 1) & (rows <= H) & (cols >= 1) & (cols <= W)
    t3 = jnp.where(inside, t3, 0.0).astype(jnp.bfloat16)

    # ---- conv2 (3x3): build the kx-concatenated slab with three bf16
    #      lane-aligned stores into a persistent VMEM scratch ----------------
    wcat_ref[:, :, 0 * Cb_p:1 * Cb_p] = t3[:, 0:W_c, :]
    wcat_ref[:, :, 1 * Cb_p:2 * Cb_p] = t3[:, 1:W_c + 1, :]
    wcat_ref[:, :, 2 * Cb_p:3 * Cb_p] = t3[:, 2:W_c + 2, :]

    # ... then three K = 3*Cb_p matmuls over ky with aligned slab reads.
    acc = jnp.dot(wcat_ref[0:TH, :, :].reshape(M, K3), w2_ref[0],
                  preferred_element_type=jnp.float32)
    acc = acc + jnp.dot(wcat_ref[1:TH + 1, :, :].reshape(M, K3), w2_ref[1],
                        preferred_element_type=jnp.float32)
    acc = acc + jnp.dot(wcat_ref[2:TH + 2, :, :].reshape(M, K3), w2_ref[2],
                        preferred_element_type=jnp.float32)

    # ---- residual path: central window of the fused 1x1 matmul.  Cast to
    #      bf16 before the misaligned crop to halve the relayout bytes. ------
    res = tr[:, Cb_p:].astype(jnp.bfloat16).reshape(THp, Wp, Co_p)
    res = res[1:TH + 1, 1:W_c + 1, :].reshape(M, Co_p)

    # conv2 bias + residual BN bias pre-folded into b2r (one add).
    y = _silu_approx(acc + b2r_ref[...] + res)
    o_ref[0, :, :, :] = y.reshape(TH, W_c, Co_p).astype(o_ref.dtype)


def _fold_bn(gamma, beta, mean, var, eps=1e-5):
    s = gamma / jnp.sqrt(var + eps)
    return s, beta - mean * s


def _round_up(v, m):
    return ((v + m - 1) // m) * m


def _cdiv(a, b):
    return -(-a // b)


def _choose_row_tile(H, W_c, N):
    """TH*W_c ~ 2k, TH % 8 == 0, >= 2 grid steps overall (v7x has 2 TCs)."""
    target_m = 2048
    th = _round_up(max(8, min(H, max(1, target_m // W_c))), 8)
    th = min(th, _round_up(H, 8))
    while th > 8 and N * _cdiv(H, th) < 2:
        th = max(8, _round_up(th // 2, 8))
    # rebalance so the last row tile carries little padding waste
    r = _cdiv(H, th)
    th = min(th, _round_up(_cdiv(H, r), 8))
    return th


def _vmem_limit_bytes():
    """Generation-aware scoped-VMEM limit: ~75% of per-core VMEM
    (~48 MiB on v7x, ~96 MiB on v5e/v6e), clamped to a safe range."""
    try:
        cap = int(pltpu.get_tpu_info().vmem_capacity_bytes)
        return max(32 * 1024 * 1024, min((cap * 3) // 4, 112 * 1024 * 1024))
    except Exception:
        return 48 * 1024 * 1024


@functools.partial(jax.jit, static_argnames=("row_tile",))
def res_conv_block(x_nchw, w1_oihw, bn1, w2_oihw, bn2, wr_oihw, bnr,
                   row_tile=None):
    """ResConvBlock forward (k1kx, stride=1, SiLU, eval-mode BN).

    x_nchw : (N, Cin, H, W) f32
    w1_oihw: (Cbtn, Cin, 1, 1)   conv1 weight (PyTorch OIHW)
    w2_oihw: (Cout, Cbtn, 3, 3)  conv2 weight
    wr_oihw: (Cout, Cin, 1, 1)   residual_proj weight
    bn*    : (gamma, beta, running_mean, running_var)
    returns: (N, Cout, H, W) f32
    """
    N, Cin, H, W = x_nchw.shape
    Cbtn = w1_oihw.shape[0]
    Cout = w2_oihw.shape[0]

    Cin_p = _round_up(Cin, 128)
    Cb_p = _round_up(Cbtn, 128)
    Co_p = _round_up(Cout, 128)

    W_c = _round_up(W, 8)                  # 8-aligned compute / output width
    Wp = W_c + 8                           # 8-aligned padded input width (>= W+2)
    TH = row_tile if row_tile else _choose_row_tile(H, W_c, N)
    R = _cdiv(H, TH)
    H_c = R * TH
    THp = TH + 2

    # ---- fold BN into conv weights (scale) + bias ---------------------------
    s1, b1 = _fold_bn(*bn1)
    s2, b2 = _fold_bn(*bn2)
    sr, br = _fold_bn(*bnr)

    w1 = (w1_oihw[:, :, 0, 0] * s1[:, None]).T            # (Cin, Cbtn), scaled
    wr = (wr_oihw[:, :, 0, 0] * sr[:, None]).T            # (Cin, Cout), scaled
    w1r = jnp.zeros((Cin_p, Cb_p + Co_p), jnp.float32)
    w1r = w1r.at[:Cin, :Cbtn].set(w1)
    w1r = w1r.at[:Cin, Cb_p:Cb_p + Cout].set(wr)
    w1r = w1r.astype(jnp.bfloat16)

    w2 = jnp.transpose(w2_oihw, (2, 3, 1, 0)) * s2[None, None, None, :]
    w2p = jnp.zeros((3, 3, Cb_p, Co_p), jnp.float32)
    w2p = w2p.at[:, :, :Cbtn, :Cout].set(w2)
    w2p = w2p.reshape(3, 3 * Cb_p, Co_p).astype(jnp.bfloat16)

    b1p = jnp.zeros((1, Cb_p), jnp.float32).at[0, :Cbtn].set(b1)
    # conv2 bias and residual-BN bias are added to the same tensor -> fold once.
    b2rp = jnp.zeros((1, Co_p), jnp.float32).at[0, :Cout].set(b2 + br)

    # ---- NCHW -> NHWC bf16, channel pad to 128, 8-aligned spatial zero pad,
    #      then per-row-tile overlapping (TH+2)-row windows so only one slab
    #      (double buffered) is ever resident in VMEM. ------------------------
    x_nhwc = jnp.transpose(x_nchw, (0, 2, 3, 1)).astype(jnp.bfloat16)
    x_pad = jnp.zeros((N, H_c + 2, Wp, Cin_p), jnp.bfloat16)
    x_pad = x_pad.at[:, 1:H + 1, 1:W + 1, :Cin].set(x_nhwc)
    row_idx = jnp.arange(R)[:, None] * TH + jnp.arange(THp)[None, :]
    x_tiles = x_pad[:, row_idx].reshape(N * R, THp, Wp, Cin_p)
    # TODO(synk): in a full network keep activations NHWC channel-padded between
    # layers (and fetch the row halo with an in-kernel DMA) so this transpose /
    # pad / window-gather HBM round trip disappears.

    kernel = functools.partial(_res_conv_block_kernel, H, W)
    out = pl.pallas_call(
        kernel,
        out_shape=jax.ShapeDtypeStruct((N, H_c, W_c, Co_p), jnp.bfloat16),
        grid_spec=pltpu.PrefetchScalarGridSpec(
            num_scalar_prefetch=0,
            grid=(N, R),
            in_specs=[
                pl.BlockSpec((1, THp, Wp, Cin_p),
                             lambda n, r: (n * R + r, 0, 0, 0)),
                pl.BlockSpec((Cin_p, Cb_p + Co_p), lambda n, r: (0, 0)),
                pl.BlockSpec((1, Cb_p), lambda n, r: (0, 0)),
                pl.BlockSpec((3, 3 * Cb_p, Co_p), lambda n, r: (0, 0, 0)),
                pl.BlockSpec((1, Co_p), lambda n, r: (0, 0)),
            ],
            out_specs=pl.BlockSpec((1, TH, W_c, Co_p),
                                   lambda n, r: (n, r, 0, 0)),
            scratch_shapes=[pltpu.VMEM((THp, W_c, 3 * Cb_p), jnp.bfloat16)],
        ),
        compiler_params=pltpu.CompilerParams(
            dimension_semantics=("parallel", "parallel"),
            vmem_limit_bytes=_vmem_limit_bytes()),
    )(x_tiles, w1r, b1p, w2p, b2rp)

    # TODO(synk): downstream NHWC consumers can take `out` directly (bf16,
    # channel/width padded) and skip this slice + NCHW transpose + f32 cast.
    out = out[:, :H, :W, :Cout]
    return jnp.transpose(out, (0, 3, 1, 2)).astype(jnp.float32)


def _silu(t):
    return t * jax.nn.sigmoid(t)


def _ref_forward(x, w1_oihw, bn1, w2_oihw, bn2, wr_oihw, bnr):
    """Pure-JAX f32 reference (NCHW), same math as the PyTorch module in eval."""
    def conv(x, w, pad):
        return jax.lax.conv_general_dilated(
            x, w, window_strides=(1, 1), padding=pad,
            dimension_numbers=('NCHW', 'OIHW', 'NCHW'))

    def bn(x, p):
        g, b, m, v = p
        s = g / jnp.sqrt(v + 1e-5)
        return x * s[None, :, None, None] + (b - m * s)[None, :, None, None]

    reslink = bn(conv(x, wr_oihw, ((0, 0), (0, 0))), bnr)
    t = _silu(bn(conv(x, w1_oihw, ((0, 0), (0, 0))), bn1))
    y = bn(conv(t, w2_oihw, ((1, 1), (1, 1))), bn2)
    return _silu(y + reslink)


if __name__ == "__main__":
    key = jax.random.PRNGKey(0)
    ks = jax.random.split(key, 8)

    N, Cin, H, W = 2, 4, 16, 16
    Cbtn, Cout = 8, 16          # in_c != out_c, stride=1 -> residual_proj active

    x = jax.random.normal(ks[0], (N, Cin, H, W), jnp.float32)

    # Deterministic synthetic parameters (PyTorch OIHW conv layouts).
    w1_oihw = jax.random.normal(ks[1], (Cbtn, Cin, 1, 1), jnp.float32) * 0.3
    w2_oihw = jax.random.normal(ks[2], (Cout, Cbtn, 3, 3), jnp.float32) * 0.1
    wr_oihw = jax.random.normal(ks[3], (Cout, Cin, 1, 1), jnp.float32) * 0.3

    def bn_params(k, C):
        k1, k2, k3, k4 = jax.random.split(k, 4)
        gamma = jax.random.uniform(k1, (C,), jnp.float32, 0.5, 1.5)
        beta = jax.random.normal(k2, (C,), jnp.float32) * 0.1
        mean = jax.random.normal(k3, (C,), jnp.float32) * 0.1
        var = jax.random.uniform(k4, (C,), jnp.float32, 0.5, 1.5)
        return gamma, beta, mean, var

    bn1 = bn_params(ks[4], Cbtn)
    bn2 = bn_params(ks[5], Cout)
    bnr = bn_params(ks[6], Cout)

    out = res_conv_block(x, w1_oihw, bn1, w2_oihw, bn2, wr_oihw, bnr)
    out = jax.block_until_ready(out)

    ref = _ref_forward(x, w1_oihw, bn1, w2_oihw, bn2, wr_oihw, bnr)
    assert out.shape == (N, Cout, H, W)
    # bf16 matmul operands / bf16 output (f32 accumulation) -> bf16 tolerance.
    assert jnp.allclose(out, ref, rtol=3e-2, atol=3e-2), \
        f"max abs diff = {jnp.max(jnp.abs(out - ref))}"

    print("KERNEL_OK")
</pallas_src>

<mosaic_0001>
module attributes {stable_mosaic.version = 11 : i64} {
  func.func @_res_conv_block_kernel(%arg0: i32, %arg1: i32, %arg2: memref<1x18x24x128xbf16, #tpu.memory_space<vmem>>, %arg3: memref<128x256xbf16, #tpu.memory_space<vmem>>, %arg4: memref<1x128xf32, #tpu.memory_space<vmem>>, %arg5: memref<3x384x128xbf16, #tpu.memory_space<vmem>>, %arg6: memref<1x128xf32, #tpu.memory_space<vmem>>, %arg7: memref<1x16x16x128xbf16, #tpu.memory_space<vmem>>, %arg8: memref<18x16x384xbf16, #tpu.memory_space<vmem>>) attributes {dimension_semantics = [#tpu.dimension_semantics<parallel>, #tpu.dimension_semantics<parallel>], iteration_bounds = array<i64: 2, 1>, scalar_prefetch = 0 : i64, scratch_operands = 1 : i64, tpu.core_type = #tpu.core_type<tc>, window_params = [{transform_indices = @transform_0, window_bounds = array<i64: 1, 18, 24, 128>}, {pipeline_mode = #tpu.pipeline_mode<synchronous>, transform_indices = @transform_1, window_bounds = array<i64: 128, 256>}, {pipeline_mode = #tpu.pipeline_mode<synchronous>, transform_indices = @transform_2, window_bounds = array<i64: 1, 128>}, {pipeline_mode = #tpu.pipeline_mode<synchronous>, transform_indices = @transform_3, window_bounds = array<i64: 3, 384, 128>}, {pipeline_mode = #tpu.pipeline_mode<synchronous>, transform_indices = @transform_4, window_bounds = array<i64: 1, 128>}, {transform_indices = @transform_5, window_bounds = array<i64: 1, 16, 16, 128>}]} {
    %c16_i32 = arith.constant 16 : i32
    %0 = arith.muli %arg1, %c16_i32 : i32
    %c0 = arith.constant 0 : index
    %c0_0 = arith.constant 0 : index
    %c0_1 = arith.constant 0 : index
    %c0_2 = arith.constant 0 : index
    %1 = vector.load %arg2[%c0, %c0_0, %c0_1, %c0_2] : memref<1x18x24x128xbf16, #tpu.memory_space<vmem>>, vector<1x18x24x128xbf16>
    %2 = vector.shape_cast %1 : vector<1x18x24x128xbf16> to vector<18x24x128xbf16>
    %3 = vector.shape_cast %2 : vector<18x24x128xbf16> to vector<432x128xbf16>
    %c0_3 = arith.constant 0 : index
    %c0_4 = arith.constant 0 : index
    %4 = vector.load %arg3[%c0_3, %c0_4] : memref<128x256xbf16, #tpu.memory_space<vmem>>, vector<128x256xbf16>
    %cst = arith.constant dense<0.000000e+00> : vector<432x256xf32>
    %5 = tpu.matmul %3, %4, %cst {dimension_numbers = #tpu.dot_dimension_numbers<[1], [0], [0], [1], [0, 0, 1, 1], [], []>} : vector<432x128xbf16>, vector<128x256xbf16>, vector<432x256xf32> -> vector<432x256xf32>
    %6 = vector.extract_strided_slice %5 {offsets = [0, 0], sizes = [432, 128], strides = [1, 1]} : vector<432x256xf32> to vector<432x128xf32>
    %c0_5 = arith.constant 0 : index
    %c0_6 = arith.constant 0 : index
    %7 = vector.load %arg4[%c0_5, %c0_6] : memref<1x128xf32, #tpu.memory_space<vmem>>, vector<1x128xf32>
    %8 = vector.broadcast %7 : vector<1x128xf32> to vector<432x128xf32>
    %9 = arith.addf %6, %8 : vector<432x128xf32>
    %cst_7 = arith.constant -6.000000e+01 : f32
    %10 = vector.broadcast %cst_7 : f32 to vector<432x128xf32>
    %11 = arith.maximumf %9, %10 : vector<432x128xf32>
    %cst_8 = arith.constant 0.000000e+00 : f32
    %12 = vector.broadcast %cst_8 : f32 to vector<432x128xf32>
    %13 = arith.subf %12, %11 : vector<432x128xf32>
    %14 = math.exp %13 : vector<432x128xf32>
    %cst_9 = arith.constant 1.000000e+00 : f32
    %15 = vector.broadcast %cst_9 : f32 to vector<432x128xf32>
    %16 = arith.addf %15, %14 : vector<432x128xf32>
    %17 = tpu.reciprocal %16 {approx = true} : vector<432x128xf32> -> vector<432x128xf32>
    %18 = arith.mulf %9, %17 : vector<432x128xf32>
    %19 = vector.shape_cast %18 : vector<432x128xf32> to vector<18x24x128xf32>
    %20 = tpu.iota {dimensions = array<i32: 0>} : vector<18x24x1xi32>
    %21 = vector.broadcast %0 : i32 to vector<18x24x1xi32>
    %22 = arith.addi %20, %21 : vector<18x24x1xi32>
    %23 = tpu.iota {dimensions = array<i32: 1>} : vector<18x24x1xi32>
    %c1_i32 = arith.constant 1 : i32
    %24 = vector.broadcast %c1_i32 : i32 to vector<18x24x1xi32>
    %25 = arith.cmpi sge, %22, %24 : vector<18x24x1xi32>
    %c16_i32_10 = arith.constant 16 : i32
    %26 = vector.broadcast %c16_i32_10 : i32 to vector<18x24x1xi32>
    %27 = arith.cmpi sle, %22, %26 : vector<18x24x1xi32>
    %28 = arith.andi %25, %27 : vector<18x24x1xi1>
    %c1_i32_11 = arith.constant 1 : i32
    %29 = vector.broadcast %c1_i32_11 : i32 to vector<18x24x1xi32>
    %30 = arith.cmpi sge, %23, %29 : vector<18x24x1xi32>
    %31 = arith.andi %28, %30 : vector<18x24x1xi1>
    %c16_i32_12 = arith.constant 16 : i32
    %32 = vector.broadcast %c16_i32_12 : i32 to vector<18x24x1xi32>
    %33 = arith.cmpi sle, %23, %32 : vector<18x24x1xi32>
    %34 = arith.andi %31, %33 : vector<18x24x1xi1>
    %cst_13 = arith.constant 0.000000e+00 : f32
    %35 = vector.shape_cast %34 : vector<18x24x1xi1> to vector<18x24x1xi1>
    %36 = vector.broadcast %35 : vector<18x24x1xi1> to vector<18x24x128xi1>
    %37 = vector.broadcast %cst_13 : f32 to vector<18x24x128xf32>
    %38 = arith.select %36, %19, %37 : vector<18x24x128xi1>, vector<18x24x128xf32>
    %39 = arith.truncf %38 : vector<18x24x128xf32> to vector<18x24x128xbf16>
    %40 = vector.extract_strided_slice %39 {offsets = [0, 0, 0], sizes = [18, 16, 128], strides = [1, 1, 1]} : vector<18x24x128xbf16> to vector<18x16x128xbf16>
    %c0_14 = arith.constant 0 : index
    %c0_15 = arith.constant 0 : index
    %c0_16 = arith.constant 0 : index
    %41 = vector.load %arg8[%c0_14, %c0_15, %c0_16] : memref<18x16x384xbf16, #tpu.memory_space<vmem>>, vector<18x16x128xbf16>
    tpu.vector_store %arg8[%c0_14, %c0_15, %c0_16], %40 {strides = array<i32>} : memref<18x16x384xbf16, #tpu.memory_space<vmem>>, vector<18x16x128xbf16>,
    %42 = vector.extract_strided_slice %39 {offsets = [0, 1, 0], sizes = [18, 16, 128], strides = [1, 1, 1]} : vector<18x24x128xbf16> to vector<18x16x128xbf16>
    %c0_17 = arith.constant 0 : index
    %c0_18 = arith.constant 0 : index
    %c128 = arith.constant 128 : index
    %43 = vector.load %arg8[%c0_17, %c0_18, %c128] : memref<18x16x384xbf16, #tpu.memory_space<vmem>>, vector<18x16x128xbf16>
    tpu.vector_store %arg8[%c0_17, %c0_18, %c128], %42 {strides = array<i32>} : memref<18x16x384xbf16, #tpu.memory_space<vmem>>, vector<18x16x128xbf16>,
    %44 = vector.extract_strided_slice %39 {offsets = [0, 2, 0], sizes = [18, 16, 128], strides = [1, 1, 1]} : vector<18x24x128xbf16> to vector<18x16x128xbf16>
    %c0_19 = arith.constant 0 : index
    %c0_20 = arith.constant 0 : index
    %c256 = arith.constant 256 : index
    %45 = vector.load %arg8[%c0_19, %c0_20, %c256] : memref<18x16x384xbf16, #tpu.memory_space<vmem>>, vector<18x16x128xbf16>
    tpu.vector_store %arg8[%c0_19, %c0_20, %c256], %44 {strides = array<i32>} : memref<18x16x384xbf16, #tpu.memory_space<vmem>>, vector<18x16x128xbf16>,
    %c0_21 = arith.constant 0 : index
    %c0_22 = arith.constant 0 : index
    %c0_23 = arith.constant 0 : index
    %46 = vector.load %arg8[%c0_21, %c0_22, %c0_23] : memref<18x16x384xbf16, #tpu.memory_space<vmem>>, vector<16x16x384xbf16>
    %47 = vector.shape_cast %46 : vector<16x16x384xbf16> to vector<256x384xbf16>
    %c0_24 = arith.constant 0 : index
    %c0_25 = arith.constant 0 : index
    %c0_26 = arith.constant 0 : index
    %48 = vector.load %arg5[%c0_24, %c0_25, %c0_26] : memref<3x384x128xbf16, #tpu.memory_space<vmem>>, vector<1x384x128xbf16>
    %49 = vector.shape_cast %48 : vector<1x384x128xbf16> to vector<384x128xbf16>
    %cst_27 = arith.constant dense<0.000000e+00> : vector<256x128xf32>
    %50 = tpu.matmul %47, %49, %cst_27 {dimension_numbers = #tpu.dot_dimension_numbers<[1], [0], [0], [1], [0, 0, 1, 1], [], []>} : vector<256x384xbf16>, vector<384x128xbf16>, vector<256x128xf32> -> vector<256x128xf32>
    %c1 = arith.constant 1 : index
    %c0_28 = arith.constant 0 : index
    %c0_29 = arith.constant 0 : index
    %51 = vector.load %arg8[%c1, %c0_28, %c0_29] : memref<18x16x384xbf16, #tpu.memory_space<vmem>>, vector<16x16x384xbf16>
    %52 = vector.shape_cast %51 : vector<16x16x384xbf16> to vector<256x384xbf16>
    %c1_30 = arith.constant 1 : index
    %c0_31 = arith.constant 0 : index
    %c0_32 = arith.constant 0 : index
    %53 = vector.load %arg5[%c1_30, %c0_31, %c0_32] : memref<3x384x128xbf16, #tpu.memory_space<vmem>>, vector<1x384x128xbf16>
    %54 = vector.shape_cast %53 : vector<1x384x128xbf16> to vector<384x128xbf16>
    %cst_33 = arith.constant dense<0.000000e+00> : vector<256x128xf32>
    %55 = tpu.matmul %52, %54, %cst_33 {dimension_numbers = #tpu.dot_dimension_numbers<[1], [0], [0], [1], [0, 0, 1, 1], [], []>} : vector<256x384xbf16>, vector<384x128xbf16>, vector<256x128xf32> -> vector<256x128xf32>
    %56 = arith.addf %50, %55 : vector<256x128xf32>
    %c2 = arith.constant 2 : index
    %c0_34 = arith.constant 0 : index
    %c0_35 = arith.constant 0 : index
    %57 = vector.load %arg8[%c2, %c0_34, %c0_35] : memref<18x16x384xbf16, #tpu.memory_space<vmem>>, vector<16x16x384xbf16>
    %58 = vector.shape_cast %57 : vector<16x16x384xbf16> to vector<256x384xbf16>
    %c2_36 = arith.constant 2 : index
    %c0_37 = arith.constant 0 : index
    %c0_38 = arith.constant 0 : index
    %59 = vector.load %arg5[%c2_36, %c0_37, %c0_38] : memref<3x384x128xbf16, #tpu.memory_space<vmem>>, vector<1x384x128xbf16>
    %60 = vector.shape_cast %59 : vector<1x384x128xbf16> to vector<384x128xbf16>
    %cst_39 = arith.constant dense<0.000000e+00> : vector<256x128xf32>
    %61 = tpu.matmul %58, %60, %cst_39 {dimension_numbers = #tpu.dot_dimension_numbers<[1], [0], [0], [1], [0, 0, 1, 1], [], []>} : vector<256x384xbf16>, vector<384x128xbf16>, vector<256x128xf32> -> vector<256x128xf32>
    %62 = arith.addf %56, %61 : vector<256x128xf32>
    %63 = vector.extract_strided_slice %5 {offsets = [0, 128], sizes = [432, 128], strides = [1, 1]} : vector<432x256xf32> to vector<432x128xf32>
    %64 = arith.truncf %63 : vector<432x128xf32> to vector<432x128xbf16>
    %65 = vector.shape_cast %64 : vector<432x128xbf16> to vector<18x24x128xbf16>
    %66 = vector.extract_strided_slice %65 {offsets = [1, 1, 0], sizes = [16, 16, 128], strides = [1, 1, 1]} : vector<18x24x128xbf16> to vector<16x16x128xbf16>
    %67 = vector.shape_cast %66 : vector<16x16x128xbf16> to vector<256x128xbf16>
    %c0_40 = arith.constant 0 : index
    %c0_41 = arith.constant 0 : index
    %68 = vector.load %arg6[%c0_40, %c0_41] : memref<1x128xf32, #tpu.memory_space<vmem>>, vector<1x128xf32>
    %69 = vector.broadcast %68 : vector<1x128xf32> to vector<256x128xf32>
    %70 = arith.addf %62, %69 : vector<256x128xf32>
    %71 = arith.extf %67 : vector<256x128xbf16> to vector<256x128xf32>
    %72 = arith.addf %70, %71 : vector<256x128xf32>
    %cst_42 = arith.constant -6.000000e+01 : f32
    %73 = vector.broadcast %cst_42 : f32 to vector<256x128xf32>
    %74 = arith.maximumf %72, %73 : vector<256x128xf32>
    %cst_43 = arith.constant 0.000000e+00 : f32
    %75 = vector.broadcast %cst_43 : f32 to vector<256x128xf32>
    %76 = arith.subf %75, %74 : vector<256x128xf32>
    %77 = math.exp %76 : vector<256x128xf32>
    %cst_44 = arith.constant 1.000000e+00 : f32
    %78 = vector.broadcast %cst_44 : f32 to vector<256x128xf32>
    %79 = arith.addf %78, %77 : vector<256x128xf32>
    %80 = tpu.reciprocal %79 {approx = true} : vector<256x128xf32> -> vector<256x128xf32>
    %81 = arith.mulf %72, %80 : vector<256x128xf32>
    %82 = vector.shape_cast %81 : vector<256x128xf32> to vector<16x16x128xf32>
    %83 = arith.truncf %82 : vector<16x16x128xf32> to vector<16x16x128xbf16>
    %c0_45 = arith.constant 0 : index
    %c0_46 = arith.constant 0 : index
    %c0_47 = arith.constant 0 : index
    %c0_48 = arith.constant 0 : index
    %84 = vector.load %arg7[%c0_45, %c0_46, %c0_47, %c0_48] : memref<1x16x16x128xbf16, #tpu.memory_space<vmem>>, vector<1x16x16x128xbf16>
    %85 = vector.shape_cast %84 : vector<1x16x16x128xbf16> to vector<16x16x128xbf16>
    %86 = vector.shape_cast %83 : vector<16x16x128xbf16> to vector<1x16x16x128xbf16>
    tpu.vector_store %arg7[%c0_45, %c0_46, %c0_47, %c0_48], %86 {strides = array<i32>} : memref<1x16x16x128xbf16, #tpu.memory_space<vmem>>, vector<1x16x16x128xbf16>,
    return
  }
  func.func @transform_0(%arg0: i32, %arg1: i32) -> (i32, i32, i32, i32) {
    %c1_i32 = arith.constant 1 : i32
    %0 = arith.muli %arg0, %c1_i32 : i32
    %1 = arith.addi %0, %arg1 : i32
    %c0_i32 = arith.constant 0 : i32
    %c0_i32_0 = arith.constant 0 : i32
    %c0_i32_1 = arith.constant 0 : i32
    %c0_i32_2 = arith.constant 0 : i32
    return %1, %c0_i32, %c0_i32_0, %c0_i32_1 : i32, i32, i32, i32
  }
  func.func @transform_1(%arg0: i32, %arg1: i32) -> (i32, i32) {
    %c0_i32 = arith.constant 0 : i32
    %c0_i32_0 = arith.constant 0 : i32
    %c0_i32_1 = arith.constant 0 : i32
    return %c0_i32, %c0_i32_0 : i32, i32
  }
  func.func @transform_2(%arg0: i32, %arg1: i32) -> (i32, i32) {
    %c0_i32 = arith.constant 0 : i32
    %c0_i32_0 = arith.constant 0 : i32
    %c0_i32_1 = arith.constant 0 : i32
    return %c0_i32, %c0_i32_0 : i32, i32
  }
  func.func @transform_3(%arg0: i32, %arg1: i32) -> (i32, i32, i32) {
    %c0_i32 = arith.constant 0 : i32
    %c0_i32_0 = arith.constant 0 : i32
    %c0_i32_1 = arith.constant 0 : i32
    %c0_i32_2 = arith.constant 0 : i32
    return %c0_i32, %c0_i32_0, %c0_i32_1 : i32, i32, i32
  }
  func.func @transform_4(%arg0: i32, %arg1: i32) -> (i32, i32) {
    %c0_i32 = arith.constant 0 : i32
    %c0_i32_0 = arith.constant 0 : i32
    %c0_i32_1 = arith.constant 0 : i32
    return %c0_i32, %c0_i32_0 : i32, i32
  }
  func.func @transform_5(%arg0: i32, %arg1: i32) -> (i32, i32, i32, i32) {
    %c0_i32 = arith.constant 0 : i32
    %c0_i32_0 = arith.constant 0 : i32
    %c0_i32_1 = arith.constant 0 : i32
    return %arg0, %arg1, %c0_i32, %c0_i32_0 : i32, i32, i32, i32
  }
}

</mosaic_0001>

<llo_original>
// kernel: res_conv_block.1
$region0: #{res_conv_block.1}
  #allocation0 [shape = 'u32[]', space=smem, size = 0x4, offset = 0x4, fixed_abs, tag = 'smem constant byte address 0x4 - core index']
  #allocation1 [shape = 'u32[144,128]{1,0:T(1,128)}', space=vmem, size = 0x12000, scoped, tag = 'internal scratch']
  #allocation2 [shape = 'bf16[18,16,384]{2,1,0:T(16,128)(2,1)}', space=vmem, size = 0x36000, scoped, tag = 'scratch operand']
  %s0 = inlined_call_operand.vmem [shape: bf16[2,18,24,128], index: 0, kind: input, shape index: {}]
  %s1 = inlined_call_operand.vmem [shape: bf16[128,256], index: 1, kind: input, shape index: {}]
  %s2 = inlined_call_operand.vmem [shape: f32[1,128], index: 2, kind: input, shape index: {}]
  %s3 = inlined_call_operand.vmem [shape: bf16[3,384,128], index: 3, kind: input, shape index: {}]
  %s4 = inlined_call_operand.vmem [shape: f32[1,128], index: 4, kind: input, shape index: {}]
  %s5 = inlined_call_operand.vmem [shape: bf16[2,16,16,128], index: 5, kind: output, shape index: {}]
  %s6 = sld [smem:[#allocation0]]
  $region53: #{res_conv_block.1} parent=0
    _
  %s8 = ssub.s32 1, %s6
  %s9 = scalar_select 0, %s8, %s6
  loop: start=0, step=1, limit=4
  $region2: #{res_conv_block.1} parent=0 // loop_pre_header
    _
  $region3: #{res_conv_block.1} parent=0 // loop_header
    %s11 = sphi 0, %s15
    %p12 = scmp.ge.s32.totalorder %s11, 4
    %s18 = sphi 0, %s30
    %s19 = sphi 0, %s26
    %s20 = sphi 0, %s18
    %s21 = sphi 0, %s19
    %s22 = sphi 0, %s20
    %s23 = sphi 0, %s21
    %s35 = sphi 0, %s37
    %s38 = sphi 0, %s35
    %s39 = sphi 0, %s38
    %s55 = sphi 0, %s39
    %s59 = sphi 0, %s59
    %s61 = sphi 0, %s59
    %s62 = sphi 0, %s61
    %s76 = sphi 0, %s62
    %s80 = sphi 0, %s80
    %s82 = sphi 0, %s80
    %s83 = sphi 0, %s82
    %s97 = sphi 0, %s83
    %s101 = sphi 0, %s101
    %s103 = sphi 0, %s101
    %s104 = sphi 0, %s103
    %s118 = sphi 0, %s104
    %s122 = sphi 0, %s122
    %s124 = sphi 0, %s122
    %s125 = sphi 0, %s124
    %s139 = sphi 0, %s125
    %s147 = sphi 0, %s149
    %s150 = sphi 0, %s147
    %s151 = sphi 0, %s150
    %s167 = sphi 0, %s151
  $region4: #{res_conv_block.1} parent=0 // loop_header_branch
    %14 = sbr.rel (%p12) target = $region8
  $region5: #{res_conv_block.1} parent=0 // loop_body
    %s16 = ssub.s32 %s11, 1
    %s17 = ssub.s32 %s11, 2
    %s24 = sadd.s32 1, %s19
    %p25 = scmp.ge.s32.totalorder %s24, 1
    %s26 = scalar_select %p25, 0, %s24
    %s27 = sadd.s32 1, %s18
    %s28 = scalar_select %p25, %s27, %s18
    %p29 = scmp.ge.s32.totalorder %s28, 2
    %s30 = scalar_select %p29, 0, %s28
    %s31 = sadd.s32 %s18, %s19
    %s32 = sadd.s32 %s30, %s26
    %s33 = ssub.s32 %s31, %s32
    %p34 = scmp.eq.s32.totalorder %s33, 0
    %s36 = sadd.s32 %s35, 1
    %s37 = scalar_select %p34, %s35, %s36
    %p40 = pneg %p34
    %p41 = scmp.eq.s32.totalorder %s11, 1
    %p42 = por %p40, %p41
    %p43 = scmp.ne.s32.totalorder %s35, %s38
    %p44 = scmp.eq.s32.totalorder %s11, 0
    %p45 = por %p43, %p44
    %p46 = scmp.ne.s32.totalorder %s35, %s38
    %p47 = scmp.eq.s32.totalorder %s16, 1
    %p48 = por %p46, %p47
    %p49 = scmp.ne.s32.totalorder %s38, %s39
    %p50 = scmp.eq.s32.totalorder %s16, 0
    %p51 = por %p49, %p50
    %p52 = scmp.ne.s32.totalorder %s38, %s39
    %p53 = scmp.eq.s32.totalorder %s17, 1
    %p54 = por %p52, %p53
    %p56 = scmp.ne.s32.totalorder %s39, %s55
    %p57 = scmp.eq.s32.totalorder %s17, 0
    %p58 = por %p56, %p57
    %s60 = sadd.s32 %s59, 1
    %p63 = scmp.eq.s32.totalorder %s11, 1
    %p64 = scmp.ne.s32.totalorder %s59, %s61
    %p65 = scmp.eq.s32.totalorder %s11, 0
    %p66 = por %p64, %p65
    %p67 = scmp.ne.s32.totalorder %s59, %s61
    %p68 = scmp.eq.s32.totalorder %s16, 1
    %p69 = por %p67, %p68
    %p70 = scmp.ne.s32.totalorder %s61, %s62
    %p71 = scmp.eq.s32.totalorder %s16, 0
    %p72 = por %p70, %p71
    %p73 = scmp.ne.s32.totalorder %s61, %s62
    %p74 = scmp.eq.s32.totalorder %s17, 1
    %p75 = por %p73, %p74
    %p77 = scmp.ne.s32.totalorder %s62, %s76
    %p78 = scmp.eq.s32.totalorder %s17, 0
    %p79 = por %p77, %p78
    %s81 = sadd.s32 %s80, 1
    %p84 = scmp.eq.s32.totalorder %s11, 1
    %p85 = scmp.ne.s32.totalorder %s80, %s82
    %p86 = scmp.eq.s32.totalorder %s11, 0
    %p87 = por %p85, %p86
    %p88 = scmp.ne.s32.totalorder %s80, %s82
    %p89 = scmp.eq.s32.totalorder %s16, 1
    %p90 = por %p88, %p89
    %p91 = scmp.ne.s32.totalorder %s82, %s83
    %p92 = scmp.eq.s32.totalorder %s16, 0
    %p93 = por %p91, %p92
    %p94 = scmp.ne.s32.totalorder %s82, %s83
    %p95 = scmp.eq.s32.totalorder %s17, 1
    %p96 = por %p94, %p95
    %p98 = scmp.ne.s32.totalorder %s83, %s97
    %p99 = scmp.eq.s32.totalorder %s17, 0
    %p100 = por %p98, %p99
    %s102 = sadd.s32 %s101, 1
    %p105 = scmp.eq.s32.totalorder %s11, 1
    %p106 = scmp.ne.s32.totalorder %s101, %s103
    %p107 = scmp.eq.s32.totalorder %s11, 0
    %p108 = por %p106, %p107
    %p109 = scmp.ne.s32.totalorder %s101, %s103
    %p110 = scmp.eq.s32.totalorder %s16, 1
    %p111 = por %p109, %p110
    %p112 = scmp.ne.s32.totalorder %s103, %s104
    %p113 = scmp.eq.s32.totalorder %s16, 0
    %p114 = por %p112, %p113
    %p115 = scmp.ne.s32.totalorder %s103, %s104
    %p116 = scmp.eq.s32.totalorder %s17, 1
    %p117 = por %p115, %p116
    %p119 = scmp.ne.s32.totalorder %s104, %s118
    %p120 = scmp.eq.s32.totalorder %s17, 0
    %p121 = por %p119, %p120
    %s123 = sadd.s32 %s122, 1
    %p126 = scmp.eq.s32.totalorder %s11, 1
    %p127 = scmp.ne.s32.totalorder %s122, %s124
    %p128 = scmp.eq.s32.totalorder %s11, 0
    %p129 = por %p127, %p128
    %p130 = scmp.ne.s32.totalorder %s122, %s124
    %p131 = scmp.eq.s32.totalorder %s16, 1
    %p132 = por %p130, %p131
    %p133 = scmp.ne.s32.totalorder %s124, %s125
    %p134 = scmp.eq.s32.totalorder %s16, 0
    %p135 = por %p133, %p134
    %p136 = scmp.ne.s32.totalorder %s124, %s125
    %p137 = scmp.eq.s32.totalorder %s17, 1
    %p138 = por %p136, %p137
    %p140 = scmp.ne.s32.totalorder %s125, %s139
    %p141 = scmp.eq.s32.totalorder %s17, 0
    %p142 = por %p140, %p141
    %s143 = ssub.s32 %s18, %s30
    %s144 = ssub.s32 %s19, %s26
    %s145 = sor.u32 %s143, %s144
    %p146 = scmp.eq.s32.totalorder %s145, 0
    %s148 = sadd.s32 %s147, 1
    %s149 = scalar_select %p146, %s147, %s148
    %p152 = pneg %p146
    %p153 = scmp.eq.s32.totalorder %s11, 1
    %p154 = por %p152, %p153
    %p155 = scmp.ne.s32.totalorder %s147, %s150
    %p156 = scmp.eq.s32.totalorder %s11, 0
    %p157 = por %p155, %p156
    %p158 = scmp.ne.s32.totalorder %s147, %s150
    %p159 = scmp.eq.s32.totalorder %s16, 1
    %p160 = por %p158, %p159
    %p161 = scmp.ne.s32.totalorder %s150, %s151
    %p162 = scmp.eq.s32.totalorder %s16, 0
    %p163 = por %p161, %p162
    %p164 = scmp.ne.s32.totalorder %s150, %s151
    %p165 = scmp.eq.s32.totalorder %s17, 1
    %p166 = por %p164, %p165
    %p168 = scmp.ne.s32.totalorder %s151, %s167
    %p169 = scmp.eq.s32.totalorder %s17, 0
    %p170 = por %p168, %p169
    %p171 = scmp.le.s32.totalorder 1, %s11
    %p172 = scmp.lt.s32.totalorder %s11, 3
    %p173 = pnand %p171, %p172
    %p174 = pneg %p173
    // Predicated region
    $region9: #{res_conv_block.1} parent=5 // pred_check
      _
    $region10: #{res_conv_block.1} parent=5 // pred_check_branch
      %176 = sbr.rel (%p173) target = $region12
    $region11: #{res_conv_block.1} parent=5 // pred_region
      %s177 = ssub.s32 %s11, 1
      // Predicated region
      $region13: #{res_conv_block.1} parent=11 // pred_check
        %p178 = pneg %p72
      $region14: #{res_conv_block.1} parent=11 // pred_check_branch
        %180 = sbr.rel (%p178) target = $region16
      $region15: #{res_conv_block.1} parent=11 // pred_region
        _
      $region16: #{res_conv_block.1} parent=11 // pred_fallthru
        _
      // Predicated region
      $region17: #{res_conv_block.1} parent=11 // pred_check
        %p181 = pneg %p93
      $region18: #{res_conv_block.1} parent=11 // pred_check_branch
        %183 = sbr.rel (%p181) target = $region20
      $region19: #{res_conv_block.1} parent=11 // pred_region
        _
      $region20: #{res_conv_block.1} parent=11 // pred_fallthru
        _
      // Predicated region
      $region21: #{res_conv_block.1} parent=11 // pred_check
        %p184 = pneg %p114
      $region22: #{res_conv_block.1} parent=11 // pred_check_branch
        %186 = sbr.rel (%p184) target = $region24
      $region23: #{res_conv_block.1} parent=11 // pred_region
        _
      $region24: #{res_conv_block.1} parent=11 // pred_fallthru
        _
      // Predicated region
      $region25: #{res_conv_block.1} parent=11 // pred_check
        %p187 = pneg %p135
      $region26: #{res_conv_block.1} parent=11 // pred_check_branch
        %189 = sbr.rel (%p187) target = $region28
      $region27: #{res_conv_block.1} parent=11 // pred_region
        _
      $region28: #{res_conv_block.1} parent=11 // pred_fallthru
        _
    $region12: #{res_conv_block.1} parent=5 // pred_fallthru
      _
    %p190 = scmp.lt.s32.totalorder %s11, 2
    // Predicated region
    $region29: #{res_conv_block.1} parent=5 // pred_check
      %p191 = pneg %p190
    $region30: #{res_conv_block.1} parent=5 // pred_check_branch
      %193 = sbr.rel (%p191) target = $region32
    $region31: #{res_conv_block.1} parent=5 // pred_region
      // Predicated region
      $region33: #{res_conv_block.1} parent=31 // pred_check
        %p194 = pneg %p45
      $region34: #{res_conv_block.1} parent=31 // pred_check_branch
        %196 = sbr.rel (%p194) target = $region36
      $region35: #{res_conv_block.1} parent=31 // pred_region
        %s197 = sadd.s32 %s18, %s19
        %p198 = scmp.lt.s32.totalorder %s197, 1
        %s199 = scalar_select %p198, %s197, 1
        %s200 = smul.addr %s199, 54
        %s201 = smul.addr %s200, 4
        %s202 = scalar_lea.vmem %s0, %s201
        %s203 = sadd.s32 %s18, %s19
      $region36: #{res_conv_block.1} parent=31 // pred_fallthru
        _
    $region32: #{res_conv_block.1} parent=5 // pred_fallthru
      _
    %p204 = scmp.le.s32.totalorder 1, %s11
    %p205 = scmp.lt.s32.totalorder %s11, 3
    %p206 = pnand %p204, %p205
    %p207 = pneg %p206
    // Predicated region
    $region37: #{res_conv_block.1} parent=5 // pred_check
      _
    $region38: #{res_conv_block.1} parent=5 // pred_check_branch
      %209 = sbr.rel (%p206) target = $region40
    $region39: #{res_conv_block.1} parent=5 // pred_region
      %s210 = ssub.s32 %s11, 1
      %s211 = sadd.s32 %s20, %s21
      %p212 = scmp.lt.s32.totalorder %s211, 1
      %s213 = scalar_select %p212, %s211, 1
      %s214 = smul.addr %s213, 54
      %s215 = smul.addr %s214, 4
      %s216 = scalar_lea.vmem %s0, %s215
      %p217 = pneg %p51
      %p218 = pneg %p48
      %p219 = pneg %p72
      %p220 = pneg %p69
      %p221 = pneg %p93
      %p222 = pneg %p90
      %p223 = pneg %p114
      %p224 = pneg %p111
      %p225 = pneg %p135
      %p226 = pneg %p132
      %p227 = pneg %p163
      %p228 = pneg %p160
      %s229 = smul.u32 16, %s21
      %p230 = scmp.lt.s32.totalorder %s20, 1
      %s231 = scalar_select %p230, %s20, 1
      %p232 = scmp.lt.s32.totalorder %s229, 15
      %s233 = scalar_select %p232, %s229, 15
      %s234 = smul.addr %s233, 2
      %s235 = smul.addr %s231, 32
      %s236 = sadd.s32 %s234, %s235
      %s237 = smul.addr %s236, 4
      %s238 = scalar_lea.vmem %s5, %s237
      %s239 = sadd.s32 %s20, %s21
      %p240 = scmp.lt.s32.totalorder %s239, 1
      %s241 = scalar_select %p240, %s239, 1
      %s242 = smul.addr %s241, 54
      %s243 = smul.addr %s242, 4
      %s244 = scalar_lea.vmem %s0, %s243
      %s245 = sadd.s32 %s20, %s21
      %s246 = smul.u32 16, %s21
      %p247 = scmp.lt.s32.totalorder %s20, 1
      %s248 = scalar_select %p247, %s20, 1
      %p249 = scmp.lt.s32.totalorder %s246, 15
      %s250 = scalar_select %p249, %s246, 15
      %s251 = smul.addr %s250, 2
      %s252 = smul.addr %s248, 32
      %s253 = sadd.s32 %s251, %s252
      %s254 = smul.addr %s253, 4
      %s255 = scalar_lea.vmem %s5, %s254
      %s256 = smul.u32 16, %s21
      %s258 = smul.u32 %s21, 16
      %v259 = vld [vmem:[%s244] sm:$0xf]
      %v260 = vld [vmem:[%s244 + $0x4] sm:$0xf]
      %v261 = vld [vmem:[%s244 + $0x8] sm:$0xf]
      %v262 = vld [vmem:[%s244 + $0xc] sm:$0xf]
      %v263 = vld [vmem:[%s244 + $0x10] sm:$0xf]
      %v264 = vld [vmem:[%s244 + $0x14] sm:$0xf]
      %v265 = vld [vmem:[%s244 + $0x18] sm:$0xf]
      %v266 = vld [vmem:[%s244 + $0x1c] sm:$0xf]
      %v267 = vld [vmem:[%s244 + $0x20] sm:$0xf]
      %v268 = vld [vmem:[%s244 + $0x24] sm:$0xf]
      %v269 = vld [vmem:[%s244 + $0x28] sm:$0xf]
      %v270 = vld [vmem:[%s244 + $0x2c] sm:$0xf]
      %v271 = vld [vmem:[%s244 + $0x30] sm:$0xf]
      %v272 = vld [vmem:[%s244 + $0x34] sm:$0xf]
      %v273 = vld [vmem:[%s244 + $0x38] sm:$0xf]
      %v274 = vld [vmem:[%s244 + $0x3c] sm:$0xf]
      %v275 = vld [vmem:[%s244 + $0x40] sm:$0xf]
      %v276 = vld [vmem:[%s244 + $0x44] sm:$0xf]
      %v277 = vld [vmem:[%s244 + $0x48] sm:$0xf]
      %v278 = vld [vmem:[%s244 + $0x4c] sm:$0xf]
      %v279 = vld [vmem:[%s244 + $0x50] sm:$0xf]
      %v280 = vld [vmem:[%s244 + $0x54] sm:$0xf]
      %v281 = vld [vmem:[%s244 + $0x58] sm:$0xf]
      %v282 = vld [vmem:[%s244 + $0x5c] sm:$0xf]
      %v283 = vld [vmem:[%s244 + $0x60] sm:$0xf]
      %v284 = vld [vmem:[%s244 + $0x64] sm:$0xf]
      %v285 = vld [vmem:[%s244 + $0x68] sm:$0xf]
      %v286 = vld [vmem:[%s244 + $0x6c] sm:$0xf]
      %v287 = vld [vmem:[%s244 + $0x70] sm:$0xf]
      %v288 = vld [vmem:[%s244 + $0x74] sm:$0xf]
      %v289 = vld [vmem:[%s244 + $0x78] sm:$0xf]
      %v290 = vld [vmem:[%s244 + $0x7c] sm:$0xf]
      %v291 = vld [vmem:[%s244 + $0x80] sm:$0xf]
      %v292 = vld [vmem:[%s244 + $0x84] sm:$0xf]
      %v293 = vld [vmem:[%s244 + $0x88] sm:$0xf]
      %v294 = vld [vmem:[%s244 + $0x8c] sm:$0xf]
      %v295 = vld [vmem:[%s244 + $0x90] sm:$0xf]
      %v296 = vld [vmem:[%s244 + $0x94] sm:$0xf]
      %v297 = vld [vmem:[%s244 + $0x98] sm:$0xf]
      %v298 = vld [vmem:[%s244 + $0x9c] sm:$0xf]
      %v299 = vld [vmem:[%s244 + $0xa0] sm:$0xf]
      %v300 = vld [vmem:[%s244 + $0xa4] sm:$0xf]
      %v301 = vld [vmem:[%s244 + $0xa8] sm:$0xf]
      %v302 = vld [vmem:[%s244 + $0xac] sm:$0xf]
      %v303 = vld [vmem:[%s244 + $0xb0] sm:$0xf]
      %v304 = vld [vmem:[%s244 + $0xb4] sm:$0xf]
      %v305 = vld [vmem:[%s244 + $0xb8] sm:$0xf]
      %v306 = vld [vmem:[%s244 + $0xbc] sm:$0xf]
      %v307 = vld [vmem:[%s244 + $0xc0] sm:$0xf]
      %v308 = vld [vmem:[%s244 + $0xc4] sm:$0xf]
      %v309 = vld [vmem:[%s244 + $0xc8] sm:$0xf]
      %v310 = vld [vmem:[%s244 + $0xcc] sm:$0xf]
      %v311 = vld [vmem:[%s244 + $0xd0] sm:$0xf]
      %v312 = vld [vmem:[%s244 + $0xd4] sm:$0xf]
      %v313 = vld [vmem:[%s1] sm:$0xff]
      %v314 = vld [vmem:[%s1 + $0x8] sm:$0xff]
      %v315 = vld [vmem:[%s1 + $0x10] sm:$0xff]
      %v316 = vld [vmem:[%s1 + $0x18] sm:$0xff]
      %v317 = vld [vmem:[%s1 + $0x20] sm:$0xff]
      %v318 = vld [vmem:[%s1 + $0x28] sm:$0xff]
      %v319 = vld [vmem:[%s1 + $0x30] sm:$0xff]
      %v320 = vld [vmem:[%s1 + $0x38] sm:$0xff]
      %v321 = vld [vmem:[%s1 + $0x40] sm:$0xff]
      %v322 = vld [vmem:[%s1 + $0x48] sm:$0xff]
      %v323 = vld [vmem:[%s1 + $0x50] sm:$0xff]
      %v324 = vld [vmem:[%s1 + $0x58] sm:$0xff]
      %v325 = vld [vmem:[%s1 + $0x60] sm:$0xff]
      %v326 = vld [vmem:[%s1 + $0x68] sm:$0xff]
      %v327 = vld [vmem:[%s1 + $0x70] sm:$0xff]
      %v328 = vld [vmem:[%s1 + $0x78] sm:$0xff]
      %v383 = vunpack.c.l.b16 %v259
      %v384 = vunpack.c.l.b16 %v260
      %v385 = vunpack.c.l.b16 %v261
      %v386 = vunpack.c.l.b16 %v262
      %v387 = vunpack.c.l.b16 %v263
      %v388 = vunpack.c.l.b16 %v264
      %v389 = vunpack.c.l.b16 %v265
      %v390 = vunpack.c.l.b16 %v266
      %v391 = vunpack.c.l.b16 %v267
      %v392 = vunpack.c.l.b16 %v268
      %v393 = vunpack.c.l.b16 %v269
      %v394 = vunpack.c.l.b16 %v270
      %v395 = vunpack.c.l.b16 %v271
      %v396 = vunpack.c.l.b16 %v272
      %v397 = vunpack.c.l.b16 %v273
      %v398 = vunpack.c.l.b16 %v274
      %v399 = vunpack.c.l.b16 %v275
      %v400 = vunpack.c.l.b16 %v276
      %v401 = vunpack.c.l.b16 %v277
      %v402 = vunpack.c.l.b16 %v278
      %v403 = vunpack.c.l.b16 %v279
      %v404 = vunpack.c.l.b16 %v280
      %v405 = vunpack.c.l.b16 %v281
      %v406 = vunpack.c.l.b16 %v282
      %v407 = vunpack.c.l.b16 %v283
      %v408 = vunpack.c.l.b16 %v284
      %v409 = vunpack.c.l.b16 %v285
      %v410 = vunpack.c.l.b16 %v286
      %v411 = vunpack.c.l.b16 %v287
      %v412 = vunpack.c.l.b16 %v288
      %v413 = vunpack.c.l.b16 %v289
      %v414 = vunpack.c.l.b16 %v290
      %v415 = vunpack.c.l.b16 %v291
      %v416 = vunpack.c.l.b16 %v292
      %v417 = vunpack.c.l.b16 %v293
      %v418 = vunpack.c.l.b16 %v294
      %v419 = vunpack.c.l.b16 %v295
      %v420 = vunpack.c.l.b16 %v296
      %v421 = vunpack.c.l.b16 %v297
      %v422 = vunpack.c.l.b16 %v298
      %v423 = vunpack.c.l.b16 %v299
      %v424 = vunpack.c.l.b16 %v300
      %v425 = vunpack.c.l.b16 %v301
      %v426 = vunpack.c.l.b16 %v302
      %v427 = vunpack.c.l.b16 %v303
      %v428 = vunpack.c.l.b16 %v304
      %v429 = vunpack.c.l.b16 %v305
      %v430 = vunpack.c.l.b16 %v306
      %v431 = vunpack.c.l.b16 %v307
      %v432 = vunpack.c.l.b16 %v308
      %v433 = vunpack.c.l.b16 %v309
      %v434 = vunpack.c.l.b16 %v310
      %v435 = vunpack.c.l.b16 %v311
      %v436 = vunpack.c.l.b16 %v312
      %v437 = vpack.c.b16 %v384, %v383
      %v438 = vpack.c.b16 %v386, %v385
      %v439 = vpack.c.b16 %v388, %v387
      %v440 = vpack.c.b16 %v390, %v389
      %v441 = vpack.c.b16 %v392, %v391
      %v442 = vpack.c.b16 %v394, %v393
      %v443 = vpack.c.b16 %v396, %v395
      %v444 = vpack.c.b16 %v398, %v397
      %v445 = vpack.c.b16 %v400, %v399
      %v446 = vpack.c.b16 %v402, %v401
      %v447 = vpack.c.b16 %v404, %v403
      %v448 = vpack.c.b16 %v406, %v405
      %v449 = vpack.c.b16 %v408, %v407
      %v450 = vpack.c.b16 %v410, %v409
      %v451 = vpack.c.b16 %v412, %v411
      %v452 = vpack.c.b16 %v414, %v413
      %v453 = vpack.c.b16 %v416, %v415
      %v454 = vpack.c.b16 %v418, %v417
      %v455 = vpack.c.b16 %v420, %v419
      %v456 = vpack.c.b16 %v422, %v421
      %v457 = vpack.c.b16 %v424, %v423
      %v458 = vpack.c.b16 %v426, %v425
      %v459 = vpack.c.b16 %v428, %v427
      %v460 = vpack.c.b16 %v430, %v429
      %v461 = vpack.c.b16 %v432, %v431
      %v462 = vpack.c.b16 %v434, %v433
      %v463 = vpack.c.b16 %v436, %v435
      %v507 = vunpack.c.l.b16 %v313
      %v508 = vunpack.c.h.b16 %v313
      %v509 = vunpack.c.l.b16 %v314
      %v510 = vunpack.c.h.b16 %v314
      %v511 = vunpack.c.l.b16 %v315
      %v512 = vunpack.c.h.b16 %v315
      %v513 = vunpack.c.l.b16 %v316
      %v514 = vunpack.c.h.b16 %v316
      %v515 = vunpack.c.l.b16 %v317
      %v516 = vunpack.c.h.b16 %v317
      %v517 = vunpack.c.l.b16 %v318
      %v518 = vunpack.c.h.b16 %v318
      %v519 = vunpack.c.l.b16 %v319
      %v520 = vunpack.c.h.b16 %v319
      %v521 = vunpack.c.l.b16 %v320
      %v522 = vunpack.c.h.b16 %v320
      %v523 = vunpack.c.l.b16 %v321
      %v524 = vunpack.c.h.b16 %v321
      %v525 = vunpack.c.l.b16 %v322
      %v526 = vunpack.c.h.b16 %v322
      %v527 = vunpack.c.l.b16 %v323
      %v528 = vunpack.c.h.b16 %v323
      %v529 = vunpack.c.l.b16 %v324
      %v530 = vunpack.c.h.b16 %v324
      %v531 = vunpack.c.l.b16 %v325
      %v532 = vunpack.c.h.b16 %v325
      %v533 = vunpack.c.l.b16 %v326
      %v534 = vunpack.c.h.b16 %v326
      %v535 = vunpack.c.l.b16 %v327
      %v536 = vunpack.c.h.b16 %v327
      %v537 = vunpack.c.l.b16 %v328
      %v538 = vunpack.c.h.b16 %v328
      %v539 = vpack.c.b16 %v509, %v507
      %v540 = vpack.c.b16 %v510, %v508
      %v541 = vpack.c.b16 %v513, %v511
      %v542 = vpack.c.b16 %v514, %v512
      %v543 = vpack.c.b16 %v517, %v515
      %v544 = vpack.c.b16 %v518, %v516
      %v545 = vpack.c.b16 %v521, %v519
      %v546 = vpack.c.b16 %v522, %v520
      %v547 = vpack.c.b16 %v525, %v523
      %v548 = vpack.c.b16 %v526, %v524
      %v549 = vpack.c.b16 %v529, %v527
      %v550 = vpack.c.b16 %v530, %v528
      %v551 = vpack.c.b16 %v533, %v531
      %v552 = vpack.c.b16 %v534, %v532
      %v553 = vpack.c.b16 %v537, %v535
      %v554 = vpack.c.b16 %v538, %v536
      %571 = vmatprep.subr.bf16.mxu0 %v540
      %572 = vmatpush1.bf16.msra.mxu0 %v539
      %573 = vmatprep.subr.bf16.mxu0 %v542
      %574 = vmatpush1.bf16.msra.mxu0 %v541
      %575 = vmatprep.subr.bf16.mxu0 %v544
      %576 = vmatpush1.bf16.msra.mxu0 %v543
      %577 = vmatprep.subr.bf16.mxu0 %v546
      %578 = vmatpush1.bf16.msra.mxu0 %v545
      %579 = vmatprep.subr.bf16.mxu0 %v548
      %580 = vmatpush1.bf16.msra.mxu0 %v547
      %581 = vmatprep.subr.bf16.mxu0 %v550
      %582 = vmatpush1.bf16.msra.mxu0 %v549
      %583 = vmatprep.subr.bf16.mxu0 %v552
      %584 = vmatpush1.bf16.msra.mxu0 %v551
      %585 = vmatprep.subr.bf16.mxu0 %v554
      %586 = vmatpush1.bf16.msra.mxu0 %v553
      %587 = vmatprep.subr.bf16.mxu0 0
      %588 = vmatpush1.bf16.msra.mxu0 0
      %589 = vmatprep.subr.bf16.mxu0 0
      %590 = vmatpush1.bf16.msra.mxu0 0
      %591 = vmatprep.subr.bf16.mxu0 0
      %592 = vmatpush1.bf16.msra.mxu0 0
      %593 = vmatprep.subr.bf16.mxu0 0
      %594 = vmatpush1.bf16.msra.mxu0 0
      %595 = vmatprep.subr.bf16.mxu0 0
      %596 = vmatpush1.bf16.msra.mxu0 0
      %597 = vmatprep.subr.bf16.mxu0 0
      %598 = vmatpush1.bf16.msra.mxu0 0
      %599 = vmatprep.subr.bf16.mxu0 0
      %600 = vmatpush1.bf16.msra.mxu0 0
      %601 = vmatprep.subr.bf16.mxu0 0
      %602 = vmatpush1.bf16.msra.mxu0 0
      %603 = vmatprep.mubr.bf16.mxu0 0
      %604 = vmatmul.mubr.bf16.gmra.mrb[0].mxu0 %v437
      %v605 = vpop.f32.mrb[0].mxu0
      %v606 = vadd.f32 0.0, %v605
      %v607 = vpop.f32.mrb[0].mxu0
      %v608 = vpop.f32.mrb[0].mxu0
      %v609 = vadd.f32 0.0, %v608
      %v610 = vpop.f32.mrb[0].mxu0
      %611 = vmatprep.mubr.bf16.mxu0 0
      %612 = vmatmul.mubr.bf16.gmra.mrb[0].mxu0 %v438
      %v613 = vpop.f32.mrb[0].mxu0
      %v614 = vadd.f32 0.0, %v613
      %v615 = vpop.f32.mrb[0].mxu0
      %v616 = vadd.f32 0.0, %v615
      %v617 = vpop.f32.mrb[0].mxu0
      %v618 = vadd.f32 0.0, %v617
      %v619 = vpop.f32.mrb[0].mxu0
      %v620 = vadd.f32 0.0, %v619
      %621 = vmatprep.mubr.bf16.mxu0 0
      %622 = vmatmul.mubr.bf16.gmra.mrb[0].mxu0 %v439
      %v623 = vpop.f32.mrb[0].mxu0
      %v624 = vadd.f32 0.0, %v623
      %v625 = vpop.f32.mrb[0].mxu0
      %v626 = vadd.f32 0.0, %v625
      %v627 = vpop.f32.mrb[0].mxu0
      %v628 = vadd.f32 0.0, %v627
      %v629 = vpop.f32.mrb[0].mxu0
      %v630 = vadd.f32 0.0, %v629
      %631 = vmatprep.mubr.bf16.mxu0 0
      %632 = vmatmul.mubr.bf16.gmra.mrb[0].mxu0 %v440
      %v633 = vpop.f32.mrb[0].mxu0
      %v634 = vadd.f32 0.0, %v633
      %v635 = vpop.f32.mrb[0].mxu0
      %v636 = vadd.f32 0.0, %v635
      %v637 = vpop.f32.mrb[0].mxu0
      %v638 = vadd.f32 0.0, %v637
      %v639 = vpop.f32.mrb[0].mxu0
      %v640 = vadd.f32 0.0, %v639
      %641 = vmatprep.mubr.bf16.mxu0 0
      %642 = vmatmul.mubr.bf16.gmra.mrb[0].mxu0 %v441
      %v643 = vpop.f32.mrb[0].mxu0
      %v644 = vadd.f32 0.0, %v643
      %v645 = vpop.f32.mrb[0].mxu0
      %v646 = vadd.f32 0.0, %v645
      %v647 = vpop.f32.mrb[0].mxu0
      %v648 = vadd.f32 0.0, %v647
      %v649 = vpop.f32.mrb[0].mxu0
      %v650 = vadd.f32 0.0, %v649
      %651 = vmatprep.mubr.bf16.mxu0 0
      %652 = vmatmul.mubr.bf16.gmra.mrb[0].mxu0 %v442
      %v653 = vpop.f32.mrb[0].mxu0
      %v654 = vadd.f32 0.0, %v653
      %v655 = vpop.f32.mrb[0].mxu0
      %v656 = vadd.f32 0.0, %v655
      %v657 = vpop.f32.mrb[0].mxu0
      %v658 = vadd.f32 0.0, %v657
      %v659 = vpop.f32.mrb[0].mxu0
      %v660 = vadd.f32 0.0, %v659
      %661 = vmatprep.mubr.bf16.mxu0 0
      %662 = vmatmul.mubr.bf16.gmra.mrb[0].mxu0 %v443
      %v663 = vpop.f32.mrb[0].mxu0
      %v664 = vadd.f32 0.0, %v663
      %v665 = vpop.f32.mrb[0].mxu0
      %v666 = vadd.f32 0.0, %v665
      %v667 = vpop.f32.mrb[0].mxu0
      %v668 = vadd.f32 0.0, %v667
      %v669 = vpop.f32.mrb[0].mxu0
      %v670 = vadd.f32 0.0, %v669
      %671 = vmatprep.mubr.bf16.mxu0 0
      %672 = vmatmul.mubr.bf16.gmra.mrb[0].mxu0 %v444
      %v673 = vpop.f32.mrb[0].mxu0
      %v674 = vadd.f32 0.0, %v673
      %v675 = vpop.f32.mrb[0].mxu0
      %v676 = vadd.f32 0.0, %v675
      %v677 = vpop.f32.mrb[0].mxu0
      %v678 = vadd.f32 0.0, %v677
      %v679 = vpop.f32.mrb[0].mxu0
      %v680 = vadd.f32 0.0, %v679
      %681 = vmatprep.mubr.bf16.mxu0 0
      %682 = vmatmul.mubr.bf16.gmra.mrb[0].mxu0 %v445
      %v683 = vpop.f32.mrb[0].mxu0
      %v684 = vadd.f32 0.0, %v683
      %v685 = vpop.f32.mrb[0].mxu0
      %v686 = vadd.f32 0.0, %v685
      %v687 = vpop.f32.mrb[0].mxu0
      %v688 = vadd.f32 0.0, %v687
      %v689 = vpop.f32.mrb[0].mxu0
      %v690 = vadd.f32 0.0, %v689
      %691 = vmatprep.mubr.bf16.mxu0 0
      %692 = vmatmul.mubr.bf16.gmra.mrb[0].mxu0 %v446
      %v693 = vpop.f32.mrb[0].mxu0
      %v694 = vadd.f32 0.0, %v693
      %v695 = vpop.f32.mrb[0].mxu0
      %v696 = vadd.f32 0.0, %v695
      %v697 = vpop.f32.mrb[0].mxu0
      %v698 = vadd.f32 0.0, %v697
      %v699 = vpop.f32.mrb[0].mxu0
      %v700 = vadd.f32 0.0, %v699
      %701 = vmatprep.mubr.bf16.mxu0 0
      %702 = vmatmul.mubr.bf16.gmra.mrb[0].mxu0 %v447
      %v703 = vpop.f32.mrb[0].mxu0
      %v704 = vadd.f32 0.0, %v703
      %v705 = vpop.f32.mrb[0].mxu0
      %v706 = vadd.f32 0.0, %v705
      %v707 = vpop.f32.mrb[0].mxu0
      %v708 = vadd.f32 0.0, %v707
      %v709 = vpop.f32.mrb[0].mxu0
      %v710 = vadd.f32 0.0, %v709
      %711 = vmatprep.mubr.bf16.mxu0 0
      %712 = vmatmul.mubr.bf16.gmra.mrb[0].mxu0 %v448
      %v713 = vpop.f32.mrb[0].mxu0
      %v714 = vadd.f32 0.0, %v713
      %v715 = vpop.f32.mrb[0].mxu0
      %v716 = vadd.f32 0.0, %v715
      %v717 = vpop.f32.mrb[0].mxu0
      %v718 = vadd.f32 0.0, %v717
      %v719 = vpop.f32.mrb[0].mxu0
      %v720 = vadd.f32 0.0, %v719
      %721 = vmatprep.mubr.bf16.mxu0 0
      %722 = vmatmul.mubr.bf16.gmra.mrb[0].mxu0 %v449
      %v723 = vpop.f32.mrb[0].mxu0
      %v724 = vadd.f32 0.0, %v723
      %v725 = vpop.f32.mrb[0].mxu0
      %v726 = vadd.f32 0.0, %v725
      %v727 = vpop.f32.mrb[0].mxu0
      %v728 = vadd.f32 0.0, %v727
      %v729 = vpop.f32.mrb[0].mxu0
      %v730 = vadd.f32 0.0, %v729
      %731 = vmatprep.mubr.bf16.mxu0 0
      %732 = vmatmul.mubr.bf16.gmra.mrb[0].mxu0 %v450
      %v733 = vpop.f32.mrb[0].mxu0
      %v734 = vadd.f32 0.0, %v733
      %v735 = vpop.f32.mrb[0].mxu0
      %v736 = vadd.f32 0.0, %v735
      %v737 = vpop.f32.mrb[0].mxu0
      %v738 = vadd.f32 0.0, %v737
      %v739 = vpop.f32.mrb[0].mxu0
      %v740 = vadd.f32 0.0, %v739
      %741 = vmatprep.mubr.bf16.mxu0 0
      %742 = vmatmul.mubr.bf16.gmra.mrb[0].mxu0 %v451
      %v743 = vpop.f32.mrb[0].mxu0
      %v744 = vadd.f32 0.0, %v743
      %v745 = vpop.f32.mrb[0].mxu0
      %v746 = vadd.f32 0.0, %v745
      %v747 = vpop.f32.mrb[0].mxu0
      %v748 = vadd.f32 0.0, %v747
      %v749 = vpop.f32.mrb[0].mxu0
      %v750 = vadd.f32 0.0, %v749
      %751 = vmatprep.mubr.bf16.mxu0 0
      %752 = vmatmul.mubr.bf16.gmra.mrb[0].mxu0 %v452
      %v753 = vpop.f32.mrb[0].mxu0
      %v754 = vadd.f32 0.0, %v753
      %v755 = vpop.f32.mrb[0].mxu0
      %v756 = vadd.f32 0.0, %v755
      %v757 = vpop.f32.mrb[0].mxu0
      %v758 = vadd.f32 0.0, %v757
      %v759 = vpop.f32.mrb[0].mxu0
      %v760 = vadd.f32 0.0, %v759
      %761 = vmatprep.mubr.bf16.mxu0 0
      %762 = vmatmul.mubr.bf16.gmra.mrb[0].mxu0 %v453
      %v763 = vpop.f32.mrb[0].mxu0
      %v764 = vadd.f32 0.0, %v763
      %v765 = vpop.f32.mrb[0].mxu0
      %v766 = vadd.f32 0.0, %v765
      %v767 = vpop.f32.mrb[0].mxu0
      %v768 = vadd.f32 0.0, %v767
      %v769 = vpop.f32.mrb[0].mxu0
      %v770 = vadd.f32 0.0, %v769
      %771 = vmatprep.mubr.bf16.mxu0 0
      %772 = vmatmul.mubr.bf16.gmra.mrb[0].mxu0 %v454
      %v773 = vpop.f32.mrb[0].mxu0
      %v774 = vadd.f32 0.0, %v773
      %v775 = vpop.f32.mrb[0].mxu0
      %v776 = vadd.f32 0.0, %v775
      %v777 = vpop.f32.mrb[0].mxu0
      %v778 = vadd.f32 0.0, %v777
      %v779 = vpop.f32.mrb[0].mxu0
      %v780 = vadd.f32 0.0, %v779
      %781 = vmatprep.mubr.bf16.mxu0 0
      %782 = vmatmul.mubr.bf16.gmra.mrb[0].mxu0 %v455
      %v783 = vpop.f32.mrb[0].mxu0
      %v784 = vadd.f32 0.0, %v783
      %v785 = vpop.f32.mrb[0].mxu0
      %v786 = vadd.f32 0.0, %v785
      %v787 = vpop.f32.mrb[0].mxu0
      %v788 = vadd.f32 0.0, %v787
      %v789 = vpop.f32.mrb[0].mxu0
      %v790 = vadd.f32 0.0, %v789
      %791 = vmatprep.mubr.bf16.mxu0 0
      %792 = vmatmul.mubr.bf16.gmra.mrb[0].mxu0 %v456
      %v793 = vpop.f32.mrb[0].mxu0
      %v794 = vadd.f32 0.0, %v793
      %v795 = vpop.f32.mrb[0].mxu0
      %v796 = vadd.f32 0.0, %v795
      %v797 = vpop.f32.mrb[0].mxu0
      %v798 = vadd.f32 0.0, %v797
      %v799 = vpop.f32.mrb[0].mxu0
      %v800 = vadd.f32 0.0, %v799
      %801 = vmatprep.mubr.bf16.mxu0 0
      %802 = vmatmul.mubr.bf16.gmra.mrb[0].mxu0 %v457
      %v803 = vpop.f32.mrb[0].mxu0
      %v804 = vadd.f32 0.0, %v803
      %v805 = vpop.f32.mrb[0].mxu0
      %v806 = vadd.f32 0.0, %v805
      %v807 = vpop.f32.mrb[0].mxu0
      %v808 = vadd.f32 0.0, %v807
      %v809 = vpop.f32.mrb[0].mxu0
      %v810 = vadd.f32 0.0, %v809
      %811 = vmatprep.mubr.bf16.mxu0 0
      %812 = vmatmul.mubr.bf16.gmra.mrb[0].mxu0 %v458
      %v813 = vpop.f32.mrb[0].mxu0
      %v814 = vadd.f32 0.0, %v813
      %v815 = vpop.f32.mrb[0].mxu0
      %v816 = vadd.f32 0.0, %v815
      %v817 = vpop.f32.mrb[0].mxu0
      %v818 = vadd.f32 0.0, %v817
      %v819 = vpop.f32.mrb[0].mxu0
      %v820 = vadd.f32 0.0, %v819
      %821 = vmatprep.mubr.bf16.mxu0 0
      %822 = vmatmul.mubr.bf16.gmra.mrb[0].mxu0 %v459
      %v823 = vpop.f32.mrb[0].mxu0
      %v824 = vadd.f32 0.0, %v823
      %v825 = vpop.f32.mrb[0].mxu0
      %v826 = vadd.f32 0.0, %v825
      %v827 = vpop.f32.mrb[0].mxu0
      %v828 = vadd.f32 0.0, %v827
      %v829 = vpop.f32.mrb[0].mxu0
      %v830 = vadd.f32 0.0, %v829
      %831 = vmatprep.mubr.bf16.mxu0 0
      %832 = vmatmul.mubr.bf16.gmra.mrb[0].mxu0 %v460
      %v833 = vpop.f32.mrb[0].mxu0
      %v834 = vadd.f32 0.0, %v833
      %v835 = vpop.f32.mrb[0].mxu0
      %v836 = vadd.f32 0.0, %v835
      %v837 = vpop.f32.mrb[0].mxu0
      %v838 = vadd.f32 0.0, %v837
      %v839 = vpop.f32.mrb[0].mxu0
      %v840 = vadd.f32 0.0, %v839
      %841 = vmatprep.mubr.bf16.mxu0 0
      %842 = vmatmul.mubr.bf16.gmra.mrb[0].mxu0 %v461
      %v843 = vpop.f32.mrb[0].mxu0
      %v844 = vadd.f32 0.0, %v843
      %v845 = vpop.f32.mrb[0].mxu0
      %v846 = vadd.f32 0.0, %v845
      %v847 = vpop.f32.mrb[0].mxu0
      %v848 = vadd.f32 0.0, %v847
      %v849 = vpop.f32.mrb[0].mxu0
      %v850 = vadd.f32 0.0, %v849
      %851 = vmatprep.mubr.bf16.mxu0 0
      %852 = vmatmul.mubr.bf16.gmra.mrb[0].mxu0 %v462
      %v853 = vpop.f32.mrb[0].mxu0
      %v854 = vadd.f32 0.0, %v853
      %v855 = vpop.f32.mrb[0].mxu0
      %v856 = vadd.f32 0.0, %v855
      %v857 = vpop.f32.mrb[0].mxu0
      %v858 = vadd.f32 0.0, %v857
      %v859 = vpop.f32.mrb[0].mxu0
      %v860 = vadd.f32 0.0, %v859
      %861 = vmatprep.mubr.bf16.mxu0 0
      %862 = vmatmul.mubr.bf16.gmra.mrb[0].mxu0 %v463
      %v863 = vpop.f32.mrb[0].mxu0
      %v864 = vadd.f32 0.0, %v863
      %v865 = vpop.f32.mrb[0].mxu0
      %v866 = vpop.f32.mrb[0].mxu0
      %v867 = vadd.f32 0.0, %v866
      %v868 = vpop.f32.mrb[0].mxu0
      %869 = vdwg.mxu0
      %v870 = vld [vmem:[%s2] sm:$0x1]
      %v872 = vlaneseq
      %v873 = vshrl.u32 %v872, 7
      %v874 = vsub.s32 0, %v873
      %v875 = vrot.slane %v870, %v874
      %v877 = vadd.f32 %v606, %v875
      %v878 = vadd.f32 %v609, %v875
      %v879 = vadd.f32 %v614, %v875
      %v880 = vadd.f32 %v618, %v875
      %v881 = vadd.f32 %v624, %v875
      %v882 = vadd.f32 %v628, %v875
      %v883 = vadd.f32 %v634, %v875
      %v884 = vadd.f32 %v638, %v875
      %v885 = vadd.f32 %v644, %v875
      %v886 = vadd.f32 %v648, %v875
      %v887 = vadd.f32 %v654, %v875
      %v888 = vadd.f32 %v658, %v875
      %v889 = vadd.f32 %v664, %v875
      %v890 = vadd.f32 %v668, %v875
      %v891 = vadd.f32 %v674, %v875
      %v892 = vadd.f32 %v678, %v875
      %v893 = vadd.f32 %v684, %v875
      %v894 = vadd.f32 %v688, %v875
      %v895 = vadd.f32 %v694, %v875
      %v896 = vadd.f32 %v698, %v875
      %v897 = vadd.f32 %v704, %v875
      %v898 = vadd.f32 %v708, %v875
      %v899 = vadd.f32 %v714, %v875
      %v900 = vadd.f32 %v718, %v875
      %v901 = vadd.f32 %v724, %v875
      %v902 = vadd.f32 %v728, %v875
      %v903 = vadd.f32 %v734, %v875
      %v904 = vadd.f32 %v738, %v875
      %v905 = vadd.f32 %v744, %v875
      %v906 = vadd.f32 %v748, %v875
      %v907 = vadd.f32 %v754, %v875
      %v908 = vadd.f32 %v758, %v875
      %v909 = vadd.f32 %v764, %v875
      %v910 = vadd.f32 %v768, %v875
      %v911 = vadd.f32 %v774, %v875
      %v912 = vadd.f32 %v778, %v875
      %v913 = vadd.f32 %v784, %v875
      %v914 = vadd.f32 %v788, %v875
      %v915 = vadd.f32 %v794, %v875
      %v916 = vadd.f32 %v798, %v875
      %v917 = vadd.f32 %v804, %v875
      %v918 = vadd.f32 %v808, %v875
      %v919 = vadd.f32 %v814, %v875
      %v920 = vadd.f32 %v818, %v875
      %v921 = vadd.f32 %v824, %v875
      %v922 = vadd.f32 %v828, %v875
      %v923 = vadd.f32 %v834, %v875
      %v924 = vadd.f32 %v838, %v875
      %v925 = vadd.f32 %v844, %v875
      %v926 = vadd.f32 %v848, %v875
      %v927 = vadd.f32 %v854, %v875
      %v928 = vadd.f32 %v858, %v875
      %v929 = vadd.f32 %v864, %v875
      %v930 = vadd.f32 %v867, %v875
      %v931 = vmax.f32 %v877, -60.0
      %v932 = vmax.f32 %v878, -60.0
      %v933 = vmax.f32 %v879, -60.0
      %v934 = vmax.f32 %v880, -60.0
      %v935 = vmax.f32 %v881, -60.0
      %v936 = vmax.f32 %v882, -60.0
      %v937 = vmax.f32 %v883, -60.0
      %v938 = vmax.f32 %v884, -60.0
      %v939 = vmax.f32 %v885, -60.0
      %v940 = vmax.f32 %v886, -60.0
      %v941 = vmax.f32 %v887, -60.0
      %v942 = vmax.f32 %v888, -60.0
      %v943 = vmax.f32 %v889, -60.0
      %v944 = vmax.f32 %v890, -60.0
      %v945 = vmax.f32 %v891, -60.0
      %v946 = vmax.f32 %v892, -60.0
      %v947 = vmax.f32 %v893, -60.0
      %v948 = vmax.f32 %v894, -60.0
      %v949 = vmax.f32 %v895, -60.0
      %v950 = vmax.f32 %v896, -60.0
      %v951 = vmax.f32 %v897, -60.0
      %v952 = vmax.f32 %v898, -60.0
      %v953 = vmax.f32 %v899, -60.0
      %v954 = vmax.f32 %v900, -60.0
      %v955 = vmax.f32 %v901, -60.0
      %v956 = vmax.f32 %v902, -60.0
      %v957 = vmax.f32 %v903, -60.0
      %v958 = vmax.f32 %v904, -60.0
      %v959 = vmax.f32 %v905, -60.0
      %v960 = vmax.f32 %v906, -60.0
      %v961 = vmax.f32 %v907, -60.0
      %v962 = vmax.f32 %v908, -60.0
      %v963 = vmax.f32 %v909, -60.0
      %v964 = vmax.f32 %v910, -60.0
      %v965 = vmax.f32 %v911, -60.0
      %v966 = vmax.f32 %v912, -60.0
      %v967 = vmax.f32 %v913, -60.0
      %v968 = vmax.f32 %v914, -60.0
      %v969 = vmax.f32 %v915, -60.0
      %v970 = vmax.f32 %v916, -60.0
      %v971 = vmax.f32 %v917, -60.0
      %v972 = vmax.f32 %v918, -60.0
      %v973 = vmax.f32 %v919, -60.0
      %v974 = vmax.f32 %v920, -60.0
      %v975 = vmax.f32 %v921, -60.0
      %v976 = vmax.f32 %v922, -60.0
      %v977 = vmax.f32 %v923, -60.0
      %v978 = vmax.f32 %v924, -60.0
      %v979 = vmax.f32 %v925, -60.0
      %v980 = vmax.f32 %v926, -60.0
      %v981 = vmax.f32 %v927, -60.0
      %v982 = vmax.f32 %v928, -60.0
      %v983 = vmax.f32 %v929, -60.0
      %v984 = vmax.f32 %v930, -60.0
      %v985 = vsub.f32 0.0, %v931
      %v986 = vsub.f32 0.0, %v932
      %v987 = vsub.f32 0.0, %v933
      %v988 = vsub.f32 0.0, %v934
      %v989 = vsub.f32 0.0, %v935
      %v990 = vsub.f32 0.0, %v936
      %v991 = vsub.f32 0.0, %v937
      %v992 = vsub.f32 0.0, %v938
      %v993 = vsub.f32 0.0, %v939
      %v994 = vsub.f32 0.0, %v940
      %v995 = vsub.f32 0.0, %v941
      %v996 = vsub.f32 0.0, %v942
      %v997 = vsub.f32 0.0, %v943
      %v998 = vsub.f32 0.0, %v944
      %v999 = vsub.f32 0.0, %v945
      %v1000 = vsub.f32 0.0, %v946
      %v1001 = vsub.f32 0.0, %v947
      %v1002 = vsub.f32 0.0, %v948
      %v1003 = vsub.f32 0.0, %v949
      %v1004 = vsub.f32 0.0, %v950
      %v1005 = vsub.f32 0.0, %v951
      %v1006 = vsub.f32 0.0, %v952
      %v1007 = vsub.f32 0.0, %v953
      %v1008 = vsub.f32 0.0, %v954
      %v1009 = vsub.f32 0.0, %v955
      %v1010 = vsub.f32 0.0, %v956
      %v1011 = vsub.f32 0.0, %v957
      %v1012 = vsub.f32 0.0, %v958
      %v1013 = vsub.f32 0.0, %v959
      %v1014 = vsub.f32 0.0, %v960
      %v1015 = vsub.f32 0.0, %v961
      %v1016 = vsub.f32 0.0, %v962
      %v1017 = vsub.f32 0.0, %v963
      %v1018 = vsub.f32 0.0, %v964
      %v1019 = vsub.f32 0.0, %v965
      %v1020 = vsub.f32 0.0, %v966
      %v1021 = vsub.f32 0.0, %v967
      %v1022 = vsub.f32 0.0, %v968
      %v1023 = vsub.f32 0.0, %v969
      %v1024 = vsub.f32 0.0, %v970
      %v1025 = vsub.f32 0.0, %v971
      %v1026 = vsub.f32 0.0, %v972
      %v1027 = vsub.f32 0.0, %v973
      %v1028 = vsub.f32 0.0, %v974
      %v1029 = vsub.f32 0.0, %v975
      %v1030 = vsub.f32 0.0, %v976
      %v1031 = vsub.f32 0.0, %v977
      %v1032 = vsub.f32 0.0, %v978
      %v1033 = vsub.f32 0.0, %v979
      %v1034 = vsub.f32 0.0, %v980
      %v1035 = vsub.f32 0.0, %v981
      %v1036 = vsub.f32 0.0, %v982
      %v1037 = vsub.f32 0.0, %v983
      %v1038 = vsub.f32 0.0, %v984
      %v1039 = vmul.f32 %v985, 1.442695
      %v1040 = vpow.pop %v1039
      %v1041 = vmul.f32 %v986, 1.442695
      %v1042 = vpow.pop %v1041
      %v1043 = vmul.f32 %v987, 1.442695
      %v1044 = vpow.pop %v1043
      %v1045 = vmul.f32 %v988, 1.442695
      %v1046 = vpow.pop %v1045
      %v1047 = vmul.f32 %v989, 1.442695
      %v1048 = vpow.pop %v1047
      %v1049 = vmul.f32 %v990, 1.442695
      %v1050 = vpow.pop %v1049
      %v1051 = vmul.f32 %v991, 1.442695
      %v1052 = vpow.pop %v1051
      %v1053 = vmul.f32 %v992, 1.442695
      %v1054 = vpow.pop %v1053
      %v1055 = vmul.f32 %v993, 1.442695
      %v1056 = vpow.pop %v1055
      %v1057 = vmul.f32 %v994, 1.442695
      %v1058 = vpow.pop %v1057
      %v1059 = vmul.f32 %v995, 1.442695
      %v1060 = vpow.pop %v1059
      %v1061 = vmul.f32 %v996, 1.442695
      %v1062 = vpow.pop %v1061
      %v1063 = vmul.f32 %v997, 1.442695
      %v1064 = vpow.pop %v1063
      %v1065 = vmul.f32 %v998, 1.442695
      %v1066 = vpow.pop %v1065
      %v1067 = vmul.f32 %v999, 1.442695
      %v1068 = vpow.pop %v1067
      %v1069 = vmul.f32 %v1000, 1.442695
      %v1070 = vpow.pop %v1069
      %v1071 = vmul.f32 %v1001, 1.442695
      %v1072 = vpow.pop %v1071
      %v1073 = vmul.f32 %v1002, 1.442695
      %v1074 = vpow.pop %v1073
      %v1075 = vmul.f32 %v1003, 1.442695
      %v1076 = vpow.pop %v1075
      %v1077 = vmul.f32 %v1004, 1.442695
      %v1078 = vpow.pop %v1077
      %v1079 = vmul.f32 %v1005, 1.442695
      %v1080 = vpow.pop %v1079
      %v1081 = vmul.f32 %v1006, 1.442695
      %v1082 = vpow.pop %v1081
      %v1083 = vmul.f32 %v1007, 1.442695
      %v1084 = vpow.pop %v1083
      %v1085 = vmul.f32 %v1008, 1.442695
      %v1086 = vpow.pop %v1085
      %v1087 = vmul.f32 %v1009, 1.442695
      %v1088 = vpow.pop %v1087
      %v1089 = vmul.f32 %v1010, 1.442695
      %v1090 = vpow.pop %v1089
      %v1091 = vmul.f32 %v1011, 1.442695
      %v1092 = vpow.pop %v1091
      %v1093 = vmul.f32 %v1012, 1.442695
      %v1094 = vpow.pop %v1093
      %v1095 = vmul.f32 %v1013, 1.442695
      %v1096 = vpow.pop %v1095
      %v1097 = vmul.f32 %v1014, 1.442695
      %v1098 = vpow.pop %v1097
      %v1099 = vmul.f32 %v1015, 1.442695
      %v1100 = vpow.pop %v1099
      %v1101 = vmul.f32 %v1016, 1.442695
      %v1102 = vpow.pop %v1101
      %v1103 = vmul.f32 %v1017, 1.442695
      %v1104 = vpow.pop %v1103
      %v1105 = vmul.f32 %v1018, 1.442695
      %v1106 = vpow.pop %v1105
      %v1107 = vmul.f32 %v1019, 1.442695
      %v1108 = vpow.pop %v1107
      %v1109 = vmul.f32 %v1020, 1.442695
      %v1110 = vpow.pop %v1109
      %v1111 = vmul.f32 %v1021, 1.442695
      %v1112 = vpow.pop %v1111
      %v1113 = vmul.f32 %v1022, 1.442695
      %v1114 = vpow.pop %v1113
      %v1115 = vmul.f32 %v1023, 1.442695
      %v1116 = vpow.pop %v1115
      %v1117 = vmul.f32 %v1024, 1.442695
      %v1118 = vpow.pop %v1117
      %v1119 = vmul.f32 %v1025, 1.442695
      %v1120 = vpow.pop %v1119
      %v1121 = vmul.f32 %v1026, 1.442695
      %v1122 = vpow.pop %v1121
      %v1123 = vmul.f32 %v1027, 1.442695
      %v1124 = vpow.pop %v1123
      %v1125 = vmul.f32 %v1028, 1.442695
      %v1126 = vpow.pop %v1125
      %v1127 = vmul.f32 %v1029, 1.442695
      %v1128 = vpow.pop %v1127
      %v1129 = vmul.f32 %v1030, 1.442695
      %v1130 = vpow.pop %v1129
      %v1131 = vmul.f32 %v1031, 1.442695
      %v1132 = vpow.pop %v1131
      %v1133 = vmul.f32 %v1032, 1.442695
      %v1134 = vpow.pop %v1133
      %v1135 = vmul.f32 %v1033, 1.442695
      %v1136 = vpow.pop %v1135
      %v1137 = vmul.f32 %v1034, 1.442695
      %v1138 = vpow.pop %v1137
      %v1139 = vmul.f32 %v1035, 1.442695
      %v1140 = vpow.pop %v1139
      %v1141 = vmul.f32 %v1036, 1.442695
      %v1142 = vpow.pop %v1141
      %v1143 = vmul.f32 %v1037, 1.442695
      %v1144 = vpow.pop %v1143
      %v1145 = vmul.f32 %v1038, 1.442695
      %v1146 = vpow.pop %v1145
      %v1147 = vadd.f32 %v1040, 1.0
      %v1148 = vadd.f32 %v1042, 1.0
      %v1149 = vadd.f32 %v1044, 1.0
      %v1150 = vadd.f32 %v1046, 1.0
      %v1151 = vadd.f32 %v1048, 1.0
      %v1152 = vadd.f32 %v1050, 1.0
      %v1153 = vadd.f32 %v1052, 1.0
      %v1154 = vadd.f32 %v1054, 1.0
      %v1155 = vadd.f32 %v1056, 1.0
      %v1156 = vadd.f32 %v1058, 1.0
      %v1157 = vadd.f32 %v1060, 1.0
      %v1158 = vadd.f32 %v1062, 1.0
      %v1159 = vadd.f32 %v1064, 1.0
      %v1160 = vadd.f32 %v1066, 1.0
      %v1161 = vadd.f32 %v1068, 1.0
      %v1162 = vadd.f32 %v1070, 1.0
      %v1163 = vadd.f32 %v1072, 1.0
      %v1164 = vadd.f32 %v1074, 1.0
      %v1165 = vadd.f32 %v1076, 1.0
      %v1166 = vadd.f32 %v1078, 1.0
      %v1167 = vadd.f32 %v1080, 1.0
      %v1168 = vadd.f32 %v1082, 1.0
      %v1169 = vadd.f32 %v1084, 1.0
      %v1170 = vadd.f32 %v1086, 1.0
      %v1171 = vadd.f32 %v1088, 1.0
      %v1172 = vadd.f32 %v1090, 1.0
      %v1173 = vadd.f32 %v1092, 1.0
      %v1174 = vadd.f32 %v1094, 1.0
      %v1175 = vadd.f32 %v1096, 1.0
      %v1176 = vadd.f32 %v1098, 1.0
      %v1177 = vadd.f32 %v1100, 1.0
      %v1178 = vadd.f32 %v1102, 1.0
      %v1179 = vadd.f32 %v1104, 1.0
      %v1180 = vadd.f32 %v1106, 1.0
      %v1181 = vadd.f32 %v1108, 1.0
      %v1182 = vadd.f32 %v1110, 1.0
      %v1183 = vadd.f32 %v1112, 1.0
      %v1184 = vadd.f32 %v1114, 1.0
      %v1185 = vadd.f32 %v1116, 1.0
      %v1186 = vadd.f32 %v1118, 1.0
      %v1187 = vadd.f32 %v1120, 1.0
      %v1188 = vadd.f32 %v1122, 1.0
      %v1189 = vadd.f32 %v1124, 1.0
      %v1190 = vadd.f32 %v1126, 1.0
      %v1191 = vadd.f32 %v1128, 1.0
      %v1192 = vadd.f32 %v1130, 1.0
      %v1193 = vadd.f32 %v1132, 1.0
      %v1194 = vadd.f32 %v1134, 1.0
      %v1195 = vadd.f32 %v1136, 1.0
      %v1196 = vadd.f32 %v1138, 1.0
      %v1197 = vadd.f32 %v1140, 1.0
      %v1198 = vadd.f32 %v1142, 1.0
      %v1199 = vadd.f32 %v1144, 1.0
      %v1200 = vadd.f32 %v1146, 1.0
      %v1201 = vrcp.pop %v1147
      %v1202 = vrcp.pop %v1148
      %v1203 = vrcp.pop %v1149
      %v1204 = vrcp.pop %v1150
      %v1205 = vrcp.pop %v1151
      %v1206 = vrcp.pop %v1152
      %v1207 = vrcp.pop %v1153
      %v1208 = vrcp.pop %v1154
      %v1209 = vrcp.pop %v1155
      %v1210 = vrcp.pop %v1156
      %v1211 = vrcp.pop %v1157
      %v1212 = vrcp.pop %v1158
      %v1213 = vrcp.pop %v1159
      %v1214 = vrcp.pop %v1160
      %v1215 = vrcp.pop %v1161
      %v1216 = vrcp.pop %v1162
      %v1217 = vrcp.pop %v1163
      %v1218 = vrcp.pop %v1164
      %v1219 = vrcp.pop %v1165
      %v1220 = vrcp.pop %v1166
      %v1221 = vrcp.pop %v1167
      %v1222 = vrcp.pop %v1168
      %v1223 = vrcp.pop %v1169
      %v1224 = vrcp.pop %v1170
      %v1225 = vrcp.pop %v1171
      %v1226 = vrcp.pop %v1172
      %v1227 = vrcp.pop %v1173
      %v1228 = vrcp.pop %v1174
      %v1229 = vrcp.pop %v1175
      %v1230 = vrcp.pop %v1176
      %v1231 = vrcp.pop %v1177
      %v1232 = vrcp.pop %v1178
      %v1233 = vrcp.pop %v1179
      %v1234 = vrcp.pop %v1180
      %v1235 = vrcp.pop %v1181
      %v1236 = vrcp.pop %v1182
      %v1237 = vrcp.pop %v1183
      %v1238 = vrcp.pop %v1184
      %v1239 = vrcp.pop %v1185
      %v1240 = vrcp.pop %v1186
      %v1241 = vrcp.pop %v1187
      %v1242 = vrcp.pop %v1188
      %v1243 = vrcp.pop %v1189
      %v1244 = vrcp.pop %v1190
      %v1245 = vrcp.pop %v1191
      %v1246 = vrcp.pop %v1192
      %v1247 = vrcp.pop %v1193
      %v1248 = vrcp.pop %v1194
      %v1249 = vrcp.pop %v1195
      %v1250 = vrcp.pop %v1196
      %v1251 = vrcp.pop %v1197
      %v1252 = vrcp.pop %v1198
      %v1253 = vrcp.pop %v1199
      %v1254 = vrcp.pop %v1200
      %v1255 = vmul.f32 %v877, %v1201
      %v1256 = vmul.f32 %v878, %v1202
      %v1257 = vmul.f32 %v879, %v1203
      %v1258 = vmul.f32 %v880, %v1204
      %v1259 = vmul.f32 %v881, %v1205
      %v1260 = vmul.f32 %v882, %v1206
      %v1261 = vmul.f32 %v883, %v1207
      %v1262 = vmul.f32 %v884, %v1208
      %v1263 = vmul.f32 %v885, %v1209
      %v1264 = vmul.f32 %v886, %v1210
      %v1265 = vmul.f32 %v887, %v1211
      %v1266 = vmul.f32 %v888, %v1212
      %v1267 = vmul.f32 %v889, %v1213
      %v1268 = vmul.f32 %v890, %v1214
      %v1269 = vmul.f32 %v891, %v1215
      %v1270 = vmul.f32 %v892, %v1216
      %v1271 = vmul.f32 %v893, %v1217
      %v1272 = vmul.f32 %v894, %v1218
      %v1273 = vmul.f32 %v895, %v1219
      %v1274 = vmul.f32 %v896, %v1220
      %v1275 = vmul.f32 %v897, %v1221
      %v1276 = vmul.f32 %v898, %v1222
      %v1277 = vmul.f32 %v899, %v1223
      %v1278 = vmul.f32 %v900, %v1224
      %v1279 = vmul.f32 %v901, %v1225
      %v1280 = vmul.f32 %v902, %v1226
      %v1281 = vmul.f32 %v903, %v1227
      %v1282 = vmul.f32 %v904, %v1228
      %v1283 = vmul.f32 %v905, %v1229
      %v1284 = vmul.f32 %v906, %v1230
      %v1285 = vmul.f32 %v907, %v1231
      %v1286 = vmul.f32 %v908, %v1232
      %v1287 = vmul.f32 %v909, %v1233
      %v1288 = vmul.f32 %v910, %v1234
      %v1289 = vmul.f32 %v911, %v1235
      %v1290 = vmul.f32 %v912, %v1236
      %v1291 = vmul.f32 %v913, %v1237
      %v1292 = vmul.f32 %v914, %v1238
      %v1293 = vmul.f32 %v915, %v1239
      %v1294 = vmul.f32 %v916, %v1240
      %v1295 = vmul.f32 %v917, %v1241
      %v1296 = vmul.f32 %v918, %v1242
      %v1297 = vmul.f32 %v919, %v1243
      %v1298 = vmul.f32 %v920, %v1244
      %v1299 = vmul.f32 %v921, %v1245
      %v1300 = vmul.f32 %v922, %v1246
      %v1301 = vmul.f32 %v923, %v1247
      %v1302 = vmul.f32 %v924, %v1248
      %v1303 = vmul.f32 %v925, %v1249
      %v1304 = vmul.f32 %v926, %v1250
      %v1305 = vmul.f32 %v927, %v1251
      %v1306 = vmul.f32 %v928, %v1252
      %v1307 = vmul.f32 %v929, %v1253
      %v1308 = vmul.f32 %v930, %v1254
      %v1309 = vstv %s258
      %v1310 = vadd.s32 %v1309, 1
      %v1311 = vadd.s32 %v1309, 2
      %v1312 = vadd.s32 %v1309, 3
      %v1313 = vadd.s32 %v1309, 4
      %v1314 = vadd.s32 %v1309, 5
      %v1315 = vadd.s32 %v1309, 6
      %v1316 = vadd.s32 %v1309, 7
      %v1317 = vadd.s32 %v1309, 8
      %v1318 = vadd.s32 %v1309, 9
      %v1319 = vadd.s32 %v1309, 10
      %v1320 = vadd.s32 %v1309, 11
      %v1321 = vadd.s32 %v1309, 12
      %v1322 = vadd.s32 %v1309, 13
      %v1323 = vadd.s32 %v1309, 14
      %v1324 = vadd.s32 %v1309, 15
      %v1325 = vadd.s32 %v1309, 16
      %v1326 = vadd.s32 %v1309, 17
      %v1327 = vlaneseq
      %v1328 = vshrl.u32 %v1327, 7
      %v1329 = vadd.s32 %v1328, 8
      %v1330 = vadd.s32 %v1328, 16
      %vm1331 = vcmp.ge.s32.totalorder %v1309, 1
      %vm1332 = vcmp.ge.s32.totalorder %v1310, 1
      %vm1333 = vcmp.ge.s32.totalorder %v1311, 1
      %vm1334 = vcmp.ge.s32.totalorder %v1312, 1
      %vm1335 = vcmp.ge.s32.totalorder %v1313, 1
      %vm1336 = vcmp.ge.s32.totalorder %v1314, 1
      %vm1337 = vcmp.ge.s32.totalorder %v1315, 1
      %vm1338 = vcmp.ge.s32.totalorder %v1316, 1
      %vm1339 = vcmp.ge.s32.totalorder %v1317, 1
      %vm1340 = vcmp.ge.s32.totalorder %v1318, 1
      %vm1341 = vcmp.ge.s32.totalorder %v1319, 1
      %vm1342 = vcmp.ge.s32.totalorder %v1320, 1
      %vm1343 = vcmp.ge.s32.totalorder %v1321, 1
      %vm1344 = vcmp.ge.s32.totalorder %v1322, 1
      %vm1345 = vcmp.ge.s32.totalorder %v1323, 1
      %vm1346 = vcmp.ge.s32.totalorder %v1324, 1
      %vm1347 = vcmp.ge.s32.totalorder %v1325, 1
      %vm1348 = vcmp.ge.s32.totalorder %v1326, 1
      %vm1349 = vcmp.le.s32.totalorder %v1309, 16
      %vm1350 = vcmp.le.s32.totalorder %v1310, 16
      %vm1351 = vcmp.le.s32.totalorder %v1311, 16
      %vm1352 = vcmp.le.s32.totalorder %v1312, 16
      %vm1353 = vcmp.le.s32.totalorder %v1313, 16
      %vm1354 = vcmp.le.s32.totalorder %v1314, 16
      %vm1355 = vcmp.le.s32.totalorder %v1315, 16
      %vm1356 = vcmp.le.s32.totalorder %v1316, 16
      %vm1357 = vcmp.le.s32.totalorder %v1317, 16
      %vm1358 = vcmp.le.s32.totalorder %v1318, 16
      %vm1359 = vcmp.le.s32.totalorder %v1319, 16
      %vm1360 = vcmp.le.s32.totalorder %v1320, 16
      %vm1361 = vcmp.le.s32.totalorder %v1321, 16
      %vm1362 = vcmp.le.s32.totalorder %v1322, 16
      %vm1363 = vcmp.le.s32.totalorder %v1323, 16
      %vm1364 = vcmp.le.s32.totalorder %v1324, 16
      %vm1365 = vcmp.le.s32.totalorder %v1325, 16
      %vm1366 = vcmp.le.s32.totalorder %v1326, 16
      %vm1367 = vmand %vm1331, %vm1349
      %vm1368 = vmand %vm1332, %vm1350
      %vm1369 = vmand %vm1333, %vm1351
      %vm1370 = vmand %vm1334, %vm1352
      %vm1371 = vmand %vm1335, %vm1353
      %vm1372 = vmand %vm1336, %vm1354
      %vm1373 = vmand %vm1337, %vm1355
      %vm1374 = vmand %vm1338, %vm1356
      %vm1375 = vmand %vm1339, %vm1357
      %vm1376 = vmand %vm1340, %vm1358
      %vm1377 = vmand %vm1341, %vm1359
      %vm1378 = vmand %vm1342, %vm1360
      %vm1379 = vmand %vm1343, %vm1361
      %vm1380 = vmand %vm1344, %vm1362
      %vm1381 = vmand %vm1345, %vm1363
      %vm1382 = vmand %vm1346, %vm1364
      %vm1383 = vmand %vm1347, %vm1365
      %vm1384 = vmand %vm1348, %vm1366
      %vm1385 = vcmp.ge.s32.totalorder %v1328, 1
      %vm1386 = vcmp.ge.s32.totalorder %v1329, 1
      %vm1387 = vcmp.ge.s32.totalorder %v1330, 1
      %vm1388 = vmand %vm1367, %vm1385
      %vm1389 = vmand %vm1367, %vm1386
      %vm1390 = vmand %vm1367, %vm1387
      %vm1391 = vmand %vm1368, %vm1385
      %vm1392 = vmand %vm1368, %vm1386
      %vm1393 = vmand %vm1368, %vm1387
      %vm1394 = vmand %vm1369, %vm1385
      %vm1395 = vmand %vm1369, %vm1386
      %vm1396 = vmand %vm1369, %vm1387
      %vm1397 = vmand %vm1370, %vm1385
      %vm1398 = vmand %vm1370, %vm1386
      %vm1399 = vmand %vm1370, %vm1387
      %vm1400 = vmand %vm1371, %vm1385
      %vm1401 = vmand %vm1371, %vm1386
      %vm1402 = vmand %vm1371, %vm1387
      %vm1403 = vmand %vm1372, %vm1385
      %vm1404 = vmand %vm1372, %vm1386
      %vm1405 = vmand %vm1372, %vm1387
      %vm1406 = vmand %vm1373, %vm1385
      %vm1407 = vmand %vm1373, %vm1386
      %vm1408 = vmand %vm1373, %vm1387
      %vm1409 = vmand %vm1374, %vm1385
      %vm1410 = vmand %vm1374, %vm1386
      %vm1411 = vmand %vm1374, %vm1387
      %vm1412 = vmand %vm1375, %vm1385
      %vm1413 = vmand %vm1375, %vm1386
      %vm1414 = vmand %vm1375, %vm1387
      %vm1415 = vmand %vm1376, %vm1385
      %vm1416 = vmand %vm1376, %vm1386
      %vm1417 = vmand %vm1376, %vm1387
      %vm1418 = vmand %vm1377, %vm1385
      %vm1419 = vmand %vm1377, %vm1386
      %vm1420 = vmand %vm1377, %vm1387
      %vm1421 = vmand %vm1378, %vm1385
      %vm1422 = vmand %vm1378, %vm1386
      %vm1423 = vmand %vm1378, %vm1387
      %vm1424 = vmand %vm1379, %vm1385
      %vm1425 = vmand %vm1379, %vm1386
      %vm1426 = vmand %vm1379, %vm1387
      %vm1427 = vmand %vm1380, %vm1385
      %vm1428 = vmand %vm1380, %vm1386
      %vm1429 = vmand %vm1380, %vm1387
      %vm1430 = vmand %vm1381, %vm1385
      %vm1431 = vmand %vm1381, %vm1386
      %vm1432 = vmand %vm1381, %vm1387
      %vm1433 = vmand %vm1382, %vm1385
      %vm1434 = vmand %vm1382, %vm1386
      %vm1435 = vmand %vm1382, %vm1387
      %vm1436 = vmand %vm1383, %vm1385
      %vm1437 = vmand %vm1383, %vm1386
      %vm1438 = vmand %vm1383, %vm1387
      %vm1439 = vmand %vm1384, %vm1385
      %vm1440 = vmand %vm1384, %vm1386
      %vm1441 = vmand %vm1384, %vm1387
      %vm1442 = vcmp.le.s32.totalorder %v1328, 16
      %vm1443 = vcmp.le.s32.totalorder %v1329, 16
      %vm1444 = vcmp.le.s32.totalorder %v1330, 16
      %vm1445 = vmand %vm1388, %vm1442
      %vm1446 = vmand %vm1389, %vm1443
      %vm1447 = vmand %vm1390, %vm1444
      %vm1448 = vmand %vm1391, %vm1442
      %vm1449 = vmand %vm1392, %vm1443
      %vm1450 = vmand %vm1393, %vm1444
      %vm1451 = vmand %vm1394, %vm1442
      %vm1452 = vmand %vm1395, %vm1443
      %vm1453 = vmand %vm1396, %vm1444
      %vm1454 = vmand %vm1397, %vm1442
      %vm1455 = vmand %vm1398, %vm1443
      %vm1456 = vmand %vm1399, %vm1444
      %vm1457 = vmand %vm1400, %vm1442
      %vm1458 = vmand %vm1401, %vm1443
      %vm1459 = vmand %vm1402, %vm1444
      %vm1460 = vmand %vm1403, %vm1442
      %vm1461 = vmand %vm1404, %vm1443
      %vm1462 = vmand %vm1405, %vm1444
      %vm1463 = vmand %vm1406, %vm1442
      %vm1464 = vmand %vm1407, %vm1443
      %vm1465 = vmand %vm1408, %vm1444
      %vm1466 = vmand %vm1409, %vm1442
      %vm1467 = vmand %vm1410, %vm1443
      %vm1468 = vmand %vm1411, %vm1444
      %vm1469 = vmand %vm1412, %vm1442
      %vm1470 = vmand %vm1413, %vm1443
      %vm1471 = vmand %vm1414, %vm1444
      %vm1472 = vmand %vm1415, %vm1442
      %vm1473 = vmand %vm1416, %vm1443
      %vm1474 = vmand %vm1417, %vm1444
      %vm1475 = vmand %vm1418, %vm1442
      %vm1476 = vmand %vm1419, %vm1443
      %vm1477 = vmand %vm1420, %vm1444
      %vm1478 = vmand %vm1421, %vm1442
      %vm1479 = vmand %vm1422, %vm1443
      %vm1480 = vmand %vm1423, %vm1444
      %vm1481 = vmand %vm1424, %vm1442
      %vm1482 = vmand %vm1425, %vm1443
      %vm1483 = vmand %vm1426, %vm1444
      %vm1484 = vmand %vm1427, %vm1442
      %vm1485 = vmand %vm1428, %vm1443
      %vm1486 = vmand %vm1429, %vm1444
      %vm1487 = vmand %vm1430, %vm1442
      %vm1488 = vmand %vm1431, %vm1443
      %vm1489 = vmand %vm1432, %vm1444
      %vm1490 = vmand %vm1433, %vm1442
      %vm1491 = vmand %vm1434, %vm1443
      %vm1492 = vmand %vm1435, %vm1444
      %vm1493 = vmand %vm1436, %vm1442
      %vm1494 = vmand %vm1437, %vm1443
      %vm1495 = vmand %vm1438, %vm1444
      %vm1496 = vmand %vm1439, %vm1442
      %vm1497 = vmand %vm1440, %vm1443
      %vm1498 = vmand %vm1441, %vm1444
      %v1499 = vsel %vm1445, 1, 0
      %v1500 = vsel %vm1446, 1, 0
      %v1501 = vsel %vm1447, 1, 0
      %v1502 = vsel %vm1448, 1, 0
      %v1503 = vsel %vm1449, 1, 0
      %v1504 = vsel %vm1450, 1, 0
      %v1505 = vsel %vm1451, 1, 0
      %v1506 = vsel %vm1452, 1, 0
      %v1507 = vsel %vm1453, 1, 0
      %v1508 = vsel %vm1454, 1, 0
      %v1509 = vsel %vm1455, 1, 0
      %v1510 = vsel %vm1456, 1, 0
      %v1511 = vsel %vm1457, 1, 0
      %v1512 = vsel %vm1458, 1, 0
      %v1513 = vsel %vm1459, 1, 0
      %v1514 = vsel %vm1460, 1, 0
      %v1515 = vsel %vm1461, 1, 0
      %v1516 = vsel %vm1462, 1, 0
      %v1517 = vsel %vm1463, 1, 0
      %v1518 = vsel %vm1464, 1, 0
      %v1519 = vsel %vm1465, 1, 0
      %v1520 = vsel %vm1466, 1, 0
      %v1521 = vsel %vm1467, 1, 0
      %v1522 = vsel %vm1468, 1, 0
      %v1523 = vsel %vm1469, 1, 0
      %v1524 = vsel %vm1470, 1, 0
      %v1525 = vsel %vm1471, 1, 0
      %v1526 = vsel %vm1472, 1, 0
      %v1527 = vsel %vm1473, 1, 0
      %v1528 = vsel %vm1474, 1, 0
      %v1529 = vsel %vm1475, 1, 0
      %v1530 = vsel %vm1476, 1, 0
      %v1531 = vsel %vm1477, 1, 0
      %v1532 = vsel %vm1478, 1, 0
      %v1533 = vsel %vm1479, 1, 0
      %v1534 = vsel %vm1480, 1, 0
      %v1535 = vsel %vm1481, 1, 0
      %v1536 = vsel %vm1482, 1, 0
      %v1537 = vsel %vm1483, 1, 0
      %v1538 = vsel %vm1484, 1, 0
      %v1539 = vsel %vm1485, 1, 0
      %v1540 = vsel %vm1486, 1, 0
      %v1541 = vsel %vm1487, 1, 0
      %v1542 = vsel %vm1488, 1, 0
      %v1543 = vsel %vm1489, 1, 0
      %v1544 = vsel %vm1490, 1, 0
      %v1545 = vsel %vm1491, 1, 0
      %v1546 = vsel %vm1492, 1, 0
      %v1547 = vsel %vm1493, 1, 0
      %v1548 = vsel %vm1494, 1, 0
      %v1549 = vsel %vm1495, 1, 0
      %v1550 = vsel %vm1496, 1, 0
      %v1551 = vsel %vm1497, 1, 0
      %v1552 = vsel %vm1498, 1, 0
      %vm1553 = vcmp.eq.s32.totalorder %v1499, 1
      %vm1554 = vcmp.eq.s32.totalorder %v1500, 1
      %vm1555 = vcmp.eq.s32.totalorder %v1501, 1
      %vm1556 = vcmp.eq.s32.totalorder %v1502, 1
      %vm1557 = vcmp.eq.s32.totalorder %v1503, 1
      %vm1558 = vcmp.eq.s32.totalorder %v1504, 1
      %vm1559 = vcmp.eq.s32.totalorder %v1505, 1
      %vm1560 = vcmp.eq.s32.totalorder %v1506, 1
      %vm1561 = vcmp.eq.s32.totalorder %v1507, 1
      %vm1562 = vcmp.eq.s32.totalorder %v1508, 1
      %vm1563 = vcmp.eq.s32.totalorder %v1509, 1
      %vm1564 = vcmp.eq.s32.totalorder %v1510, 1
      %vm1565 = vcmp.eq.s32.totalorder %v1511, 1
      %vm1566 = vcmp.eq.s32.totalorder %v1512, 1
      %vm1567 = vcmp.eq.s32.totalorder %v1513, 1
      %vm1568 = vcmp.eq.s32.totalorder %v1514, 1
      %vm1569 = vcmp.eq.s32.totalorder %v1515, 1
      %vm1570 = vcmp.eq.s32.totalorder %v1516, 1
      %vm1571 = vcmp.eq.s32.totalorder %v1517, 1
      %vm1572 = vcmp.eq.s32.totalorder %v1518, 1
      %vm1573 = vcmp.eq.s32.totalorder %v1519, 1
      %vm1574 = vcmp.eq.s32.totalorder %v1520, 1
      %vm1575 = vcmp.eq.s32.totalorder %v1521, 1
      %vm1576 = vcmp.eq.s32.totalorder %v1522, 1
      %vm1577 = vcmp.eq.s32.totalorder %v1523, 1
      %vm1578 = vcmp.eq.s32.totalorder %v1524, 1
      %vm1579 = vcmp.eq.s32.totalorder %v1525, 1
      %vm1580 = vcmp.eq.s32.totalorder %v1526, 1
      %vm1581 = vcmp.eq.s32.totalorder %v1527, 1
      %vm1582 = vcmp.eq.s32.totalorder %v1528, 1
      %vm1583 = vcmp.eq.s32.totalorder %v1529, 1
      %vm1584 = vcmp.eq.s32.totalorder %v1530, 1
      %vm1585 = vcmp.eq.s32.totalorder %v1531, 1
      %vm1586 = vcmp.eq.s32.totalorder %v1532, 1
      %vm1587 = vcmp.eq.s32.totalorder %v1533, 1
      %vm1588 = vcmp.eq.s32.totalorder %v1534, 1
      %vm1589 = vcmp.eq.s32.totalorder %v1535, 1
      %vm1590 = vcmp.eq.s32.totalorder %v1536, 1
      %vm1591 = vcmp.eq.s32.totalorder %v1537, 1
      %vm1592 = vcmp.eq.s32.totalorder %v1538, 1
      %vm1593 = vcmp.eq.s32.totalorder %v1539, 1
      %vm1594 = vcmp.eq.s32.totalorder %v1540, 1
      %vm1595 = vcmp.eq.s32.totalorder %v1541, 1
      %vm1596 = vcmp.eq.s32.totalorder %v1542, 1
      %vm1597 = vcmp.eq.s32.totalorder %v1543, 1
      %vm1598 = vcmp.eq.s32.totalorder %v1544, 1
      %vm1599 = vcmp.eq.s32.totalorder %v1545, 1
      %vm1600 = vcmp.eq.s32.totalorder %v1546, 1
      %vm1601 = vcmp.eq.s32.totalorder %v1547, 1
      %vm1602 = vcmp.eq.s32.totalorder %v1548, 1
      %vm1603 = vcmp.eq.s32.totalorder %v1549, 1
      %vm1604 = vcmp.eq.s32.totalorder %v1550, 1
      %vm1605 = vcmp.eq.s32.totalorder %v1551, 1
      %vm1606 = vcmp.eq.s32.totalorder %v1552, 1
      %v1607 = vsel %vm1553, %v1255, 0.0
      %v1608 = vsel %vm1554, %v1256, 0.0
      %v1609 = vsel %vm1555, %v1257, 0.0
      %v1610 = vsel %vm1556, %v1258, 0.0
      %v1611 = vsel %vm1557, %v1259, 0.0
      %v1612 = vsel %vm1558, %v1260, 0.0
      %v1613 = vsel %vm1559, %v1261, 0.0
      %v1614 = vsel %vm1560, %v1262, 0.0
      %v1615 = vsel %vm1561, %v1263, 0.0
      %v1616 = vsel %vm1562, %v1264, 0.0
      %v1617 = vsel %vm1563, %v1265, 0.0
      %v1618 = vsel %vm1564, %v1266, 0.0
      %v1619 = vsel %vm1565, %v1267, 0.0
      %v1620 = vsel %vm1566, %v1268, 0.0
      %v1621 = vsel %vm1567, %v1269, 0.0
      %v1622 = vsel %vm1568, %v1270, 0.0
      %v1623 = vsel %vm1569, %v1271, 0.0
      %v1624 = vsel %vm1570, %v1272, 0.0
      %v1625 = vsel %vm1571, %v1273, 0.0
      %v1626 = vsel %vm1572, %v1274, 0.0
      %v1627 = vsel %vm1573, %v1275, 0.0
      %v1628 = vsel %vm1574, %v1276, 0.0
      %v1629 = vsel %vm1575, %v1277, 0.0
      %v1630 = vsel %vm1576, %v1278, 0.0
      %v1631 = vsel %vm1577, %v1279, 0.0
      %v1632 = vsel %vm1578, %v1280, 0.0
      %v1633 = vsel %vm1579, %v1281, 0.0
      %v1634 = vsel %vm1580, %v1282, 0.0
      %v1635 = vsel %vm1581, %v1283, 0.0
      %v1636 = vsel %vm1582, %v1284, 0.0
      %v1637 = vsel %vm1583, %v1285, 0.0
      %v1638 = vsel %vm1584, %v1286, 0.0
      %v1639 = vsel %vm1585, %v1287, 0.0
      %v1640 = vsel %vm1586, %v1288, 0.0
      %v1641 = vsel %vm1587, %v1289, 0.0
      %v1642 = vsel %vm1588, %v1290, 0.0
      %v1643 = vsel %vm1589, %v1291, 0.0
      %v1644 = vsel %vm1590, %v1292, 0.0
      %v1645 = vsel %vm1591, %v1293, 0.0
      %v1646 = vsel %vm1592, %v1294, 0.0
      %v1647 = vsel %vm1593, %v1295, 0.0
      %v1648 = vsel %vm1594, %v1296, 0.0
      %v1649 = vsel %vm1595, %v1297, 0.0
      %v1650 = vsel %vm1596, %v1298, 0.0
      %v1651 = vsel %vm1597, %v1299, 0.0
      %v1652 = vsel %vm1598, %v1300, 0.0
      %v1653 = vsel %vm1599, %v1301, 0.0
      %v1654 = vsel %vm1600, %v1302, 0.0
      %v1655 = vsel %vm1601, %v1303, 0.0
      %v1656 = vsel %vm1602, %v1304, 0.0
      %v1657 = vsel %vm1603, %v1305, 0.0
      %v1658 = vsel %vm1604, %v1306, 0.0
      %v1659 = vsel %vm1605, %v1307, 0.0
      %v1660 = vsel %vm1606, %v1308, 0.0
      %v1661 = vpack.c.bf16 %v1608, %v1607
      %v1662 = vpack.c.bf16 %v1609, %v1609
      %v1663 = vpack.c.bf16 %v1611, %v1610
      %v1664 = vpack.c.bf16 %v1612, %v1612
      %v1665 = vpack.c.bf16 %v1614, %v1613
      %v1666 = vpack.c.bf16 %v1615, %v1615
      %v1667 = vpack.c.bf16 %v1617, %v1616
      %v1668 = vpack.c.bf16 %v1618, %v1618
      %v1669 = vpack.c.bf16 %v1620, %v1619
      %v1670 = vpack.c.bf16 %v1621, %v1621
      %v1671 = vpack.c.bf16 %v1623, %v1622
      %v1672 = vpack.c.bf16 %v1624, %v1624
      %v1673 = vpack.c.bf16 %v1626, %v1625
      %v1674 = vpack.c.bf16 %v1627, %v1627
      %v1675 = vpack.c.bf16 %v1629, %v1628
      %v1676 = vpack.c.bf16 %v1630, %v1630
      %v1677 = vpack.c.bf16 %v1632, %v1631
      %v1678 = vpack.c.bf16 %v1633, %v1633
      %v1679 = vpack.c.bf16 %v1635, %v1634
      %v1680 = vpack.c.bf16 %v1636, %v1636
      %v1681 = vpack.c.bf16 %v1638, %v1637
      %v1682 = vpack.c.bf16 %v1639, %v1639
      %v1683 = vpack.c.bf16 %v1641, %v1640
      %v1684 = vpack.c.bf16 %v1642, %v1642
      %v1685 = vpack.c.bf16 %v1644, %v1643
      %v1686 = vpack.c.bf16 %v1645, %v1645
      %v1687 = vpack.c.bf16 %v1647, %v1646
      %v1688 = vpack.c.bf16 %v1648, %v1648
      %v1689 = vpack.c.bf16 %v1650, %v1649
      %v1690 = vpack.c.bf16 %v1651, %v1651
      %v1691 = vpack.c.bf16 %v1653, %v1652
      %v1692 = vpack.c.bf16 %v1654, %v1654
      %v1693 = vpack.c.bf16 %v1656, %v1655
      %v1694 = vpack.c.bf16 %v1657, %v1657
      %v1695 = vpack.c.bf16 %v1659, %v1658
      %v1696 = vpack.c.bf16 %v1660, %v1660
      %1697 = vst [vmem:[#allocation2] sm:$0xff] %v1661
      %1698 = vst [vmem:[#allocation2 + $0x18] sm:$0xff] %v1663
      %1699 = vst [vmem:[#allocation2 + $0x30] sm:$0xff] %v1665
      %1700 = vst [vmem:[#allocation2 + $0x48] sm:$0xff] %v1667
      %1701 = vst [vmem:[#allocation2 + $0x60] sm:$0xff] %v1669
      %1702 = vst [vmem:[#allocation2 + $0x78] sm:$0xff] %v1671
      %1703 = vst [vmem:[#allocation2 + $0x90] sm:$0xff] %v1673
      %1704 = vst [vmem:[#allocation2 + $0xa8] sm:$0xff] %v1675
      %1705 = vst [vmem:[#allocation2 + $0xc0] sm:$0xff] %v1677
      %1706 = vst [vmem:[#allocation2 + $0xd8] sm:$0xff] %v1679
      %1707 = vst [vmem:[#allocation2 + $0xf0] sm:$0xff] %v1681
      %1708 = vst [vmem:[#allocation2 + $0x108] sm:$0xff] %v1683
      %1709 = vst [vmem:[#allocation2 + $0x120] sm:$0xff] %v1685
      %1710 = vst [vmem:[#allocation2 + $0x138] sm:$0xff] %v1687
      %1711 = vst [vmem:[#allocation2 + $0x150] sm:$0xff] %v1689
      %1712 = vst [vmem:[#allocation2 + $0x168] sm:$0xff] %v1691
      %1713 = vst [vmem:[#allocation2 + $0x180] sm:$0xff] %v1693
      %1714 = vst [vmem:[#allocation2 + $0x198] sm:$0xff] %v1695
      %vm1715 = vsmask.f32 7424
      %v1717 = vshrl.u32 %v1661, 16
      %v1719 = vshll.u32 %v1661, 16
      %v1721 = vrot.slane %v1719, 1
      %v1722 = vor.u32 %v1717, %v1721
      %v1724 = vshll.u32 %v1662, 16
      %v1726 = vrot.slane %v1724, 1
      %v1727 = vsel %vm1715, %v1722, %v1726
      %v1729 = vshrl.u32 %v1663, 16
      %v1731 = vshll.u32 %v1663, 16
      %v1733 = vrot.slane %v1731, 1
      %v1734 = vor.u32 %v1729, %v1733
      %v1736 = vshll.u32 %v1664, 16
      %v1738 = vrot.slane %v1736, 1
      %v1739 = vsel %vm1715, %v1734, %v1738
      %v1741 = vshrl.u32 %v1665, 16
      %v1743 = vshll.u32 %v1665, 16
      %v1745 = vrot.slane %v1743, 1
      %v1746 = vor.u32 %v1741, %v1745
      %v1748 = vshll.u32 %v1666, 16
      %v1750 = vrot.slane %v1748, 1
      %v1751 = vsel %vm1715, %v1746, %v1750
      %v1753 = vshrl.u32 %v1667, 16
      %v1755 = vshll.u32 %v1667, 16
      %v1757 = vrot.slane %v1755, 1
      %v1758 = vor.u32 %v1753, %v1757
      %v1760 = vshll.u32 %v1668, 16
      %v1762 = vrot.slane %v1760, 1
      %v1763 = vsel %vm1715, %v1758, %v1762
      %v1765 = vshrl.u32 %v1669, 16
      %v1767 = vshll.u32 %v1669, 16
      %v1769 = vrot.slane %v1767, 1
      %v1770 = vor.u32 %v1765, %v1769
      %v1772 = vshll.u32 %v1670, 16
      %v1774 = vrot.slane %v1772, 1
      %v1775 = vsel %vm1715, %v1770, %v1774
      %v1777 = vshrl.u32 %v1671, 16
      %v1779 = vshll.u32 %v1671, 16
      %v1781 = vrot.slane %v1779, 1
      %v1782 = vor.u32 %v1777, %v1781
      %v1784 = vshll.u32 %v1672, 16
      %v1786 = vrot.slane %v1784, 1
      %v1787 = vsel %vm1715, %v1782, %v1786
      %v1789 = vshrl.u32 %v1673, 16
      %v1791 = vshll.u32 %v1673, 16
      %v1793 = vrot.slane %v1791, 1
      %v1794 = vor.u32 %v1789, %v1793
      %v1796 = vshll.u32 %v1674, 16
      %v1798 = vrot.slane %v1796, 1
      %v1799 = vsel %vm1715, %v1794, %v1798
      %v1801 = vshrl.u32 %v1675, 16
      %v1803 = vshll.u32 %v1675, 16
      %v1805 = vrot.slane %v1803, 1
      %v1806 = vor.u32 %v1801, %v1805
      %v1808 = vshll.u32 %v1676, 16
      %v1810 = vrot.slane %v1808, 1
      %v1811 = vsel %vm1715, %v1806, %v1810
      %v1813 = vshrl.u32 %v1677, 16
      %v1815 = vshll.u32 %v1677, 16
      %v1817 = vrot.slane %v1815, 1
      %v1818 = vor.u32 %v1813, %v1817
      %v1820 = vshll.u32 %v1678, 16
      %v1822 = vrot.slane %v1820, 1
      %v1823 = vsel %vm1715, %v1818, %v1822
      %v1825 = vshrl.u32 %v1679, 16
      %v1827 = vshll.u32 %v1679, 16
      %v1829 = vrot.slane %v1827, 1
      %v1830 = vor.u32 %v1825, %v1829
      %v1832 = vshll.u32 %v1680, 16
      %v1834 = vrot.slane %v1832, 1
      %v1835 = vsel %vm1715, %v1830, %v1834
      %v1837 = vshrl.u32 %v1681, 16
      %v1839 = vshll.u32 %v1681, 16
      %v1841 = vrot.slane %v1839, 1
      %v1842 = vor.u32 %v1837, %v1841
      %v1844 = vshll.u32 %v1682, 16
      %v1846 = vrot.slane %v1844, 1
      %v1847 = vsel %vm1715, %v1842, %v1846
      %v1849 = vshrl.u32 %v1683, 16
      %v1851 = vshll.u32 %v1683, 16
      %v1853 = vrot.slane %v1851, 1
      %v1854 = vor.u32 %v1849, %v1853
      %v1856 = vshll.u32 %v1684, 16
      %v1858 = vrot.slane %v1856, 1
      %v1859 = vsel %vm1715, %v1854, %v1858
      %v1861 = vshrl.u32 %v1685, 16
      %v1863 = vshll.u32 %v1685, 16
      %v1865 = vrot.slane %v1863, 1
      %v1866 = vor.u32 %v1861, %v1865
      %v1868 = vshll.u32 %v1686, 16
      %v1870 = vrot.slane %v1868, 1
      %v1871 = vsel %vm1715, %v1866, %v1870
      %v1873 = vshrl.u32 %v1687, 16
      %v1875 = vshll.u32 %v1687, 16
      %v1877 = vrot.slane %v1875, 1
      %v1878 = vor.u32 %v1873, %v1877
      %v1880 = vshll.u32 %v1688, 16
      %v1882 = vrot.slane %v1880, 1
      %v1883 = vsel %vm1715, %v1878, %v1882
      %v1885 = vshrl.u32 %v1689, 16
      %v1887 = vshll.u32 %v1689, 16
      %v1889 = vrot.slane %v1887, 1
      %v1890 = vor.u32 %v1885, %v1889
      %v1892 = vshll.u32 %v1690, 16
      %v1894 = vrot.slane %v1892, 1
      %v1895 = vsel %vm1715, %v1890, %v1894
      %v1897 = vshrl.u32 %v1691, 16
      %v1899 = vshll.u32 %v1691, 16
      %v1901 = vrot.slane %v1899, 1
      %v1902 = vor.u32 %v1897, %v1901
      %v1904 = vshll.u32 %v1692, 16
      %v1906 = vrot.slane %v1904, 1
      %v1907 = vsel %vm1715, %v1902, %v1906
      %v1909 = vshrl.u32 %v1693, 16
      %v1911 = vshll.u32 %v1693, 16
      %v1913 = vrot.slane %v1911, 1
      %v1914 = vor.u32 %v1909, %v1913
      %v1916 = vshll.u32 %v1694, 16
      %v1918 = vrot.slane %v1916, 1
      %v1919 = vsel %vm1715, %v1914, %v1918
      %v1921 = vshrl.u32 %v1695, 16
      %v1923 = vshll.u32 %v1695, 16
      %v1925 = vrot.slane %v1923, 1
      %v1926 = vor.u32 %v1921, %v1925
      %v1928 = vshll.u32 %v1696, 16
      %v1930 = vrot.slane %v1928, 1
      %v1931 = vsel %vm1715, %v1926, %v1930
      %1950 = vst [vmem:[#allocation2 + $0x8] sm:$0xff] %v1727
      %1951 = vst [vmem:[#allocation2 + $0x20] sm:$0xff] %v1739
      %1952 = vst [vmem:[#allocation2 + $0x38] sm:$0xff] %v1751
      %1953 = vst [vmem:[#allocation2 + $0x50] sm:$0xff] %v1763
      %1954 = vst [vmem:[#allocation2 + $0x68] sm:$0xff] %v1775
      %1955 = vst [vmem:[#allocation2 + $0x80] sm:$0xff] %v1787
      %1956 = vst [vmem:[#allocation2 + $0x98] sm:$0xff] %v1799
      %1957 = vst [vmem:[#allocation2 + $0xb0] sm:$0xff] %v1811
      %1958 = vst [vmem:[#allocation2 + $0xc8] sm:$0xff] %v1823
      %1959 = vst [vmem:[#allocation2 + $0xe0] sm:$0xff] %v1835
      %1960 = vst [vmem:[#allocation2 + $0xf8] sm:$0xff] %v1847
      %1961 = vst [vmem:[#allocation2 + $0x110] sm:$0xff] %v1859
      %1962 = vst [vmem:[#allocation2 + $0x128] sm:$0xff] %v1871
      %1963 = vst [vmem:[#allocation2 + $0x140] sm:$0xff] %v1883
      %1964 = vst [vmem:[#allocation2 + $0x158] sm:$0xff] %v1895
      %1965 = vst [vmem:[#allocation2 + $0x170] sm:$0xff] %v1907
      %1966 = vst [vmem:[#allocation2 + $0x188] sm:$0xff] %v1919
      %1967 = vst [vmem:[#allocation2 + $0x1a0] sm:$0xff] %v1931
      %vm2004 = vcmask 1046528
      %v2005 = vrot.slane %v1661, 1
      %v2006 = vrot.slane %v1662, 1
      %v2007 = vsel %vm2004, %v2005, %v2006
      %v2008 = vrot.slane %v1663, 1
      %v2009 = vrot.slane %v1664, 1
      %v2010 = vsel %vm2004, %v2008, %v2009
      %v2011 = vrot.slane %v1665, 1
      %v2012 = vrot.slane %v1666, 1
      %v2013 = vsel %vm2004, %v2011, %v2012
      %v2014 = vrot.slane %v1667, 1
      %v2015 = vrot.slane %v1668, 1
      %v2016 = vsel %vm2004, %v2014, %v2015
      %v2017 = vrot.slane %v1669, 1
      %v2018 = vrot.slane %v1670, 1
      %v2019 = vsel %vm2004, %v2017, %v2018
      %v2020 = vrot.slane %v1671, 1
      %v2021 = vrot.slane %v1672, 1
      %v2022 = vsel %vm2004, %v2020, %v2021
      %v2023 = vrot.slane %v1673, 1
      %v2024 = vrot.slane %v1674, 1
      %v2025 = vsel %vm2004, %v2023, %v2024
      %v2026 = vrot.slane %v1675, 1
      %v2027 = vrot.slane %v1676, 1
      %v2028 = vsel %vm2004, %v2026, %v2027
      %v2029 = vrot.slane %v1677, 1
      %v2030 = vrot.slane %v1678, 1
      %v2031 = vsel %vm2004, %v2029, %v2030
      %v2032 = vrot.slane %v1679, 1
      %v2033 = vrot.slane %v1680, 1
      %v2034 = vsel %vm2004, %v2032, %v2033
      %v2035 = vrot.slane %v1681, 1
      %v2036 = vrot.slane %v1682, 1
      %v2037 = vsel %vm2004, %v2035, %v2036
      %v2038 = vrot.slane %v1683, 1
      %v2039 = vrot.slane %v1684, 1
      %v2040 = vsel %vm2004, %v2038, %v2039
      %v2041 = vrot.slane %v1685, 1
      %v2042 = vrot.slane %v1686, 1
      %v2043 = vsel %vm2004, %v2041, %v2042
      %v2044 = vrot.slane %v1687, 1
      %v2045 = vrot.slane %v1688, 1
      %v2046 = vsel %vm2004, %v2044, %v2045
      %v2047 = vrot.slane %v1689, 1
      %v2048 = vrot.slane %v1690, 1
      %v2049 = vsel %vm2004, %v2047, %v2048
      %v2050 = vrot.slane %v1691, 1
      %v2051 = vrot.slane %v1692, 1
      %v2052 = vsel %vm2004, %v2050, %v2051
      %v2053 = vrot.slane %v1693, 1
      %v2054 = vrot.slane %v1694, 1
      %v2055 = vsel %vm2004, %v2053, %v2054
      %v2056 = vrot.slane %v1695, 1
      %v2057 = vrot.slane %v1696, 1
      %v2058 = vsel %vm2004, %v2056, %v2057
      %2077 = vst [vmem:[#allocation2 + $0x10] sm:$0xff] %v2007
      %2078 = vst [vmem:[#allocation2 + $0x28] sm:$0xff] %v2010
      %2079 = vst [vmem:[#allocation2 + $0x40] sm:$0xff] %v2013
      %2080 = vst [vmem:[#allocation2 + $0x58] sm:$0xff] %v2016
      %2081 = vst [vmem:[#allocation2 + $0x70] sm:$0xff] %v2019
      %2082 = vst [vmem:[#allocation2 + $0x88] sm:$0xff] %v2022
      %2083 = vst [vmem:[#allocation2 + $0xa0] sm:$0xff] %v2025
      %2084 = vst [vmem:[#allocation2 + $0xb8] sm:$0xff] %v2028
      %2085 = vst [vmem:[#allocation2 + $0xd0] sm:$0xff] %v2031
      %2086 = vst [vmem:[#allocation2 + $0xe8] sm:$0xff] %v2034
      %2087 = vst [vmem:[#allocation2 + $0x100] sm:$0xff] %v2037
      %2088 = vst [vmem:[#allocation2 + $0x118] sm:$0xff] %v2040
      %2089 = vst [vmem:[#allocation2 + $0x130] sm:$0xff] %v2043
      %2090 = vst [vmem:[#allocation2 + $0x148] sm:$0xff] %v2046
      %2091 = vst [vmem:[#allocation2 + $0x160] sm:$0xff] %v2049
      %2092 = vst [vmem:[#allocation2 + $0x178] sm:$0xff] %v2052
      %2093 = vst [vmem:[#allocation2 + $0x190] sm:$0xff] %v2055
      %2094 = vst [vmem:[#allocation2 + $0x1a8] sm:$0xff] %v2058
      %v2095 = vld [vmem:[#allocation2] sm:$0xff]
      %v2096 = vld [vmem:[#allocation2 + $0x8] sm:$0xff]
      %v2097 = vld [vmem:[#allocation2 + $0x10] sm:$0xff]
      %v2098 = vld [vmem:[#allocation2 + $0x18] sm:$0xff]
      %v2099 = vld [vmem:[#allocation2 + $0x20] sm:$0xff]
      %v2100 = vld [vmem:[#allocation2 + $0x28] sm:$0xff]
      %v2101 = vld [vmem:[#allocation2 + $0x30] sm:$0xff]
      %v2102 = vld [vmem:[#allocation2 + $0x38] sm:$0xff]
      %v2103 = vld [vmem:[#allocation2 + $0x40] sm:$0xff]
      %v2104 = vld [vmem:[#allocation2 + $0x48] sm:$0xff]
      %v2105 = vld [vmem:[#allocation2 + $0x50] sm:$0xff]
      %v2106 = vld [vmem:[#allocation2 + $0x58] sm:$0xff]
      %v2107 = vld [vmem:[#allocation2 + $0x60] sm:$0xff]
      %v2108 = vld [vmem:[#allocation2 + $0x68] sm:$0xff]
      %v2109 = vld [vmem:[#allocation2 + $0x70] sm:$0xff]
      %v2110 = vld [vmem:[#allocation2 + $0x78] sm:$0xff]
      %v2111 = vld [vmem:[#allocation2 + $0x80] sm:$0xff]
      %v2112 = vld [vmem:[#allocation2 + $0x88] sm:$0xff]
      %v2113 = vld [vmem:[#allocation2 + $0x90] sm:$0xff]
      %v2114 = vld [vmem:[#allocation2 + $0x98] sm:$0xff]
      %v2115 = vld [vmem:[#allocation2 + $0xa0] sm:$0xff]
      %v2116 = vld [vmem:[#allocation2 + $0xa8] sm:$0xff]
      %v2117 = vld [vmem:[#allocation2 + $0xb0] sm:$0xff]
      %v2118 = vld [vmem:[#allocation2 + $0xb8] sm:$0xff]
      %v2119 = vld [vmem:[#allocation2 + $0xc0] sm:$0xff]
      %v2120 = vld [vmem:[#allocation2 + $0xc8] sm:$0xff]
      %v2121 = vld [vmem:[#allocation2 + $0xd0] sm:$0xff]
      %v2122 = vld [vmem:[#allocation2 + $0xd8] sm:$0xff]
      %v2123 = vld [vmem:[#allocation2 + $0xe0] sm:$0xff]
      %v2124 = vld [vmem:[#allocation2 + $0xe8] sm:$0xff]
      %v2125 = vld [vmem:[#allocation2 + $0xf0] sm:$0xff]
      %v2126 = vld [vmem:[#allocation2 + $0xf8] sm:$0xff]
      %v2127 = vld [vmem:[#allocation2 + $0x100] sm:$0xff]
      %v2128 = vld [vmem:[#allocation2 + $0x108] sm:$0xff]
      %v2129 = vld [vmem:[#allocation2 + $0x110] sm:$0xff]
      %v2130 = vld [vmem:[#allocation2 + $0x118] sm:$0xff]
      %v2131 = vld [vmem:[#allocation2 + $0x120] sm:$0xff]
      %v2132 = vld [vmem:[#allocation2 + $0x128] sm:$0xff]
      %v2133 = vld [vmem:[#allocation2 + $0x130] sm:$0xff]
      %v2134 = vld [vmem:[#allocation2 + $0x138] sm:$0xff]
      %v2135 = vld [vmem:[#allocation2 + $0x140] sm:$0xff]
      %v2136 = vld [vmem:[#allocation2 + $0x148] sm:$0xff]
      %v2137 = vld [vmem:[#allocation2 + $0x150] sm:$0xff]
      %v2138 = vld [vmem:[#allocation2 + $0x158] sm:$0xff]
      %v2139 = vld [vmem:[#allocation2 + $0x160] sm:$0xff]
      %v2140 = vld [vmem:[#allocation2 + $0x168] sm:$0xff]
      %v2141 = vld [vmem:[#allocation2 + $0x170] sm:$0xff]
      %v2142 = vld [vmem:[#allocation2 + $0x178] sm:$0xff]
      %v2143 = vld [vmem:[%s3] sm:$0xf]
      %v2144 = vld [vmem:[%s3 + $0x4] sm:$0xf]
      %v2145 = vld [vmem:[%s3 + $0x8] sm:$0xf]
      %v2146 = vld [vmem:[%s3 + $0xc] sm:$0xf]
      %v2147 = vld [vmem:[%s3 + $0x10] sm:$0xf]
      %v2148 = vld [vmem:[%s3 + $0x14] sm:$0xf]
      %v2149 = vld [vmem:[%s3 + $0x18] sm:$0xf]
      %v2150 = vld [vmem:[%s3 + $0x1c] sm:$0xf]
      %v2151 = vld [vmem:[%s3 + $0x20] sm:$0xf]
      %v2152 = vld [vmem:[%s3 + $0x24] sm:$0xf]
      %v2153 = vld [vmem:[%s3 + $0x28] sm:$0xf]
      %v2154 = vld [vmem:[%s3 + $0x2c] sm:$0xf]
      %v2155 = vld [vmem:[%s3 + $0x30] sm:$0xf]
      %v2156 = vld [vmem:[%s3 + $0x34] sm:$0xf]
      %v2157 = vld [vmem:[%s3 + $0x38] sm:$0xf]
      %v2158 = vld [vmem:[%s3 + $0x3c] sm:$0xf]
      %v2159 = vld [vmem:[%s3 + $0x40] sm:$0xf]
      %v2160 = vld [vmem:[%s3 + $0x44] sm:$0xf]
      %v2161 = vld [vmem:[%s3 + $0x48] sm:$0xf]
      %v2162 = vld [vmem:[%s3 + $0x4c] sm:$0xf]
      %v2163 = vld [vmem:[%s3 + $0x50] sm:$0xf]
      %v2164 = vld [vmem:[%s3 + $0x54] sm:$0xf]
      %v2165 = vld [vmem:[%s3 + $0x58] sm:$0xf]
      %v2166 = vld [vmem:[%s3 + $0x5c] sm:$0xf]
      %v2167 = vld [vmem:[%s3 + $0x60] sm:$0xf]
      %v2168 = vld [vmem:[%s3 + $0x64] sm:$0xf]
      %v2169 = vld [vmem:[%s3 + $0x68] sm:$0xf]
      %v2170 = vld [vmem:[%s3 + $0x6c] sm:$0xf]
      %v2171 = vld [vmem:[%s3 + $0x70] sm:$0xf]
      %v2172 = vld [vmem:[%s3 + $0x74] sm:$0xf]
      %v2173 = vld [vmem:[%s3 + $0x78] sm:$0xf]
      %v2174 = vld [vmem:[%s3 + $0x7c] sm:$0xf]
      %v2175 = vld [vmem:[%s3 + $0x80] sm:$0xf]
      %v2176 = vld [vmem:[%s3 + $0x84] sm:$0xf]
      %v2177 = vld [vmem:[%s3 + $0x88] sm:$0xf]
      %v2178 = vld [vmem:[%s3 + $0x8c] sm:$0xf]
      %v2179 = vld [vmem:[%s3 + $0x90] sm:$0xf]
      %v2180 = vld [vmem:[%s3 + $0x94] sm:$0xf]
      %v2181 = vld [vmem:[%s3 + $0x98] sm:$0xf]
      %v2182 = vld [vmem:[%s3 + $0x9c] sm:$0xf]
      %v2183 = vld [vmem:[%s3 + $0xa0] sm:$0xf]
      %v2184 = vld [vmem:[%s3 + $0xa4] sm:$0xf]
      %v2185 = vld [vmem:[%s3 + $0xa8] sm:$0xf]
      %v2186 = vld [vmem:[%s3 + $0xac] sm:$0xf]
      %v2187 = vld [vmem:[%s3 + $0xb0] sm:$0xf]
      %v2188 = vld [vmem:[%s3 + $0xb4] sm:$0xf]
      %v2189 = vld [vmem:[%s3 + $0xb8] sm:$0xf]
      %v2190 = vld [vmem:[%s3 + $0xbc] sm:$0xf]
      %s2191 = scalar_lea.vmem [#allocation2], 24
      %v2192 = vld [vmem:[%s2191] sm:$0xff]
      %v2193 = vld [vmem:[%s2191 + $0x8] sm:$0xff]
      %v2194 = vld [vmem:[%s2191 + $0x10] sm:$0xff]
      %v2195 = vld [vmem:[%s2191 + $0x18] sm:$0xff]
      %v2196 = vld [vmem:[%s2191 + $0x20] sm:$0xff]
      %v2197 = vld [vmem:[%s2191 + $0x28] sm:$0xff]
      %v2198 = vld [vmem:[%s2191 + $0x30] sm:$0xff]
      %v2199 = vld [vmem:[%s2191 + $0x38] sm:$0xff]
      %v2200 = vld [vmem:[%s2191 + $0x40] sm:$0xff]
      %v2201 = vld [vmem:[%s2191 + $0x48] sm:$0xff]
      %v2202 = vld [vmem:[%s2191 + $0x50] sm:$0xff]
      %v2203 = vld [vmem:[%s2191 + $0x58] sm:$0xff]
      %v2204 = vld [vmem:[%s2191 + $0x60] sm:$0xff]
      %v2205 = vld [vmem:[%s2191 + $0x68] sm:$0xff]
      %v2206 = vld [vmem:[%s2191 + $0x70] sm:$0xff]
      %v2207 = vld [vmem:[%s2191 + $0x78] sm:$0xff]
      %v2208 = vld [vmem:[%s2191 + $0x80] sm:$0xff]
      %v2209 = vld [vmem:[%s2191 + $0x88] sm:$0xff]
      %v2210 = vld [vmem:[%s2191 + $0x90] sm:$0xff]
      %v2211 = vld [vmem:[%s2191 + $0x98] sm:$0xff]
      %v2212 = vld [vmem:[%s2191 + $0xa0] sm:$0xff]
      %v2213 = vld [vmem:[%s2191 + $0xa8] sm:$0xff]
      %v2214 = vld [vmem:[%s2191 + $0xb0] sm:$0xff]
      %v2215 = vld [vmem:[%s2191 + $0xb8] sm:$0xff]
      %v2216 = vld [vmem:[%s2191 + $0xc0] sm:$0xff]
      %v2217 = vld [vmem:[%s2191 + $0xc8] sm:$0xff]
      %v2218 = vld [vmem:[%s2191 + $0xd0] sm:$0xff]
      %v2219 = vld [vmem:[%s2191 + $0xd8] sm:$0xff]
      %v2220 = vld [vmem:[%s2191 + $0xe0] sm:$0xff]
      %v2221 = vld [vmem:[%s2191 + $0xe8] sm:$0xff]
      %v2222 = vld [vmem:[%s2191 + $0xf0] sm:$0xff]
      %v2223 = vld [vmem:[%s2191 + $0xf8] sm:$0xff]
      %v2224 = vld [vmem:[%s2191 + $0x100] sm:$0xff]
      %v2225 = vld [vmem:[%s2191 + $0x108] sm:$0xff]
      %v2226 = vld [vmem:[%s2191 + $0x110] sm:$0xff]
      %v2227 = vld [vmem:[%s2191 + $0x118] sm:$0xff]
      %v2228 = vld [vmem:[%s2191 + $0x120] sm:$0xff]
      %v2229 = vld [vmem:[%s2191 + $0x128] sm:$0xff]
      %v2230 = vld [vmem:[%s2191 + $0x130] sm:$0xff]
      %v2231 = vld [vmem:[%s2191 + $0x138] sm:$0xff]
      %v2232 = vld [vmem:[%s2191 + $0x140] sm:$0xff]
      %v2233 = vld [vmem:[%s2191 + $0x148] sm:$0xff]
      %v2234 = vld [vmem:[%s2191 + $0x150] sm:$0xff]
      %v2235 = vld [vmem:[%s2191 + $0x158] sm:$0xff]
      %v2236 = vld [vmem:[%s2191 + $0x160] sm:$0xff]
      %v2237 = vld [vmem:[%s2191 + $0x168] sm:$0xff]
      %v2238 = vld [vmem:[%s2191 + $0x170] sm:$0xff]
      %v2239 = vld [vmem:[%s2191 + $0x178] sm:$0xff]
      %s2240 = scalar_lea.vmem %s3, 192
      %v2241 = vld [vmem:[%s2240] sm:$0xf]
      %v2242 = vld [vmem:[%s2240 + $0x4] sm:$0xf]
      %v2243 = vld [vmem:[%s2240 + $0x8] sm:$0xf]
      %v2244 = vld [vmem:[%s2240 + $0xc] sm:$0xf]
      %v2245 = vld [vmem:[%s2240 + $0x10] sm:$0xf]
      %v2246 = vld [vmem:[%s2240 + $0x14] sm:$0xf]
      %v2247 = vld [vmem:[%s2240 + $0x18] sm:$0xf]
      %v2248 = vld [vmem:[%s2240 + $0x1c] sm:$0xf]
      %v2249 = vld [vmem:[%s2240 + $0x20] sm:$0xf]
      %v2250 = vld [vmem:[%s2240 + $0x24] sm:$0xf]
      %v2251 = vld [vmem:[%s2240 + $0x28] sm:$0xf]
      %v2252 = vld [vmem:[%s2240 + $0x2c] sm:$0xf]
      %v2253 = vld [vmem:[%s2240 + $0x30] sm:$0xf]
      %v2254 = vld [vmem:[%s2240 + $0x34] sm:$0xf]
      %v2255 = vld [vmem:[%s2240 + $0x38] sm:$0xf]
      %v2256 = vld [vmem:[%s2240 + $0x3c] sm:$0xf]
      %v2257 = vld [vmem:[%s2240 + $0x40] sm:$0xf]
      %v2258 = vld [vmem:[%s2240 + $0x44] sm:$0xf]
      %v2259 = vld [vmem:[%s2240 + $0x48] sm:$0xf]
      %v2260 = vld [vmem:[%s2240 + $0x4c] sm:$0xf]
      %v2261 = vld [vmem:[%s2240 + $0x50] sm:$0xf]
      %v2262 = vld [vmem:[%s2240 + $0x54] sm:$0xf]
      %v2263 = vld [vmem:[%s2240 + $0x58] sm:$0xf]
      %v2264 = vld [vmem:[%s2240 + $0x5c] sm:$0xf]
      %v2265 = vld [vmem:[%s2240 + $0x60] sm:$0xf]
      %v2266 = vld [vmem:[%s2240 + $0x64] sm:$0xf]
      %v2267 = vld [vmem:[%s2240 + $0x68] sm:$0xf]
      %v2268 = vld [vmem:[%s2240 + $0x6c] sm:$0xf]
      %v2269 = vld [vmem:[%s2240 + $0x70] sm:$0xf]
      %v2270 = vld [vmem:[%s2240 + $0x74] sm:$0xf]
      %v2271 = vld [vmem:[%s2240 + $0x78] sm:$0xf]
      %v2272 = vld [vmem:[%s2240 + $0x7c] sm:$0xf]
      %v2273 = vld [vmem:[%s2240 + $0x80] sm:$0xf]
      %v2274 = vld [vmem:[%s2240 + $0x84] sm:$0xf]
      %v2275 = vld [vmem:[%s2240 + $0x88] sm:$0xf]
      %v2276 = vld [vmem:[%s2240 + $0x8c] sm:$0xf]
      %v2277 = vld [vmem:[%s2240 + $0x90] sm:$0xf]
      %v2278 = vld [vmem:[%s2240 + $0x94] sm:$0xf]
      %v2279 = vld [vmem:[%s2240 + $0x98] sm:$0xf]
      %v2280 = vld [vmem:[%s2240 + $0x9c] sm:$0xf]
      %v2281 = vld [vmem:[%s2240 + $0xa0] sm:$0xf]
      %v2282 = vld [vmem:[%s2240 + $0xa4] sm:$0xf]
      %v2283 = vld [vmem:[%s2240 + $0xa8] sm:$0xf]
      %v2284 = vld [vmem:[%s2240 + $0xac] sm:$0xf]
      %v2285 = vld [vmem:[%s2240 + $0xb0] sm:$0xf]
      %v2286 = vld [vmem:[%s2240 + $0xb4] sm:$0xf]
      %v2287 = vld [vmem:[%s2240 + $0xb8] sm:$0xf]
      %v2288 = vld [vmem:[%s2240 + $0xbc] sm:$0xf]
      %v2337 = vunpack.c.l.b16 %v2241
      %v2338 = vunpack.c.l.b16 %v2242
      %v2339 = vunpack.c.l.b16 %v2243
      %v2340 = vunpack.c.l.b16 %v2244
      %v2341 = vunpack.c.l.b16 %v2245
      %v2342 = vunpack.c.l.b16 %v2246
      %v2343 = vunpack.c.l.b16 %v2247
      %v2344 = vunpack.c.l.b16 %v2248
      %v2345 = vunpack.c.l.b16 %v2249
      %v2346 = vunpack.c.l.b16 %v2250
      %v2347 = vunpack.c.l.b16 %v2251
      %v2348 = vunpack.c.l.b16 %v2252
      %v2349 = vunpack.c.l.b16 %v2253
      %v2350 = vunpack.c.l.b16 %v2254
      %v2351 = vunpack.c.l.b16 %v2255
      %v2352 = vunpack.c.l.b16 %v2256
      %v2353 = vunpack.c.l.b16 %v2257
      %v2354 = vunpack.c.l.b16 %v2258
      %v2355 = vunpack.c.l.b16 %v2259
      %v2356 = vunpack.c.l.b16 %v2260
      %v2357 = vunpack.c.l.b16 %v2261
      %v2358 = vunpack.c.l.b16 %v2262
      %v2359 = vunpack.c.l.b16 %v2263
      %v2360 = vunpack.c.l.b16 %v2264
      %v2361 = vunpack.c.l.b16 %v2265
      %v2362 = vunpack.c.l.b16 %v2266
      %v2363 = vunpack.c.l.b16 %v2267
      %v2364 = vunpack.c.l.b16 %v2268
      %v2365 = vunpack.c.l.b16 %v2269
      %v2366 = vunpack.c.l.b16 %v2270
      %v2367 = vunpack.c.l.b16 %v2271
      %v2368 = vunpack.c.l.b16 %v2272
      %v2369 = vunpack.c.l.b16 %v2273
      %v2370 = vunpack.c.l.b16 %v2274
      %v2371 = vunpack.c.l.b16 %v2275
      %v2372 = vunpack.c.l.b16 %v2276
      %v2373 = vunpack.c.l.b16 %v2277
      %v2374 = vunpack.c.l.b16 %v2278
      %v2375 = vunpack.c.l.b16 %v2279
      %v2376 = vunpack.c.l.b16 %v2280
      %v2377 = vunpack.c.l.b16 %v2281
      %v2378 = vunpack.c.l.b16 %v2282
      %v2379 = vunpack.c.l.b16 %v2283
      %v2380 = vunpack.c.l.b16 %v2284
      %v2381 = vunpack.c.l.b16 %v2285
      %v2382 = vunpack.c.l.b16 %v2286
      %v2383 = vunpack.c.l.b16 %v2287
      %v2384 = vunpack.c.l.b16 %v2288
      %v2385 = vpack.c.b16 %v2338, %v2337
      %v2386 = vpack.c.b16 %v2340, %v2339
      %v2387 = vpack.c.b16 %v2342, %v2341
      %v2388 = vpack.c.b16 %v2344, %v2343
      %v2389 = vpack.c.b16 %v2346, %v2345
      %v2390 = vpack.c.b16 %v2348, %v2347
      %v2391 = vpack.c.b16 %v2350, %v2349
      %v2392 = vpack.c.b16 %v2352, %v2351
      %v2393 = vpack.c.b16 %v2354, %v2353
      %v2394 = vpack.c.b16 %v2356, %v2355
      %v2395 = vpack.c.b16 %v2358, %v2357
      %v2396 = vpack.c.b16 %v2360, %v2359
      %v2397 = vpack.c.b16 %v2362, %v2361
      %v2398 = vpack.c.b16 %v2364, %v2363
      %v2399 = vpack.c.b16 %v2366, %v2365
      %v2400 = vpack.c.b16 %v2368, %v2367
      %v2401 = vpack.c.b16 %v2370, %v2369
      %v2402 = vpack.c.b16 %v2372, %v2371
      %v2403 = vpack.c.b16 %v2374, %v2373
      %v2404 = vpack.c.b16 %v2376, %v2375
      %v2405 = vpack.c.b16 %v2378, %v2377
      %v2406 = vpack.c.b16 %v2380, %v2379
      %v2407 = vpack.c.b16 %v2382, %v2381
      %v2408 = vpack.c.b16 %v2384, %v2383
      %2433 = vmatprep.subr.bf16.mxu0 0
      %2434 = vmatpush1.bf16.msra.mxu0 %v2385
      %2435 = vmatprep.subr.bf16.mxu0 0
      %2436 = vmatpush1.bf16.msra.mxu0 %v2386
      %2437 = vmatprep.subr.bf16.mxu0 0
      %2438 = vmatpush1.bf16.msra.mxu0 %v2387
      %2439 = vmatprep.subr.bf16.mxu0 0
      %2440 = vmatpush1.bf16.msra.mxu0 %v2388
      %2441 = vmatprep.subr.bf16.mxu0 0
      %2442 = vmatpush1.bf16.msra.mxu0 %v2389
      %2443 = vmatprep.subr.bf16.mxu0 0
      %2444 = vmatpush1.bf16.msra.mxu0 %v2390
      %2445 = vmatprep.subr.bf16.mxu0 0
      %2446 = vmatpush1.bf16.msra.mxu0 %v2391
      %2447 = vmatprep.subr.bf16.mxu0 0
      %2448 = vmatpush1.bf16.msra.mxu0 %v2392
      %2449 = vmatprep.subr.bf16.mxu0 0
      %2450 = vmatpush1.bf16.msra.mxu0 %v2393
      %2451 = vmatprep.subr.bf16.mxu0 0
      %2452 = vmatpush1.bf16.msra.mxu0 %v2394
      %2453 = vmatprep.subr.bf16.mxu0 0
      %2454 = vmatpush1.bf16.msra.mxu0 %v2395
      %2455 = vmatprep.subr.bf16.mxu0 0
      %2456 = vmatpush1.bf16.msra.mxu0 %v2396
      %2457 = vmatprep.subr.bf16.mxu0 0
      %2458 = vmatpush1.bf16.msra.mxu0 %v2397
      %2459 = vmatprep.subr.bf16.mxu0 0
      %2460 = vmatpush1.bf16.msra.mxu0 %v2398
      %2461 = vmatprep.subr.bf16.mxu0 0
      %2462 = vmatpush1.bf16.msra.mxu0 %v2399
      %2463 = vmatprep.subr.bf16.mxu0 0
      %2464 = vmatpush1.bf16.msra.mxu0 %v2400
      %2465 = vmatprep.mubr.bf16.mxu0 %v2193
      %2466 = vmatmul.mubr.bf16.gmra.mrb[0].mxu0 %v2192
      %v2467 = vpop.f32.mrb[0].mxu0
      %v2468 = vadd.f32 0.0, %v2467
      %v2469 = vpop.f32.mrb[0].mxu0
      %v2470 = vpop.f32.mrb[0].mxu0
      %v2471 = vadd.f32 0.0, %v2470
      %v2472 = vpop.f32.mrb[0].mxu0
      %2473 = vmatprep.mubr.bf16.mxu0 %v2196
      %2474 = vmatmul.mubr.bf16.gmra.mrb[0].mxu0 %v2195
      %v2475 = vpop.f32.mrb[0].mxu0
      %v2476 = vadd.f32 0.0, %v2475
      %v2477 = vpop.f32.mrb[0].mxu0
      %v2478 = vpop.f32.mrb[0].mxu0
      %v2479 = vadd.f32 0.0, %v2478
      %v2480 = vpop.f32.mrb[0].mxu0
      %2481 = vmatprep.mubr.bf16.mxu0 %v2199
      %2482 = vmatmul.mubr.bf16.gmra.mrb[0].mxu0 %v2198
      %v2483 = vpop.f32.mrb[0].mxu0
      %v2484 = vadd.f32 0.0, %v2483
      %v2485 = vpop.f32.mrb[0].mxu0
      %v2486 = vpop.f32.mrb[0].mxu0
      %v2487 = vadd.f32 0.0, %v2486
      %v2488 = vpop.f32.mrb[0].mxu0
      %2489 = vmatprep.mubr.bf16.mxu0 %v2202
      %2490 = vmatmul.mubr.bf16.gmra.mrb[0].mxu0 %v2201
      %v2491 = vpop.f32.mrb[0].mxu0
      %v2492 = vadd.f32 0.0, %v2491
      %v2493 = vpop.f32.mrb[0].mxu0
      %v2494 = vpop.f32.mrb[0].mxu0
      %v2495 = vadd.f32 0.0, %v2494
      %v2496 = vpop.f32.mrb[0].mxu0
      %2497 = vmatprep.mubr.bf16.mxu0 %v2205
      %2498 = vmatmul.mubr.bf16.gmra.mrb[0].mxu0 %v2204
      %v2499 = vpop.f32.mrb[0].mxu0
      %v2500 = vadd.f32 0.0, %v2499
      %v2501 = vpop.f32.mrb[0].mxu0
      %v2502 = vpop.f32.mrb[0].mxu0
      %v2503 = vadd.f32 0.0, %v2502
      %v2504 = vpop.f32.mrb[0].mxu0
      %2505 = vmatprep.mubr.bf16.mxu0 %v2208
      %2506 = vmatmul.mubr.bf16.gmra.mrb[0].mxu0 %v2207
      %v2507 = vpop.f32.mrb[0].mxu0
      %v2508 = vadd.f32 0.0, %v2507
      %v2509 = vpop.f32.mrb[0].mxu0
      %v2510 = vpop.f32.mrb[0].mxu0
      %v2511 = vadd.f32 0.0, %v2510
      %v2512 = vpop.f32.mrb[0].mxu0
      %2513 = vmatprep.mubr.bf16.mxu0 %v2211
      %2514 = vmatmul.mubr.bf16.gmra.mrb[0].mxu0 %v2210
      %v2515 = vpop.f32.mrb[0].mxu0
      %v2516 = vadd.f32 0.0, %v2515
      %v2517 = vpop.f32.mrb[0].mxu0
      %v2518 = vpop.f32.mrb[0].mxu0
      %v2519 = vadd.f32 0.0, %v2518
      %v2520 = vpop.f32.mrb[0].mxu0
      %2521 = vmatprep.mubr.bf16.mxu0 %v2214
      %2522 = vmatmul.mubr.bf16.gmra.mrb[0].mxu0 %v2213
      %v2523 = vpop.f32.mrb[0].mxu0
      %v2524 = vadd.f32 0.0, %v2523
      %v2525 = vpop.f32.mrb[0].mxu0
      %v2526 = vpop.f32.mrb[0].mxu0
      %v2527 = vadd.f32 0.0, %v2526
      %v2528 = vpop.f32.mrb[0].mxu0
      %2529 = vmatprep.mubr.bf16.mxu0 %v2217
      %2530 = vmatmul.mubr.bf16.gmra.mrb[0].mxu0 %v2216
      %v2531 = vpop.f32.mrb[0].mxu0
      %v2532 = vadd.f32 0.0, %v2531
      %v2533 = vpop.f32.mrb[0].mxu0
      %v2534 = vpop.f32.mrb[0].mxu0
      %v2535 = vadd.f32 0.0, %v2534
      %v2536 = vpop.f32.mrb[0].mxu0
      %2537 = vmatprep.mubr.bf16.mxu0 %v2220
      %2538 = vmatmul.mubr.bf16.gmra.mrb[0].mxu0 %v2219
      %v2539 = vpop.f32.mrb[0].mxu0
      %v2540 = vadd.f32 0.0, %v2539
      %v2541 = vpop.f32.mrb[0].mxu0
      %v2542 = vpop.f32.mrb[0].mxu0
      %v2543 = vadd.f32 0.0, %v2542
      %v2544 = vpop.f32.mrb[0].mxu0
      %2545 = vmatprep.mubr.bf16.mxu0 %v2223
      %2546 = vmatmul.mubr.bf16.gmra.mrb[0].mxu0 %v2222
      %v2547 = vpop.f32.mrb[0].mxu0
      %v2548 = vadd.f32 0.0, %v2547
      %v2549 = vpop.f32.mrb[0].mxu0
      %v2550 = vpop.f32.mrb[0].mxu0
      %v2551 = vadd.f32 0.0, %v2550
      %v2552 = vpop.f32.mrb[0].mxu0
      %2553 = vmatprep.mubr.bf16.mxu0 %v2226
      %2554 = vmatmul.mubr.bf16.gmra.mrb[0].mxu0 %v2225
      %v2555 = vpop.f32.mrb[0].mxu0
      %v2556 = vadd.f32 0.0, %v2555
      %v2557 = vpop.f32.mrb[0].mxu0
      %v2558 = vpop.f32.mrb[0].mxu0
      %v2559 = vadd.f32 0.0, %v2558
      %v2560 = vpop.f32.mrb[0].mxu0
      %2561 = vmatprep.mubr.bf16.mxu0 %v2229
      %2562 = vmatmul.mubr.bf16.gmra.mrb[0].mxu0 %v2228
      %v2563 = vpop.f32.mrb[0].mxu0
      %v2564 = vadd.f32 0.0, %v2563
      %v2565 = vpop.f32.mrb[0].mxu0
      %v2566 = vpop.f32.mrb[0].mxu0
      %v2567 = vadd.f32 0.0, %v2566
      %v2568 = vpop.f32.mrb[0].mxu0
      %2569 = vmatprep.mubr.bf16.mxu0 %v2232
      %2570 = vmatmul.mubr.bf16.gmra.mrb[0].mxu0 %v2231
      %v2571 = vpop.f32.mrb[0].mxu0
      %v2572 = vadd.f32 0.0, %v2571
      %v2573 = vpop.f32.mrb[0].mxu0
      %v2574 = vpop.f32.mrb[0].mxu0
      %v2575 = vadd.f32 0.0, %v2574
      %v2576 = vpop.f32.mrb[0].mxu0
      %2577 = vmatprep.mubr.bf16.mxu0 %v2235
      %2578 = vmatmul.mubr.bf16.gmra.mrb[0].mxu0 %v2234
      %v2579 = vpop.f32.mrb[0].mxu0
      %v2580 = vadd.f32 0.0, %v2579
      %v2581 = vpop.f32.mrb[0].mxu0
      %v2582 = vpop.f32.mrb[0].mxu0
      %v2583 = vadd.f32 0.0, %v2582
      %v2584 = vpop.f32.mrb[0].mxu0
      %2585 = vmatprep.mubr.bf16.mxu0 %v2238
      %2586 = vmatmul.mubr.bf16.gmra.mrb[0].mxu0 %v2237
      %v2587 = vpop.f32.mrb[0].mxu0
      %v2588 = vadd.f32 0.0, %v2587
      %v2589 = vpop.f32.mrb[0].mxu0
      %v2590 = vpop.f32.mrb[0].mxu0
      %v2591 = vadd.f32 0.0, %v2590
      %v2592 = vpop.f32.mrb[0].mxu0
      %2593 = vdwg.mxu0
      %2594 = vmatprep.subr.bf16.mxu0 0
      %2595 = vmatpush1.bf16.msra.mxu0 %v2401
      %2596 = vmatprep.subr.bf16.mxu0 0
      %2597 = vmatpush1.bf16.msra.mxu0 %v2402
      %2598 = vmatprep.subr.bf16.mxu0 0
      %2599 = vmatpush1.bf16.msra.mxu0 %v2403
      %2600 = vmatprep.subr.bf16.mxu0 0
      %2601 = vmatpush1.bf16.msra.mxu0 %v2404
      %2602 = vmatprep.subr.bf16.mxu0 0
      %2603 = vmatpush1.bf16.msra.mxu0 %v2405
      %2604 = vmatprep.subr.bf16.mxu0 0
      %2605 = vmatpush1.bf16.msra.mxu0 %v2406
      %2606 = vmatprep.subr.bf16.mxu0 0
      %2607 = vmatpush1.bf16.msra.mxu0 %v2407
      %2608 = vmatprep.subr.bf16.mxu0 0
      %2609 = vmatpush1.bf16.msra.mxu0 %v2408
      %2610 = vmatprep.subr.bf16.mxu0 0
      %2611 = vmatpush1.bf16.msra.mxu0 0
      %2612 = vmatprep.subr.bf16.mxu0 0
      %2613 = vmatpush1.bf16.msra.mxu0 0
      %2614 = vmatprep.subr.bf16.mxu0 0
      %2615 = vmatpush1.bf16.msra.mxu0 0
      %2616 = vmatprep.subr.bf16.mxu0 0
      %2617 = vmatpush1.bf16.msra.mxu0 0
      %2618 = vmatprep.subr.bf16.mxu0 0
      %2619 = vmatpush1.bf16.msra.mxu0 0
      %2620 = vmatprep.subr.bf16.mxu0 0
      %2621 = vmatpush1.bf16.msra.mxu0 0
      %2622 = vmatprep.subr.bf16.mxu0 0
      %2623 = vmatpush1.bf16.msra.mxu0 0
      %2624 = vmatprep.subr.bf16.mxu0 0
      %2625 = vmatpush1.bf16.msra.mxu0 0
      %2626 = vmatprep.mubr.bf16.mxu0 0
      %2627 = vmatmul.mubr.bf16.gmra.mrb[0].mxu0 %v2194
      %v2628 = vpop.f32.mrb[0].mxu0
      %v2629 = vadd.f32 %v2468, %v2628
      %v2630 = vpop.f32.mrb[0].mxu0
      %v2631 = vpop.f32.mrb[0].mxu0
      %v2632 = vadd.f32 %v2471, %v2631
      %v2633 = vpop.f32.mrb[0].mxu0
      %2634 = vmatprep.mubr.bf16.mxu0 0
      %2635 = vmatmul.mubr.bf16.gmra.mrb[0].mxu0 %v2197
      %v2636 = vpop.f32.mrb[0].mxu0
      %v2637 = vadd.f32 %v2476, %v2636
      %v2638 = vpop.f32.mrb[0].mxu0
      %v2639 = vpop.f32.mrb[0].mxu0
      %v2640 = vadd.f32 %v2479, %v2639
      %v2641 = vpop.f32.mrb[0].mxu0
      %2642 = vmatprep.mubr.bf16.mxu0 0
      %2643 = vmatmul.mubr.bf16.gmra.mrb[0].mxu0 %v2200
      %v2644 = vpop.f32.mrb[0].mxu0
      %v2645 = vadd.f32 %v2484, %v2644
      %v2646 = vpop.f32.mrb[0].mxu0
      %v2647 = vpop.f32.mrb[0].mxu0
      %v2648 = vadd.f32 %v2487, %v2647
      %v2649 = vpop.f32.mrb[0].mxu0
      %2650 = vmatprep.mubr.bf16.mxu0 0
      %2651 = vmatmul.mubr.bf16.gmra.mrb[0].mxu0 %v2203
      %v2652 = vpop.f32.mrb[0].mxu0
      %v2653 = vadd.f32 %v2492, %v2652
      %v2654 = vpop.f32.mrb[0].mxu0
      %v2655 = vpop.f32.mrb[0].mxu0
      %v2656 = vadd.f32 %v2495, %v2655
      %v2657 = vpop.f32.mrb[0].mxu0
      %2658 = vmatprep.mubr.bf16.mxu0 0
      %2659 = vmatmul.mubr.bf16.gmra.mrb[0].mxu0 %v2206
      %v2660 = vpop.f32.mrb[0].mxu0
      %v2661 = vadd.f32 %v2500, %v2660
      %v2662 = vpop.f32.mrb[0].mxu0
      %v2663 = vpop.f32.mrb[0].mxu0
      %v2664 = vadd.f32 %v2503, %v2663
      %v2665 = vpop.f32.mrb[0].mxu0
      %2666 = vmatprep.mubr.bf16.mxu0 0
      %2667 = vmatmul.mubr.bf16.gmra.mrb[0].mxu0 %v2209
      %v2668 = vpop.f32.mrb[0].mxu0
      %v2669 = vadd.f32 %v2508, %v2668
      %v2670 = vpop.f32.mrb[0].mxu0
      %v2671 = vpop.f32.mrb[0].mxu0
      %v2672 = vadd.f32 %v2511, %v2671
      %v2673 = vpop.f32.mrb[0].mxu0
      %2674 = vmatprep.mubr.bf16.mxu0 0
      %2675 = vmatmul.mubr.bf16.gmra.mrb[0].mxu0 %v2212
      %v2676 = vpop.f32.mrb[0].mxu0
      %v2677 = vadd.f32 %v2516, %v2676
      %v2678 = vpop.f32.mrb[0].mxu0
      %v2679 = vpop.f32.mrb[0].mxu0
      %v2680 = vadd.f32 %v2519, %v2679
      %v2681 = vpop.f32.mrb[0].mxu0
      %2682 = vmatprep.mubr.bf16.mxu0 0
      %2683 = vmatmul.mubr.bf16.gmra.mrb[0].mxu0 %v2215
      %v2684 = vpop.f32.mrb[0].mxu0
      %v2685 = vadd.f32 %v2524, %v2684
      %v2686 = vpop.f32.mrb[0].mxu0
      %v2687 = vpop.f32.mrb[0].mxu0
      %v2688 = vadd.f32 %v2527, %v2687
      %v2689 = vpop.f32.mrb[0].mxu0
      %2690 = vmatprep.mubr.bf16.mxu0 0
      %2691 = vmatmul.mubr.bf16.gmra.mrb[0].mxu0 %v2218
      %v2692 = vpop.f32.mrb[0].mxu0
      %v2693 = vadd.f32 %v2532, %v2692
      %v2694 = vpop.f32.mrb[0].mxu0
      %v2695 = vpop.f32.mrb[0].mxu0
      %v2696 = vadd.f32 %v2535, %v2695
      %v2697 = vpop.f32.mrb[0].mxu0
      %2698 = vmatprep.mubr.bf16.mxu0 0
      %2699 = vmatmul.mubr.bf16.gmra.mrb[0].mxu0 %v2221
      %v2700 = vpop.f32.mrb[0].mxu0
      %v2701 = vadd.f32 %v2540, %v2700
      %v2702 = vpop.f32.mrb[0].mxu0
      %v2703 = vpop.f32.mrb[0].mxu0
      %v2704 = vadd.f32 %v2543, %v2703
      %v2705 = vpop.f32.mrb[0].mxu0
      %2706 = vmatprep.mubr.bf16.mxu0 0
      %2707 = vmatmul.mubr.bf16.gmra.mrb[0].mxu0 %v2224
      %v2708 = vpop.f32.mrb[0].mxu0
      %v2709 = vadd.f32 %v2548, %v2708
      %v2710 = vpop.f32.mrb[0].mxu0
      %v2711 = vpop.f32.mrb[0].mxu0
      %v2712 = vadd.f32 %v2551, %v2711
      %v2713 = vpop.f32.mrb[0].mxu0
      %2714 = vmatprep.mubr.bf16.mxu0 0
      %2715 = vmatmul.mubr.bf16.gmra.mrb[0].mxu0 %v2227
      %v2716 = vpop.f32.mrb[0].mxu0
      %v2717 = vadd.f32 %v2556, %v2716
      %v2718 = vpop.f32.mrb[0].mxu0
      %v2719 = vpop.f32.mrb[0].mxu0
      %v2720 = vadd.f32 %v2559, %v2719
      %v2721 = vpop.f32.mrb[0].mxu0
      %2722 = vmatprep.mubr.bf16.mxu0 0
      %2723 = vmatmul.mubr.bf16.gmra.mrb[0].mxu0 %v2230
      %v2724 = vpop.f32.mrb[0].mxu0
      %v2725 = vadd.f32 %v2564, %v2724
      %v2726 = vpop.f32.mrb[0].mxu0
      %v2727 = vpop.f32.mrb[0].mxu0
      %v2728 = vadd.f32 %v2567, %v2727
      %v2729 = vpop.f32.mrb[0].mxu0
      %2730 = vmatprep.mubr.bf16.mxu0 0
      %2731 = vmatmul.mubr.bf16.gmra.mrb[0].mxu0 %v2233
      %v2732 = vpop.f32.mrb[0].mxu0
      %v2733 = vadd.f32 %v2572, %v2732
      %v2734 = vpop.f32.mrb[0].mxu0
      %v2735 = vpop.f32.mrb[0].mxu0
      %v2736 = vadd.f32 %v2575, %v2735
      %v2737 = vpop.f32.mrb[0].mxu0
      %2738 = vmatprep.mubr.bf16.mxu0 0
      %2739 = vmatmul.mubr.bf16.gmra.mrb[0].mxu0 %v2236
      %v2740 = vpop.f32.mrb[0].mxu0
      %v2741 = vadd.f32 %v2580, %v2740
      %v2742 = vpop.f32.mrb[0].mxu0
      %v2743 = vpop.f32.mrb[0].mxu0
      %v2744 = vadd.f32 %v2583, %v2743
      %v2745 = vpop.f32.mrb[0].mxu0
      %2746 = vmatprep.mubr.bf16.mxu0 0
      %2747 = vmatmul.mubr.bf16.gmra.mrb[0].mxu0 %v2239
      %v2748 = vpop.f32.mrb[0].mxu0
      %v2749 = vadd.f32 %v2588, %v2748
      %v2750 = vpop.f32.mrb[0].mxu0
      %v2751 = vpop.f32.mrb[0].mxu0
      %v2752 = vadd.f32 %v2591, %v2751
      %v2753 = vpop.f32.mrb[0].mxu0
      %2754 = vdwg.mxu0
      %v2803 = vunpack.c.l.b16 %v2143
      %v2804 = vunpack.c.l.b16 %v2144
      %v2805 = vunpack.c.l.b16 %v2145
      %v2806 = vunpack.c.l.b16 %v2146
      %v2807 = vunpack.c.l.b16 %v2147
      %v2808 = vunpack.c.l.b16 %v2148
      %v2809 = vunpack.c.l.b16 %v2149
      %v2810 = vunpack.c.l.b16 %v2150
      %v2811 = vunpack.c.l.b16 %v2151
      %v2812 = vunpack.c.l.b16 %v2152
      %v2813 = vunpack.c.l.b16 %v2153
      %v2814 = vunpack.c.l.b16 %v2154
      %v2815 = vunpack.c.l.b16 %v2155
      %v2816 = vunpack.c.l.b16 %v2156
      %v2817 = vunpack.c.l.b16 %v2157
      %v2818 = vunpack.c.l.b16 %v2158
      %v2819 = vunpack.c.l.b16 %v2159
      %v2820 = vunpack.c.l.b16 %v2160
      %v2821 = vunpack.c.l.b16 %v2161
      %v2822 = vunpack.c.l.b16 %v2162
      %v2823 = vunpack.c.l.b16 %v2163
      %v2824 = vunpack.c.l.b16 %v2164
      %v2825 = vunpack.c.l.b16 %v2165
      %v2826 = vunpack.c.l.b16 %v2166
      %v2827 = vunpack.c.l.b16 %v2167
      %v2828 = vunpack.c.l.b16 %v2168
      %v2829 = vunpack.c.l.b16 %v2169
      %v2830 = vunpack.c.l.b16 %v2170
      %v2831 = vunpack.c.l.b16 %v2171
      %v2832 = vunpack.c.l.b16 %v2172
      %v2833 = vunpack.c.l.b16 %v2173
      %v2834 = vunpack.c.l.b16 %v2174
      %v2835 = vunpack.c.l.b16 %v2175
      %v2836 = vunpack.c.l.b16 %v2176
      %v2837 = vunpack.c.l.b16 %v2177
      %v2838 = vunpack.c.l.b16 %v2178
      %v2839 = vunpack.c.l.b16 %v2179
      %v2840 = vunpack.c.l.b16 %v2180
      %v2841 = vunpack.c.l.b16 %v2181
      %v2842 = vunpack.c.l.b16 %v2182
      %v2843 = vunpack.c.l.b16 %v2183
      %v2844 = vunpack.c.l.b16 %v2184
      %v2845 = vunpack.c.l.b16 %v2185
      %v2846 = vunpack.c.l.b16 %v2186
      %v2847 = vunpack.c.l.b16 %v2187
      %v2848 = vunpack.c.l.b16 %v2188
      %v2849 = vunpack.c.l.b16 %v2189
      %v2850 = vunpack.c.l.b16 %v2190
      %v2851 = vpack.c.b16 %v2804, %v2803
      %v2852 = vpack.c.b16 %v2806, %v2805
      %v2853 = vpack.c.b16 %v2808, %v2807
      %v2854 = vpack.c.b16 %v2810, %v2809
      %v2855 = vpack.c.b16 %v2812, %v2811
      %v2856 = vpack.c.b16 %v2814, %v2813
      %v2857 = vpack.c.b16 %v2816, %v2815
      %v2858 = vpack.c.b16 %v2818, %v2817
      %v2859 = vpack.c.b16 %v2820, %v2819
      %v2860 = vpack.c.b16 %v2822, %v2821
      %v2861 = vpack.c.b16 %v2824, %v2823
      %v2862 = vpack.c.b16 %v2826, %v2825
      %v2863 = vpack.c.b16 %v2828, %v2827
      %v2864 = vpack.c.b16 %v2830, %v2829
      %v2865 = vpack.c.b16 %v2832, %v2831
      %v2866 = vpack.c.b16 %v2834, %v2833
      %v2867 = vpack.c.b16 %v2836, %v2835
      %v2868 = vpack.c.b16 %v2838, %v2837
      %v2869 = vpack.c.b16 %v2840, %v2839
      %v2870 = vpack.c.b16 %v2842, %v2841
      %v2871 = vpack.c.b16 %v2844, %v2843
      %v2872 = vpack.c.b16 %v2846, %v2845
      %v2873 = vpack.c.b16 %v2848, %v2847
      %v2874 = vpack.c.b16 %v2850, %v2849
      %2899 = vmatprep.subr.bf16.mxu0 0
      %2900 = vmatpush1.bf16.msra.mxu0 %v2851
      %2901 = vmatprep.subr.bf16.mxu0 0
      %2902 = vmatpush1.bf16.msra.mxu0 %v2852
      %2903 = vmatprep.subr.bf16.mxu0 0
      %2904 = vmatpush1.bf16.msra.mxu0 %v2853
      %2905 = vmatprep.subr.bf16.mxu0 0
      %2906 = vmatpush1.bf16.msra.mxu0 %v2854
      %2907 = vmatprep.subr.bf16.mxu0 0
      %2908 = vmatpush1.bf16.msra.mxu0 %v2855
      %2909 = vmatprep.subr.bf16.mxu0 0
      %2910 = vmatpush1.bf16.msra.mxu0 %v2856
      %2911 = vmatprep.subr.bf16.mxu0 0
      %2912 = vmatpush1.bf16.msra.mxu0 %v2857
      %2913 = vmatprep.subr.bf16.mxu0 0
      %2914 = vmatpush1.bf16.msra.mxu0 %v2858
      %2915 = vmatprep.subr.bf16.mxu0 0
      %2916 = vmatpush1.bf16.msra.mxu0 %v2859
      %2917 = vmatprep.subr.bf16.mxu0 0
      %2918 = vmatpush1.bf16.msra.mxu0 %v2860
      %2919 = vmatprep.subr.bf16.mxu0 0
      %2920 = vmatpush1.bf16.msra.mxu0 %v2861
      %2921 = vmatprep.subr.bf16.mxu0 0
      %2922 = vmatpush1.bf16.msra.mxu0 %v2862
      %2923 = vmatprep.subr.bf16.mxu0 0
      %2924 = vmatpush1.bf16.msra.mxu0 %v2863
      %2925 = vmatprep.subr.bf16.mxu0 0
      %2926 = vmatpush1.bf16.msra.mxu0 %v2864
      %2927 = vmatprep.subr.bf16.mxu0 0
      %2928 = vmatpush1.bf16.msra.mxu0 %v2865
      %2929 = vmatprep.subr.bf16.mxu0 0
      %2930 = vmatpush1.bf16.msra.mxu0 %v2866
      %2931 = vmatprep.mubr.bf16.mxu0 %v2096
      %2932 = vmatmul.mubr.bf16.gmra.mrb[0].mxu0 %v2095
      %v2933 = vpop.f32.mrb[0].mxu0
      %v2934 = vadd.f32 %v2629, %v2933
      %v2935 = vpop.f32.mrb[0].mxu0
      %v2936 = vpop.f32.mrb[0].mxu0
      %v2937 = vadd.f32 %v2632, %v2936
      %v2938 = vpop.f32.mrb[0].mxu0
      %2939 = vmatprep.mubr.bf16.mxu0 %v2099
      %2940 = vmatmul.mubr.bf16.gmra.mrb[0].mxu0 %v2098
      %v2941 = vpop.f32.mrb[0].mxu0
      %v2942 = vadd.f32 %v2637, %v2941
      %v2943 = vpop.f32.mrb[0].mxu0
      %v2944 = vpop.f32.mrb[0].mxu0
      %v2945 = vadd.f32 %v2640, %v2944
      %v2946 = vpop.f32.mrb[0].mxu0
      %2947 = vmatprep.mubr.bf16.mxu0 %v2102
      %2948 = vmatmul.mubr.bf16.gmra.mrb[0].mxu0 %v2101
      %v2949 = vpop.f32.mrb[0].mxu0
      %v2950 = vadd.f32 %v2645, %v2949
      %v2951 = vpop.f32.mrb[0].mxu0
      %v2952 = vpop.f32.mrb[0].mxu0
      %v2953 = vadd.f32 %v2648, %v2952
      %v2954 = vpop.f32.mrb[0].mxu0
      %2955 = vmatprep.mubr.bf16.mxu0 %v2105
      %2956 = vmatmul.mubr.bf16.gmra.mrb[0].mxu0 %v2104
      %v2957 = vpop.f32.mrb[0].mxu0
      %v2958 = vadd.f32 %v2653, %v2957
      %v2959 = vpop.f32.mrb[0].mxu0
      %v2960 = vpop.f32.mrb[0].mxu0
      %v2961 = vadd.f32 %v2656, %v2960
      %v2962 = vpop.f32.mrb[0].mxu0
      %2963 = vmatprep.mubr.bf16.mxu0 %v2108
      %2964 = vmatmul.mubr.bf16.gmra.mrb[0].mxu0 %v2107
      %v2965 = vpop.f32.mrb[0].mxu0
      %v2966 = vadd.f32 %v2661, %v2965
      %v2967 = vpop.f32.mrb[0].mxu0
      %v2968 = vpop.f32.mrb[0].mxu0
      %v2969 = vadd.f32 %v2664, %v2968
      %v2970 = vpop.f32.mrb[0].mxu0
      %2971 = vmatprep.mubr.bf16.mxu0 %v2111
      %2972 = vmatmul.mubr.bf16.gmra.mrb[0].mxu0 %v2110
      %v2973 = vpop.f32.mrb[0].mxu0
      %v2974 = vadd.f32 %v2669, %v2973
      %v2975 = vpop.f32.mrb[0].mxu0
      %v2976 = vpop.f32.mrb[0].mxu0
      %v2977 = vadd.f32 %v2672, %v2976
      %v2978 = vpop.f32.mrb[0].mxu0
      %2979 = vmatprep.mubr.bf16.mxu0 %v2114
      %2980 = vmatmul.mubr.bf16.gmra.mrb[0].mxu0 %v2113
      %v2981 = vpop.f32.mrb[0].mxu0
      %v2982 = vadd.f32 %v2677, %v2981
      %v2983 = vpop.f32.mrb[0].mxu0
      %v2984 = vpop.f32.mrb[0].mxu0
      %v2985 = vadd.f32 %v2680, %v2984
      %v2986 = vpop.f32.mrb[0].mxu0
      %2987 = vmatprep.mubr.bf16.mxu0 %v2117
      %2988 = vmatmul.mubr.bf16.gmra.mrb[0].mxu0 %v2116
      %v2989 = vpop.f32.mrb[0].mxu0
      %v2990 = vadd.f32 %v2685, %v2989
      %v2991 = vpop.f32.mrb[0].mxu0
      %v2992 = vpop.f32.mrb[0].mxu0
      %v2993 = vadd.f32 %v2688, %v2992
      %v2994 = vpop.f32.mrb[0].mxu0
      %2995 = vmatprep.mubr.bf16.mxu0 %v2120
      %2996 = vmatmul.mubr.bf16.gmra.mrb[0].mxu0 %v2119
      %v2997 = vpop.f32.mrb[0].mxu0
      %v2998 = vadd.f32 %v2693, %v2997
      %v2999 = vpop.f32.mrb[0].mxu0
      %v3000 = vpop.f32.mrb[0].mxu0
      %v3001 = vadd.f32 %v2696, %v3000
      %v3002 = vpop.f32.mrb[0].mxu0
      %3003 = vmatprep.mubr.bf16.mxu0 %v2123
      %3004 = vmatmul.mubr.bf16.gmra.mrb[0].mxu0 %v2122
      %v3005 = vpop.f32.mrb[0].mxu0
      %v3006 = vadd.f32 %v2701, %v3005
      %v3007 = vpop.f32.mrb[0].mxu0
      %v3008 = vpop.f32.mrb[0].mxu0
      %v3009 = vadd.f32 %v2704, %v3008
      %v3010 = vpop.f32.mrb[0].mxu0
      %3011 = vmatprep.mubr.bf16.mxu0 %v2126
      %3012 = vmatmul.mubr.bf16.gmra.mrb[0].mxu0 %v2125
      %v3013 = vpop.f32.mrb[0].mxu0
      %v3014 = vadd.f32 %v2709, %v3013
      %v3015 = vpop.f32.mrb[0].mxu0
      %v3016 = vpop.f32.mrb[0].mxu0
      %v3017 = vadd.f32 %v2712, %v3016
      %v3018 = vpop.f32.mrb[0].mxu0
      %3019 = vmatprep.mubr.bf16.mxu0 %v2129
      %3020 = vmatmul.mubr.bf16.gmra.mrb[0].mxu0 %v2128
      %v3021 = vpop.f32.mrb[0].mxu0
      %v3022 = vadd.f32 %v2717, %v3021
      %v3023 = vpop.f32.mrb[0].mxu0
      %v3024 = vpop.f32.mrb[0].mxu0
      %v3025 = vadd.f32 %v2720, %v3024
      %v3026 = vpop.f32.mrb[0].mxu0
      %3027 = vmatprep.mubr.bf16.mxu0 %v2132
      %3028 = vmatmul.mubr.bf16.gmra.mrb[0].mxu0 %v2131
      %v3029 = vpop.f32.mrb[0].mxu0
      %v3030 = vadd.f32 %v2725, %v3029
      %v3031 = vpop.f32.mrb[0].mxu0
      %v3032 = vpop.f32.mrb[0].mxu0
      %v3033 = vadd.f32 %v2728, %v3032
      %v3034 = vpop.f32.mrb[0].mxu0
      %3035 = vmatprep.mubr.bf16.mxu0 %v2135
      %3036 = vmatmul.mubr.bf16.gmra.mrb[0].mxu0 %v2134
      %v3037 = vpop.f32.mrb[0].mxu0
      %v3038 = vadd.f32 %v2733, %v3037
      %v3039 = vpop.f32.mrb[0].mxu0
      %v3040 = vpop.f32.mrb[0].mxu0
      %v3041 = vadd.f32 %v2736, %v3040
      %v3042 = vpop.f32.mrb[0].mxu0
      %3043 = vmatprep.mubr.bf16.mxu0 %v2138
      %3044 = vmatmul.mubr.bf16.gmra.mrb[0].mxu0 %v2137
      %v3045 = vpop.f32.mrb[0].mxu0
      %v3046 = vadd.f32 %v2741, %v3045
      %v3047 = vpop.f32.mrb[0].mxu0
      %v3048 = vpop.f32.mrb[0].mxu0
      %v3049 = vadd.f32 %v2744, %v3048
      %v3050 = vpop.f32.mrb[0].mxu0
      %3051 = vmatprep.mubr.bf16.mxu0 %v2141
      %3052 = vmatmul.mubr.bf16.gmra.mrb[0].mxu0 %v2140
      %v3053 = vpop.f32.mrb[0].mxu0
      %v3054 = vadd.f32 %v2749, %v3053
      %v3055 = vpop.f32.mrb[0].mxu0
      %v3056 = vpop.f32.mrb[0].mxu0
      %v3057 = vadd.f32 %v2752, %v3056
      %v3058 = vpop.f32.mrb[0].mxu0
      %3059 = vdwg.mxu0
      %3060 = vmatprep.subr.bf16.mxu0 0
      %3061 = vmatpush1.bf16.msra.mxu0 %v2867
      %3062 = vmatprep.subr.bf16.mxu0 0
      %3063 = vmatpush1.bf16.msra.mxu0 %v2868
      %3064 = vmatprep.subr.bf16.mxu0 0
      %3065 = vmatpush1.bf16.msra.mxu0 %v2869
      %3066 = vmatprep.subr.bf16.mxu0 0
      %3067 = vmatpush1.bf16.msra.mxu0 %v2870
      %3068 = vmatprep.subr.bf16.mxu0 0
      %3069 = vmatpush1.bf16.msra.mxu0 %v2871
      %3070 = vmatprep.subr.bf16.mxu0 0
      %3071 = vmatpush1.bf16.msra.mxu0 %v2872
      %3072 = vmatprep.subr.bf16.mxu0 0
      %3073 = vmatpush1.bf16.msra.mxu0 %v2873
      %3074 = vmatprep.subr.bf16.mxu0 0
      %3075 = vmatpush1.bf16.msra.mxu0 %v2874
      %3076 = vmatprep.subr.bf16.mxu0 0
      %3077 = vmatpush1.bf16.msra.mxu0 0
      %3078 = vmatprep.subr.bf16.mxu0 0
      %3079 = vmatpush1.bf16.msra.mxu0 0
      %3080 = vmatprep.subr.bf16.mxu0 0
      %3081 = vmatpush1.bf16.msra.mxu0 0
      %3082 = vmatprep.subr.bf16.mxu0 0
      %3083 = vmatpush1.bf16.msra.mxu0 0
      %3084 = vmatprep.subr.bf16.mxu0 0
      %3085 = vmatpush1.bf16.msra.mxu0 0
      %3086 = vmatprep.subr.bf16.mxu0 0
      %3087 = vmatpush1.bf16.msra.mxu0 0
      %3088 = vmatprep.subr.bf16.mxu0 0
      %3089 = vmatpush1.bf16.msra.mxu0 0
      %3090 = vmatprep.subr.bf16.mxu0 0
      %3091 = vmatpush1.bf16.msra.mxu0 0
      %3092 = vmatprep.mubr.bf16.mxu0 0
      %3093 = vmatmul.mubr.bf16.gmra.mrb[0].mxu0 %v2097
      %v3094 = vpop.f32.mrb[0].mxu0
      %v3095 = vadd.f32 %v2934, %v3094
      %v3096 = vpop.f32.mrb[0].mxu0
      %v3097 = vpop.f32.mrb[0].mxu0
      %v3098 = vadd.f32 %v2937, %v3097
      %v3099 = vpop.f32.mrb[0].mxu0
      %3100 = vmatprep.mubr.bf16.mxu0 0
      %3101 = vmatmul.mubr.bf16.gmra.mrb[0].mxu0 %v2100
      %v3102 = vpop.f32.mrb[0].mxu0
      %v3103 = vadd.f32 %v2942, %v3102
      %v3104 = vpop.f32.mrb[0].mxu0
      %v3105 = vpop.f32.mrb[0].mxu0
      %v3106 = vadd.f32 %v2945, %v3105
      %v3107 = vpop.f32.mrb[0].mxu0
      %3108 = vmatprep.mubr.bf16.mxu0 0
      %3109 = vmatmul.mubr.bf16.gmra.mrb[0].mxu0 %v2103
      %v3110 = vpop.f32.mrb[0].mxu0
      %v3111 = vadd.f32 %v2950, %v3110
      %v3112 = vpop.f32.mrb[0].mxu0
      %v3113 = vpop.f32.mrb[0].mxu0
      %v3114 = vadd.f32 %v2953, %v3113
      %v3115 = vpop.f32.mrb[0].mxu0
      %3116 = vmatprep.mubr.bf16.mxu0 0
      %3117 = vmatmul.mubr.bf16.gmra.mrb[0].mxu0 %v2106
      %v3118 = vpop.f32.mrb[0].mxu0
      %v3119 = vadd.f32 %v2958, %v3118
      %v3120 = vpop.f32.mrb[0].mxu0
      %v3121 = vpop.f32.mrb[0].mxu0
      %v3122 = vadd.f32 %v2961, %v3121
      %v3123 = vpop.f32.mrb[0].mxu0
      %3124 = vmatprep.mubr.bf16.mxu0 0
      %3125 = vmatmul.mubr.bf16.gmra.mrb[0].mxu0 %v2109
      %v3126 = vpop.f32.mrb[0].mxu0
      %v3127 = vadd.f32 %v2966, %v3126
      %v3128 = vpop.f32.mrb[0].mxu0
      %v3129 = vpop.f32.mrb[0].mxu0
      %v3130 = vadd.f32 %v2969, %v3129
      %v3131 = vpop.f32.mrb[0].mxu0
      %3132 = vmatprep.mubr.bf16.mxu0 0
      %3133 = vmatmul.mubr.bf16.gmra.mrb[0].mxu0 %v2112
      %v3134 = vpop.f32.mrb[0].mxu0
      %v3135 = vadd.f32 %v2974, %v3134
      %v3136 = vpop.f32.mrb[0].mxu0
      %v3137 = vpop.f32.mrb[0].mxu0
      %v3138 = vadd.f32 %v2977, %v3137
      %v3139 = vpop.f32.mrb[0].mxu0
      %3140 = vmatprep.mubr.bf16.mxu0 0
      %3141 = vmatmul.mubr.bf16.gmra.mrb[0].mxu0 %v2115
      %v3142 = vpop.f32.mrb[0].mxu0
      %v3143 = vadd.f32 %v2982, %v3142
      %v3144 = vpop.f32.mrb[0].mxu0
      %v3145 = vpop.f32.mrb[0].mxu0
      %v3146 = vadd.f32 %v2985, %v3145
      %v3147 = vpop.f32.mrb[0].mxu0
      %3148 = vmatprep.mubr.bf16.mxu0 0
      %3149 = vmatmul.mubr.bf16.gmra.mrb[0].mxu0 %v2118
      %v3150 = vpop.f32.mrb[0].mxu0
      %v3151 = vadd.f32 %v2990, %v3150
      %v3152 = vpop.f32.mrb[0].mxu0
      %v3153 = vpop.f32.mrb[0].mxu0
      %v3154 = vadd.f32 %v2993, %v3153
      %v3155 = vpop.f32.mrb[0].mxu0
      %3156 = vmatprep.mubr.bf16.mxu0 0
      %3157 = vmatmul.mubr.bf16.gmra.mrb[0].mxu0 %v2121
      %v3158 = vpop.f32.mrb[0].mxu0
      %v3159 = vadd.f32 %v2998, %v3158
      %v3160 = vpop.f32.mrb[0].mxu0
      %v3161 = vpop.f32.mrb[0].mxu0
      %v3162 = vadd.f32 %v3001, %v3161
      %v3163 = vpop.f32.mrb[0].mxu0
      %3164 = vmatprep.mubr.bf16.mxu0 0
      %3165 = vmatmul.mubr.bf16.gmra.mrb[0].mxu0 %v2124
      %v3166 = vpop.f32.mrb[0].mxu0
      %v3167 = vadd.f32 %v3006, %v3166
      %v3168 = vpop.f32.mrb[0].mxu0
      %v3169 = vpop.f32.mrb[0].mxu0
      %v3170 = vadd.f32 %v3009, %v3169
      %v3171 = vpop.f32.mrb[0].mxu0
      %3172 = vmatprep.mubr.bf16.mxu0 0
      %3173 = vmatmul.mubr.bf16.gmra.mrb[0].mxu0 %v2127
      %v3174 = vpop.f32.mrb[0].mxu0
      %v3175 = vadd.f32 %v3014, %v3174
      %v3176 = vpop.f32.mrb[0].mxu0
      %v3177 = vpop.f32.mrb[0].mxu0
      %v3178 = vadd.f32 %v3017, %v3177
      %v3179 = vpop.f32.mrb[0].mxu0
      %3180 = vmatprep.mubr.bf16.mxu0 0
      %3181 = vmatmul.mubr.bf16.gmra.mrb[0].mxu0 %v2130
      %v3182 = vpop.f32.mrb[0].mxu0
      %v3183 = vadd.f32 %v3022, %v3182
      %v3184 = vpop.f32.mrb[0].mxu0
      %v3185 = vpop.f32.mrb[0].mxu0
      %v3186 = vadd.f32 %v3025, %v3185
      %v3187 = vpop.f32.mrb[0].mxu0
      %3188 = vmatprep.mubr.bf16.mxu0 0
      %3189 = vmatmul.mubr.bf16.gmra.mrb[0].mxu0 %v2133
      %v3190 = vpop.f32.mrb[0].mxu0
      %v3191 = vadd.f32 %v3030, %v3190
      %v3192 = vpop.f32.mrb[0].mxu0
      %v3193 = vpop.f32.mrb[0].mxu0
      %v3194 = vadd.f32 %v3033, %v3193
      %v3195 = vpop.f32.mrb[0].mxu0
      %3196 = vmatprep.mubr.bf16.mxu0 0
      %3197 = vmatmul.mubr.bf16.gmra.mrb[0].mxu0 %v2136
      %v3198 = vpop.f32.mrb[0].mxu0
      %v3199 = vadd.f32 %v3038, %v3198
      %v3200 = vpop.f32.mrb[0].mxu0
      %v3201 = vpop.f32.mrb[0].mxu0
      %v3202 = vadd.f32 %v3041, %v3201
      %v3203 = vpop.f32.mrb[0].mxu0
      %3204 = vmatprep.mubr.bf16.mxu0 0
      %3205 = vmatmul.mubr.bf16.gmra.mrb[0].mxu0 %v2139
      %v3206 = vpop.f32.mrb[0].mxu0
      %v3207 = vadd.f32 %v3046, %v3206
      %v3208 = vpop.f32.mrb[0].mxu0
      %v3209 = vpop.f32.mrb[0].mxu0
      %v3210 = vadd.f32 %v3049, %v3209
      %v3211 = vpop.f32.mrb[0].mxu0
      %3212 = vmatprep.mubr.bf16.mxu0 0
      %3213 = vmatmul.mubr.bf16.gmra.mrb[0].mxu0 %v2142
      %v3214 = vpop.f32.mrb[0].mxu0
      %v3215 = vadd.f32 %v3054, %v3214
      %v3216 = vpop.f32.mrb[0].mxu0
      %v3217 = vpop.f32.mrb[0].mxu0
      %v3218 = vadd.f32 %v3057, %v3217
      %v3219 = vpop.f32.mrb[0].mxu0
      %3220 = vdwg.mxu0
      %s3221 = scalar_lea.vmem [#allocation2], 48
      %v3222 = vld [vmem:[%s3221] sm:$0xff]
      %v3223 = vld [vmem:[%s3221 + $0x8] sm:$0xff]
      %v3224 = vld [vmem:[%s3221 + $0x10] sm:$0xff]
      %v3225 = vld [vmem:[%s3221 + $0x18] sm:$0xff]
      %v3226 = vld [vmem:[%s3221 + $0x20] sm:$0xff]
      %v3227 = vld [vmem:[%s3221 + $0x28] sm:$0xff]
      %v3228 = vld [vmem:[%s3221 + $0x30] sm:$0xff]
      %v3229 = vld [vmem:[%s3221 + $0x38] sm:$0xff]
      %v3230 = vld [vmem:[%s3221 + $0x40] sm:$0xff]
      %v3231 = vld [vmem:[%s3221 + $0x48] sm:$0xff]
      %v3232 = vld [vmem:[%s3221 + $0x50] sm:$0xff]
      %v3233 = vld [vmem:[%s3221 + $0x58] sm:$0xff]
      %v3234 = vld [vmem:[%s3221 + $0x60] sm:$0xff]
      %v3235 = vld [vmem:[%s3221 + $0x68] sm:$0xff]
      %v3236 = vld [vmem:[%s3221 + $0x70] sm:$0xff]
      %v3237 = vld [vmem:[%s3221 + $0x78] sm:$0xff]
      %v3238 = vld [vmem:[%s3221 + $0x80] sm:$0xff]
      %v3239 = vld [vmem:[%s3221 + $0x88] sm:$0xff]
      %v3240 = vld [vmem:[%s3221 + $0x90] sm:$0xff]
      %v3241 = vld [vmem:[%s3221 + $0x98] sm:$0xff]
      %v3242 = vld [vmem:[%s3221 + $0xa0] sm:$0xff]
      %v3243 = vld [vmem:[%s3221 + $0xa8] sm:$0xff]
      %v3244 = vld [vmem:[%s3221 + $0xb0] sm:$0xff]
      %v3245 = vld [vmem:[%s3221 + $0xb8] sm:$0xff]
      %v3246 = vld [vmem:[%s3221 + $0xc0] sm:$0xff]
      %v3247 = vld [vmem:[%s3221 + $0xc8] sm:$0xff]
      %v3248 = vld [vmem:[%s3221 + $0xd0] sm:$0xff]
      %v3249 = vld [vmem:[%s3221 + $0xd8] sm:$0xff]
      %v3250 = vld [vmem:[%s3221 + $0xe0] sm:$0xff]
      %v3251 = vld [vmem:[%s3221 + $0xe8] sm:$0xff]
      %v3252 = vld [vmem:[%s3221 + $0xf0] sm:$0xff]
      %v3253 = vld [vmem:[%s3221 + $0xf8] sm:$0xff]
      %v3254 = vld [vmem:[%s3221 + $0x100] sm:$0xff]
      %v3255 = vld [vmem:[%s3221 + $0x108] sm:$0xff]
      %v3256 = vld [vmem:[%s3221 + $0x110] sm:$0xff]
      %v3257 = vld [vmem:[%s3221 + $0x118] sm:$0xff]
      %v3258 = vld [vmem:[%s3221 + $0x120] sm:$0xff]
      %v3259 = vld [vmem:[%s3221 + $0x128] sm:$0xff]
      %v3260 = vld [vmem:[%s3221 + $0x130] sm:$0xff]
      %v3261 = vld [vmem:[%s3221 + $0x138] sm:$0xff]
      %v3262 = vld [vmem:[%s3221 + $0x140] sm:$0xff]
      %v3263 = vld [vmem:[%s3221 + $0x148] sm:$0xff]
      %v3264 = vld [vmem:[%s3221 + $0x150] sm:$0xff]
      %v3265 = vld [vmem:[%s3221 + $0x158] sm:$0xff]
      %v3266 = vld [vmem:[%s3221 + $0x160] sm:$0xff]
      %v3267 = vld [vmem:[%s3221 + $0x168] sm:$0xff]
      %v3268 = vld [vmem:[%s3221 + $0x170] sm:$0xff]
      %v3269 = vld [vmem:[%s3221 + $0x178] sm:$0xff]
      %s3270 = scalar_lea.vmem %s3, 384
      %v3271 = vld [vmem:[%s3270] sm:$0xf]
      %v3272 = vld [vmem:[%s3270 + $0x4] sm:$0xf]
      %v3273 = vld [vmem:[%s3270 + $0x8] sm:$0xf]
      %v3274 = vld [vmem:[%s3270 + $0xc] sm:$0xf]
      %v3275 = vld [vmem:[%s3270 + $0x10] sm:$0xf]
      %v3276 = vld [vmem:[%s3270 + $0x14] sm:$0xf]
      %v3277 = vld [vmem:[%s3270 + $0x18] sm:$0xf]
      %v3278 = vld [vmem:[%s3270 + $0x1c] sm:$0xf]
      %v3279 = vld [vmem:[%s3270 + $0x20] sm:$0xf]
      %v3280 = vld [vmem:[%s3270 + $0x24] sm:$0xf]
      %v3281 = vld [vmem:[%s3270 + $0x28] sm:$0xf]
      %v3282 = vld [vmem:[%s3270 + $0x2c] sm:$0xf]
      %v3283 = vld [vmem:[%s3270 + $0x30] sm:$0xf]
      %v3284 = vld [vmem:[%s3270 + $0x34] sm:$0xf]
      %v3285 = vld [vmem:[%s3270 + $0x38] sm:$0xf]
      %v3286 = vld [vmem:[%s3270 + $0x3c] sm:$0xf]
      %v3287 = vld [vmem:[%s3270 + $0x40] sm:$0xf]
      %v3288 = vld [vmem:[%s3270 + $0x44] sm:$0xf]
      %v3289 = vld [vmem:[%s3270 + $0x48] sm:$0xf]
      %v3290 = vld [vmem:[%s3270 + $0x4c] sm:$0xf]
      %v3291 = vld [vmem:[%s3270 + $0x50] sm:$0xf]
      %v3292 = vld [vmem:[%s3270 + $0x54] sm:$0xf]
      %v3293 = vld [vmem:[%s3270 + $0x58] sm:$0xf]
      %v3294 = vld [vmem:[%s3270 + $0x5c] sm:$0xf]
      %v3295 = vld [vmem:[%s3270 + $0x60] sm:$0xf]
      %v3296 = vld [vmem:[%s3270 + $0x64] sm:$0xf]
      %v3297 = vld [vmem:[%s3270 + $0x68] sm:$0xf]
      %v3298 = vld [vmem:[%s3270 + $0x6c] sm:$0xf]
      %v3299 = vld [vmem:[%s3270 + $0x70] sm:$0xf]
      %v3300 = vld [vmem:[%s3270 + $0x74] sm:$0xf]
      %v3301 = vld [vmem:[%s3270 + $0x78] sm:$0xf]
      %v3302 = vld [vmem:[%s3270 + $0x7c] sm:$0xf]
      %v3303 = vld [vmem:[%s3270 + $0x80] sm:$0xf]
      %v3304 = vld [vmem:[%s3270 + $0x84] sm:$0xf]
      %v3305 = vld [vmem:[%s3270 + $0x88] sm:$0xf]
      %v3306 = vld [vmem:[%s3270 + $0x8c] sm:$0xf]
      %v3307 = vld [vmem:[%s3270 + $0x90] sm:$0xf]
      %v3308 = vld [vmem:[%s3270 + $0x94] sm:$0xf]
      %v3309 = vld [vmem:[%s3270 + $0x98] sm:$0xf]
      %v3310 = vld [vmem:[%s3270 + $0x9c] sm:$0xf]
      %v3311 = vld [vmem:[%s3270 + $0xa0] sm:$0xf]
      %v3312 = vld [vmem:[%s3270 + $0xa4] sm:$0xf]
      %v3313 = vld [vmem:[%s3270 + $0xa8] sm:$0xf]
      %v3314 = vld [vmem:[%s3270 + $0xac] sm:$0xf]
      %v3315 = vld [vmem:[%s3270 + $0xb0] sm:$0xf]
      %v3316 = vld [vmem:[%s3270 + $0xb4] sm:$0xf]
      %v3317 = vld [vmem:[%s3270 + $0xb8] sm:$0xf]
      %v3318 = vld [vmem:[%s3270 + $0xbc] sm:$0xf]
      %v3367 = vunpack.c.l.b16 %v3271
      %v3368 = vunpack.c.l.b16 %v3272
      %v3369 = vunpack.c.l.b16 %v3273
      %v3370 = vunpack.c.l.b16 %v3274
      %v3371 = vunpack.c.l.b16 %v3275
      %v3372 = vunpack.c.l.b16 %v3276
      %v3373 = vunpack.c.l.b16 %v3277
      %v3374 = vunpack.c.l.b16 %v3278
      %v3375 = vunpack.c.l.b16 %v3279
      %v3376 = vunpack.c.l.b16 %v3280
      %v3377 = vunpack.c.l.b16 %v3281
      %v3378 = vunpack.c.l.b16 %v3282
      %v3379 = vunpack.c.l.b16 %v3283
      %v3380 = vunpack.c.l.b16 %v3284
      %v3381 = vunpack.c.l.b16 %v3285
      %v3382 = vunpack.c.l.b16 %v3286
      %v3383 = vunpack.c.l.b16 %v3287
      %v3384 = vunpack.c.l.b16 %v3288
      %v3385 = vunpack.c.l.b16 %v3289
      %v3386 = vunpack.c.l.b16 %v3290
      %v3387 = vunpack.c.l.b16 %v3291
      %v3388 = vunpack.c.l.b16 %v3292
      %v3389 = vunpack.c.l.b16 %v3293
      %v3390 = vunpack.c.l.b16 %v3294
      %v3391 = vunpack.c.l.b16 %v3295
      %v3392 = vunpack.c.l.b16 %v3296
      %v3393 = vunpack.c.l.b16 %v3297
      %v3394 = vunpack.c.l.b16 %v3298
      %v3395 = vunpack.c.l.b16 %v3299
      %v3396 = vunpack.c.l.b16 %v3300
      %v3397 = vunpack.c.l.b16 %v3301
      %v3398 = vunpack.c.l.b16 %v3302
      %v3399 = vunpack.c.l.b16 %v3303
      %v3400 = vunpack.c.l.b16 %v3304
      %v3401 = vunpack.c.l.b16 %v3305
      %v3402 = vunpack.c.l.b16 %v3306
      %v3403 = vunpack.c.l.b16 %v3307
      %v3404 = vunpack.c.l.b16 %v3308
      %v3405 = vunpack.c.l.b16 %v3309
      %v3406 = vunpack.c.l.b16 %v3310
      %v3407 = vunpack.c.l.b16 %v3311
      %v3408 = vunpack.c.l.b16 %v3312
      %v3409 = vunpack.c.l.b16 %v3313
      %v3410 = vunpack.c.l.b16 %v3314
      %v3411 = vunpack.c.l.b16 %v3315
      %v3412 = vunpack.c.l.b16 %v3316
      %v3413 = vunpack.c.l.b16 %v3317
      %v3414 = vunpack.c.l.b16 %v3318
      %v3415 = vpack.c.b16 %v3368, %v3367
      %v3416 = vpack.c.b16 %v3370, %v3369
      %v3417 = vpack.c.b16 %v3372, %v3371
      %v3418 = vpack.c.b16 %v3374, %v3373
      %v3419 = vpack.c.b16 %v3376, %v3375
      %v3420 = vpack.c.b16 %v3378, %v3377
      %v3421 = vpack.c.b16 %v3380, %v3379
      %v3422 = vpack.c.b16 %v3382, %v3381
      %v3423 = vpack.c.b16 %v3384, %v3383
      %v3424 = vpack.c.b16 %v3386, %v3385
      %v3425 = vpack.c.b16 %v3388, %v3387
      %v3426 = vpack.c.b16 %v3390, %v3389
      %v3427 = vpack.c.b16 %v3392, %v3391
      %v3428 = vpack.c.b16 %v3394, %v3393
      %v3429 = vpack.c.b16 %v3396, %v3395
      %v3430 = vpack.c.b16 %v3398, %v3397
      %v3431 = vpack.c.b16 %v3400, %v3399
      %v3432 = vpack.c.b16 %v3402, %v3401
      %v3433 = vpack.c.b16 %v3404, %v3403
      %v3434 = vpack.c.b16 %v3406, %v3405
      %v3435 = vpack.c.b16 %v3408, %v3407
      %v3436 = vpack.c.b16 %v3410, %v3409
      %v3437 = vpack.c.b16 %v3412, %v3411
      %v3438 = vpack.c.b16 %v3414, %v3413
      %3463 = vmatprep.subr.bf16.mxu0 0
      %3464 = vmatpush1.bf16.msra.mxu0 %v3415
      %3465 = vmatprep.subr.bf16.mxu0 0
      %3466 = vmatpush1.bf16.msra.mxu0 %v3416
      %3467 = vmatprep.subr.bf16.mxu0 0
      %3468 = vmatpush1.bf16.msra.mxu0 %v3417
      %3469 = vmatprep.subr.bf16.mxu0 0
      %3470 = vmatpush1.bf16.msra.mxu0 %v3418
      %3471 = vmatprep.subr.bf16.mxu0 0
      %3472 = vmatpush1.bf16.msra.mxu0 %v3419
      %3473 = vmatprep.subr.bf16.mxu0 0
      %3474 = vmatpush1.bf16.msra.mxu0 %v3420
      %3475 = vmatprep.subr.bf16.mxu0 0
      %3476 = vmatpush1.bf16.msra.mxu0 %v3421
      %3477 = vmatprep.subr.bf16.mxu0 0
      %3478 = vmatpush1.bf16.msra.mxu0 %v3422
      %3479 = vmatprep.subr.bf16.mxu0 0
      %3480 = vmatpush1.bf16.msra.mxu0 %v3423
      %3481 = vmatprep.subr.bf16.mxu0 0
      %3482 = vmatpush1.bf16.msra.mxu0 %v3424
      %3483 = vmatprep.subr.bf16.mxu0 0
      %3484 = vmatpush1.bf16.msra.mxu0 %v3425
      %3485 = vmatprep.subr.bf16.mxu0 0
      %3486 = vmatpush1.bf16.msra.mxu0 %v3426
      %3487 = vmatprep.subr.bf16.mxu0 0
      %3488 = vmatpush1.bf16.msra.mxu0 %v3427
      %3489 = vmatprep.subr.bf16.mxu0 0
      %3490 = vmatpush1.bf16.msra.mxu0 %v3428
      %3491 = vmatprep.subr.bf16.mxu0 0
      %3492 = vmatpush1.bf16.msra.mxu0 %v3429
      %3493 = vmatprep.subr.bf16.mxu0 0
      %3494 = vmatpush1.bf16.msra.mxu0 %v3430
      %3495 = vmatprep.mubr.bf16.mxu0 %v3223
      %3496 = vmatmul.mubr.bf16.gmra.mrb[0].mxu0 %v3222
      %v3497 = vpop.f32.mrb[0].mxu0
      %v3498 = vadd.f32 0.0, %v3497
      %v3499 = vpop.f32.mrb[0].mxu0
      %v3500 = vpop.f32.mrb[0].mxu0
      %v3501 = vadd.f32 0.0, %v3500
      %v3502 = vpop.f32.mrb[0].mxu0
      %3503 = vmatprep.mubr.bf16.mxu0 %v3226
      %3504 = vmatmul.mubr.bf16.gmra.mrb[0].mxu0 %v3225
      %v3505 = vpop.f32.mrb[0].mxu0
      %v3506 = vadd.f32 0.0, %v3505
      %v3507 = vpop.f32.mrb[0].mxu0
      %v3508 = vpop.f32.mrb[0].mxu0
      %v3509 = vadd.f32 0.0, %v3508
      %v3510 = vpop.f32.mrb[0].mxu0
      %3511 = vmatprep.mubr.bf16.mxu0 %v3229
      %3512 = vmatmul.mubr.bf16.gmra.mrb[0].mxu0 %v3228
      %v3513 = vpop.f32.mrb[0].mxu0
      %v3514 = vadd.f32 0.0, %v3513
      %v3515 = vpop.f32.mrb[0].mxu0
      %v3516 = vpop.f32.mrb[0].mxu0
      %v3517 = vadd.f32 0.0, %v3516
      %v3518 = vpop.f32.mrb[0].mxu0
      %3519 = vmatprep.mubr.bf16.mxu0 %v3232
      %3520 = vmatmul.mubr.bf16.gmra.mrb[0].mxu0 %v3231
      %v3521 = vpop.f32.mrb[0].mxu0
      %v3522 = vadd.f32 0.0, %v3521
      %v3523 = vpop.f32.mrb[0].mxu0
      %v3524 = vpop.f32.mrb[0].mxu0
      %v3525 = vadd.f32 0.0, %v3524
      %v3526 = vpop.f32.mrb[0].mxu0
      %3527 = vmatprep.mubr.bf16.mxu0 %v3235
      %3528 = vmatmul.mubr.bf16.gmra.mrb[0].mxu0 %v3234
      %v3529 = vpop.f32.mrb[0].mxu0
      %v3530 = vadd.f32 0.0, %v3529
      %v3531 = vpop.f32.mrb[0].mxu0
      %v3532 = vpop.f32.mrb[0].mxu0
      %v3533 = vadd.f32 0.0, %v3532
      %v3534 = vpop.f32.mrb[0].mxu0
      %3535 = vmatprep.mubr.bf16.mxu0 %v3238
      %3536 = vmatmul.mubr.bf16.gmra.mrb[0].mxu0 %v3237
      %v3537 = vpop.f32.mrb[0].mxu0
      %v3538 = vadd.f32 0.0, %v3537
      %v3539 = vpop.f32.mrb[0].mxu0
      %v3540 = vpop.f32.mrb[0].mxu0
      %v3541 = vadd.f32 0.0, %v3540
      %v3542 = vpop.f32.mrb[0].mxu0
      %3543 = vmatprep.mubr.bf16.mxu0 %v3241
      %3544 = vmatmul.mubr.bf16.gmra.mrb[0].mxu0 %v3240
      %v3545 = vpop.f32.mrb[0].mxu0
      %v3546 = vadd.f32 0.0, %v3545
      %v3547 = vpop.f32.mrb[0].mxu0
      %v3548 = vpop.f32.mrb[0].mxu0
      %v3549 = vadd.f32 0.0, %v3548
      %v3550 = vpop.f32.mrb[0].mxu0
      %3551 = vmatprep.mubr.bf16.mxu0 %v3244
      %3552 = vmatmul.mubr.bf16.gmra.mrb[0].mxu0 %v3243
      %v3553 = vpop.f32.mrb[0].mxu0
      %v3554 = vadd.f32 0.0, %v3553
      %v3555 = vpop.f32.mrb[0].mxu0
      %v3556 = vpop.f32.mrb[0].mxu0
      %v3557 = vadd.f32 0.0, %v3556
      %v3558 = vpop.f32.mrb[0].mxu0
      %3559 = vmatprep.mubr.bf16.mxu0 %v3247
      %3560 = vmatmul.mubr.bf16.gmra.mrb[0].mxu0 %v3246
      %v3561 = vpop.f32.mrb[0].mxu0
      %v3562 = vadd.f32 0.0, %v3561
      %v3563 = vpop.f32.mrb[0].mxu0
      %v3564 = vpop.f32.mrb[0].mxu0
      %v3565 = vadd.f32 0.0, %v3564
      %v3566 = vpop.f32.mrb[0].mxu0
      %3567 = vmatprep.mubr.bf16.mxu0 %v3250
      %3568 = vmatmul.mubr.bf16.gmra.mrb[0].mxu0 %v3249
      %v3569 = vpop.f32.mrb[0].mxu0
      %v3570 = vadd.f32 0.0, %v3569
      %v3571 = vpop.f32.mrb[0].mxu0
      %v3572 = vpop.f32.mrb[0].mxu0
      %v3573 = vadd.f32 0.0, %v3572
      %v3574 = vpop.f32.mrb[0].mxu0
      %3575 = vmatprep.mubr.bf16.mxu0 %v3253
      %3576 = vmatmul.mubr.bf16.gmra.mrb[0].mxu0 %v3252
      %v3577 = vpop.f32.mrb[0].mxu0
      %v3578 = vadd.f32 0.0, %v3577
      %v3579 = vpop.f32.mrb[0].mxu0
      %v3580 = vpop.f32.mrb[0].mxu0
      %v3581 = vadd.f32 0.0, %v3580
      %v3582 = vpop.f32.mrb[0].mxu0
      %3583 = vmatprep.mubr.bf16.mxu0 %v3256
      %3584 = vmatmul.mubr.bf16.gmra.mrb[0].mxu0 %v3255
      %v3585 = vpop.f32.mrb[0].mxu0
      %v3586 = vadd.f32 0.0, %v3585
      %v3587 = vpop.f32.mrb[0].mxu0
      %v3588 = vpop.f32.mrb[0].mxu0
      %v3589 = vadd.f32 0.0, %v3588
      %v3590 = vpop.f32.mrb[0].mxu0
      %3591 = vmatprep.mubr.bf16.mxu0 %v3259
      %3592 = vmatmul.mubr.bf16.gmra.mrb[0].mxu0 %v3258
      %v3593 = vpop.f32.mrb[0].mxu0
      %v3594 = vadd.f32 0.0, %v3593
      %v3595 = vpop.f32.mrb[0].mxu0
      %v3596 = vpop.f32.mrb[0].mxu0
      %v3597 = vadd.f32 0.0, %v3596
      %v3598 = vpop.f32.mrb[0].mxu0
      %3599 = vmatprep.mubr.bf16.mxu0 %v3262
      %3600 = vmatmul.mubr.bf16.gmra.mrb[0].mxu0 %v3261
      %v3601 = vpop.f32.mrb[0].mxu0
      %v3602 = vadd.f32 0.0, %v3601
      %v3603 = vpop.f32.mrb[0].mxu0
      %v3604 = vpop.f32.mrb[0].mxu0
      %v3605 = vadd.f32 0.0, %v3604
      %v3606 = vpop.f32.mrb[0].mxu0
      %3607 = vmatprep.mubr.bf16.mxu0 %v3265
      %3608 = vmatmul.mubr.bf16.gmra.mrb[0].mxu0 %v3264
      %v3609 = vpop.f32.mrb[0].mxu0
      %v3610 = vadd.f32 0.0, %v3609
      %v3611 = vpop.f32.mrb[0].mxu0
      %v3612 = vpop.f32.mrb[0].mxu0
      %v3613 = vadd.f32 0.0, %v3612
      %v3614 = vpop.f32.mrb[0].mxu0
      %3615 = vmatprep.mubr.bf16.mxu0 %v3268
      %3616 = vmatmul.mubr.bf16.gmra.mrb[0].mxu0 %v3267
      %v3617 = vpop.f32.mrb[0].mxu0
      %v3618 = vadd.f32 0.0, %v3617
      %v3619 = vpop.f32.mrb[0].mxu0
      %v3620 = vpop.f32.mrb[0].mxu0
      %v3621 = vadd.f32 0.0, %v3620
      %v3622 = vpop.f32.mrb[0].mxu0
      %3623 = vdwg.mxu0
      %3624 = vmatprep.subr.bf16.mxu0 0
      %3625 = vmatpush1.bf16.msra.mxu0 %v3431
      %3626 = vmatprep.subr.bf16.mxu0 0
      %3627 = vmatpush1.bf16.msra.mxu0 %v3432
      %3628 = vmatprep.subr.bf16.mxu0 0
      %3629 = vmatpush1.bf16.msra.mxu0 %v3433
      %3630 = vmatprep.subr.bf16.mxu0 0
      %3631 = vmatpush1.bf16.msra.mxu0 %v3434
      %3632 = vmatprep.subr.bf16.mxu0 0
      %3633 = vmatpush1.bf16.msra.mxu0 %v3435
      %3634 = vmatprep.subr.bf16.mxu0 0
      %3635 = vmatpush1.bf16.msra.mxu0 %v3436
      %3636 = vmatprep.subr.bf16.mxu0 0
      %3637 = vmatpush1.bf16.msra.mxu0 %v3437
      %3638 = vmatprep.subr.bf16.mxu0 0
      %3639 = vmatpush1.bf16.msra.mxu0 %v3438
      %3640 = vmatprep.subr.bf16.mxu0 0
      %3641 = vmatpush1.bf16.msra.mxu0 0
      %3642 = vmatprep.subr.bf16.mxu0 0
      %3643 = vmatpush1.bf16.msra.mxu0 0
      %3644 = vmatprep.subr.bf16.mxu0 0
      %3645 = vmatpush1.bf16.msra.mxu0 0
      %3646 = vmatprep.subr.bf16.mxu0 0
      %3647 = vmatpush1.bf16.msra.mxu0 0
      %3648 = vmatprep.subr.bf16.mxu0 0
      %3649 = vmatpush1.bf16.msra.mxu0 0
      %3650 = vmatprep.subr.bf16.mxu0 0
      %3651 = vmatpush1.bf16.msra.mxu0 0
      %3652 = vmatprep.subr.bf16.mxu0 0
      %3653 = vmatpush1.bf16.msra.mxu0 0
      %3654 = vmatprep.subr.bf16.mxu0 0
      %3655 = vmatpush1.bf16.msra.mxu0 0
      %3656 = vmatprep.mubr.bf16.mxu0 0
      %3657 = vmatmul.mubr.bf16.gmra.mrb[0].mxu0 %v3224
      %v3658 = vpop.f32.mrb[0].mxu0
      %v3659 = vadd.f32 %v3498, %v3658
      %v3660 = vpop.f32.mrb[0].mxu0
      %v3661 = vpop.f32.mrb[0].mxu0
      %v3662 = vadd.f32 %v3501, %v3661
      %v3663 = vpop.f32.mrb[0].mxu0
      %3664 = vmatprep.mubr.bf16.mxu0 0
      %3665 = vmatmul.mubr.bf16.gmra.mrb[0].mxu0 %v3227
      %v3666 = vpop.f32.mrb[0].mxu0
      %v3667 = vadd.f32 %v3506, %v3666
      %v3668 = vpop.f32.mrb[0].mxu0
      %v3669 = vpop.f32.mrb[0].mxu0
      %v3670 = vadd.f32 %v3509, %v3669
      %v3671 = vpop.f32.mrb[0].mxu0
      %3672 = vmatprep.mubr.bf16.mxu0 0
      %3673 = vmatmul.mubr.bf16.gmra.mrb[0].mxu0 %v3230
      %v3674 = vpop.f32.mrb[0].mxu0
      %v3675 = vadd.f32 %v3514, %v3674
      %v3676 = vpop.f32.mrb[0].mxu0
      %v3677 = vpop.f32.mrb[0].mxu0
      %v3678 = vadd.f32 %v3517, %v3677
      %v3679 = vpop.f32.mrb[0].mxu0
      %3680 = vmatprep.mubr.bf16.mxu0 0
      %3681 = vmatmul.mubr.bf16.gmra.mrb[0].mxu0 %v3233
      %v3682 = vpop.f32.mrb[0].mxu0
      %v3683 = vadd.f32 %v3522, %v3682
      %v3684 = vpop.f32.mrb[0].mxu0
      %v3685 = vpop.f32.mrb[0].mxu0
      %v3686 = vadd.f32 %v3525, %v3685
      %v3687 = vpop.f32.mrb[0].mxu0
      %3688 = vmatprep.mubr.bf16.mxu0 0
      %3689 = vmatmul.mubr.bf16.gmra.mrb[0].mxu0 %v3236
      %v3690 = vpop.f32.mrb[0].mxu0
      %v3691 = vadd.f32 %v3530, %v3690
      %v3692 = vpop.f32.mrb[0].mxu0
      %v3693 = vpop.f32.mrb[0].mxu0
      %v3694 = vadd.f32 %v3533, %v3693
      %v3695 = vpop.f32.mrb[0].mxu0
      %3696 = vmatprep.mubr.bf16.mxu0 0
      %3697 = vmatmul.mubr.bf16.gmra.mrb[0].mxu0 %v3239
      %v3698 = vpop.f32.mrb[0].mxu0
      %v3699 = vadd.f32 %v3538, %v3698
      %v3700 = vpop.f32.mrb[0].mxu0
      %v3701 = vpop.f32.mrb[0].mxu0
      %v3702 = vadd.f32 %v3541, %v3701
      %v3703 = vpop.f32.mrb[0].mxu0
      %3704 = vmatprep.mubr.bf16.mxu0 0
      %3705 = vmatmul.mubr.bf16.gmra.mrb[0].mxu0 %v3242
      %v3706 = vpop.f32.mrb[0].mxu0
      %v3707 = vadd.f32 %v3546, %v3706
      %v3708 = vpop.f32.mrb[0].mxu0
      %v3709 = vpop.f32.mrb[0].mxu0
      %v3710 = vadd.f32 %v3549, %v3709
      %v3711 = vpop.f32.mrb[0].mxu0
      %3712 = vmatprep.mubr.bf16.mxu0 0
      %3713 = vmatmul.mubr.bf16.gmra.mrb[0].mxu0 %v3245
      %v3714 = vpop.f32.mrb[0].mxu0
      %v3715 = vadd.f32 %v3554, %v3714
      %v3716 = vpop.f32.mrb[0].mxu0
      %v3717 = vpop.f32.mrb[0].mxu0
      %v3718 = vadd.f32 %v3557, %v3717
      %v3719 = vpop.f32.mrb[0].mxu0
      %3720 = vmatprep.mubr.bf16.mxu0 0
      %3721 = vmatmul.mubr.bf16.gmra.mrb[0].mxu0 %v3248
      %v3722 = vpop.f32.mrb[0].mxu0
      %v3723 = vadd.f32 %v3562, %v3722
      %v3724 = vpop.f32.mrb[0].mxu0
      %v3725 = vpop.f32.mrb[0].mxu0
      %v3726 = vadd.f32 %v3565, %v3725
      %v3727 = vpop.f32.mrb[0].mxu0
      %3728 = vmatprep.mubr.bf16.mxu0 0
      %3729 = vmatmul.mubr.bf16.gmra.mrb[0].mxu0 %v3251
      %v3730 = vpop.f32.mrb[0].mxu0
      %v3731 = vadd.f32 %v3570, %v3730
      %v3732 = vpop.f32.mrb[0].mxu0
      %v3733 = vpop.f32.mrb[0].mxu0
      %v3734 = vadd.f32 %v3573, %v3733
      %v3735 = vpop.f32.mrb[0].mxu0
      %3736 = vmatprep.mubr.bf16.mxu0 0
      %3737 = vmatmul.mubr.bf16.gmra.mrb[0].mxu0 %v3254
      %v3738 = vpop.f32.mrb[0].mxu0
      %v3739 = vadd.f32 %v3578, %v3738
      %v3740 = vpop.f32.mrb[0].mxu0
      %v3741 = vpop.f32.mrb[0].mxu0
      %v3742 = vadd.f32 %v3581, %v3741
      %v3743 = vpop.f32.mrb[0].mxu0
      %3744 = vmatprep.mubr.bf16.mxu0 0
      %3745 = vmatmul.mubr.bf16.gmra.mrb[0].mxu0 %v3257
      %v3746 = vpop.f32.mrb[0].mxu0
      %v3747 = vadd.f32 %v3586, %v3746
      %v3748 = vpop.f32.mrb[0].mxu0
      %v3749 = vpop.f32.mrb[0].mxu0
      %v3750 = vadd.f32 %v3589, %v3749
      %v3751 = vpop.f32.mrb[0].mxu0
      %3752 = vmatprep.mubr.bf16.mxu0 0
      %3753 = vmatmul.mubr.bf16.gmra.mrb[0].mxu0 %v3260
      %v3754 = vpop.f32.mrb[0].mxu0
      %v3755 = vadd.f32 %v3594, %v3754
      %v3756 = vpop.f32.mrb[0].mxu0
      %v3757 = vpop.f32.mrb[0].mxu0
      %v3758 = vadd.f32 %v3597, %v3757
      %v3759 = vpop.f32.mrb[0].mxu0
      %3760 = vmatprep.mubr.bf16.mxu0 0
      %3761 = vmatmul.mubr.bf16.gmra.mrb[0].mxu0 %v3263
      %v3762 = vpop.f32.mrb[0].mxu0
      %v3763 = vadd.f32 %v3602, %v3762
      %v3764 = vpop.f32.mrb[0].mxu0
      %v3765 = vpop.f32.mrb[0].mxu0
      %v3766 = vadd.f32 %v3605, %v3765
      %v3767 = vpop.f32.mrb[0].mxu0
      %3768 = vmatprep.mubr.bf16.mxu0 0
      %3769 = vmatmul.mubr.bf16.gmra.mrb[0].mxu0 %v3266
      %v3770 = vpop.f32.mrb[0].mxu0
      %v3771 = vadd.f32 %v3610, %v3770
      %v3772 = vpop.f32.mrb[0].mxu0
      %v3773 = vpop.f32.mrb[0].mxu0
      %v3774 = vadd.f32 %v3613, %v3773
      %v3775 = vpop.f32.mrb[0].mxu0
      %3776 = vmatprep.mubr.bf16.mxu0 0
      %3777 = vmatmul.mubr.bf16.gmra.mrb[0].mxu0 %v3269
      %v3778 = vpop.f32.mrb[0].mxu0
      %v3779 = vadd.f32 %v3618, %v3778
      %v3780 = vpop.f32.mrb[0].mxu0
      %v3781 = vpop.f32.mrb[0].mxu0
      %v3782 = vadd.f32 %v3621, %v3781
      %v3783 = vpop.f32.mrb[0].mxu0
      %3784 = vdwg.mxu0
      %v3785 = vadd.f32 %v3095, %v3659
      %v3786 = vadd.f32 %v3098, %v3662
      %v3787 = vadd.f32 %v3103, %v3667
      %v3788 = vadd.f32 %v3106, %v3670
      %v3789 = vadd.f32 %v3111, %v3675
      %v3790 = vadd.f32 %v3114, %v3678
      %v3791 = vadd.f32 %v3119, %v3683
      %v3792 = vadd.f32 %v3122, %v3686
      %v3793 = vadd.f32 %v3127, %v3691
      %v3794 = vadd.f32 %v3130, %v3694
      %v3795 = vadd.f32 %v3135, %v3699
      %v3796 = vadd.f32 %v3138, %v3702
      %v3797 = vadd.f32 %v3143, %v3707
      %v3798 = vadd.f32 %v3146, %v3710
      %v3799 = vadd.f32 %v3151, %v3715
      %v3800 = vadd.f32 %v3154, %v3718
      %v3801 = vadd.f32 %v3159, %v3723
      %v3802 = vadd.f32 %v3162, %v3726
      %v3803 = vadd.f32 %v3167, %v3731
      %v3804 = vadd.f32 %v3170, %v3734
      %v3805 = vadd.f32 %v3175, %v3739
      %v3806 = vadd.f32 %v3178, %v3742
      %v3807 = vadd.f32 %v3183, %v3747
      %v3808 = vadd.f32 %v3186, %v3750
      %v3809 = vadd.f32 %v3191, %v3755
      %v3810 = vadd.f32 %v3194, %v3758
      %v3811 = vadd.f32 %v3199, %v3763
      %v3812 = vadd.f32 %v3202, %v3766
      %v3813 = vadd.f32 %v3207, %v3771
      %v3814 = vadd.f32 %v3210, %v3774
      %v3815 = vadd.f32 %v3215, %v3779
      %v3816 = vadd.f32 %v3218, %v3782
      %v3817 = vpack.c.bf16 %v620, %v616
      %v3818 = vpack.c.bf16 %v630, %v626
      %v3819 = vpack.c.bf16 %v640, %v636
      %v3820 = vpack.c.bf16 %v650, %v646
      %v3821 = vpack.c.bf16 %v660, %v656
      %v3822 = vpack.c.bf16 %v670, %v666
      %v3823 = vpack.c.bf16 %v680, %v676
      %v3824 = vpack.c.bf16 %v690, %v686
      %v3825 = vpack.c.bf16 %v700, %v696
      %v3826 = vpack.c.bf16 %v710, %v706
      %v3827 = vpack.c.bf16 %v720, %v716
      %v3828 = vpack.c.bf16 %v730, %v726
      %v3829 = vpack.c.bf16 %v740, %v736
      %v3830 = vpack.c.bf16 %v750, %v746
      %v3831 = vpack.c.bf16 %v760, %v756
      %v3832 = vpack.c.bf16 %v770, %v766
      %v3833 = vpack.c.bf16 %v780, %v776
      %v3834 = vpack.c.bf16 %v790, %v786
      %v3835 = vpack.c.bf16 %v800, %v796
      %v3836 = vpack.c.bf16 %v810, %v806
      %v3837 = vpack.c.bf16 %v820, %v816
      %v3838 = vpack.c.bf16 %v830, %v826
      %v3839 = vpack.c.bf16 %v840, %v836
      %v3840 = vpack.c.bf16 %v850, %v846
      %v3841 = vpack.c.bf16 %v860, %v856
      %v3867 = vunpack.c.h.b16 %v3817
      %v3868 = vunpack.c.l.b16 %v3818
      %v3869 = vunpack.c.h.b16 %v3818
      %v3870 = vunpack.c.l.b16 %v3819
      %v3871 = vunpack.c.h.b16 %v3819
      %v3872 = vunpack.c.l.b16 %v3820
      %v3873 = vunpack.c.h.b16 %v3820
      %v3874 = vunpack.c.l.b16 %v3821
      %v3875 = vunpack.c.h.b16 %v3821
      %v3876 = vunpack.c.l.b16 %v3822
      %v3877 = vunpack.c.h.b16 %v3822
      %v3878 = vunpack.c.l.b16 %v3823
      %v3879 = vunpack.c.h.b16 %v3823
      %v3880 = vunpack.c.l.b16 %v3824
      %v3881 = vunpack.c.h.b16 %v3824
      %v3882 = vunpack.c.l.b16 %v3825
      %v3883 = vunpack.c.h.b16 %v3825
      %v3884 = vunpack.c.l.b16 %v3826
      %v3885 = vunpack.c.h.b16 %v3826
      %v3886 = vunpack.c.l.b16 %v3827
      %v3887 = vunpack.c.h.b16 %v3827
      %v3888 = vunpack.c.l.b16 %v3828
      %v3889 = vunpack.c.h.b16 %v3828
      %v3890 = vunpack.c.l.b16 %v3829
      %v3891 = vunpack.c.h.b16 %v3829
      %v3892 = vunpack.c.l.b16 %v3830
      %v3893 = vunpack.c.h.b16 %v3830
      %v3894 = vunpack.c.l.b16 %v3831
      %v3895 = vunpack.c.h.b16 %v3831
      %v3896 = vunpack.c.l.b16 %v3832
      %v3897 = vunpack.c.h.b16 %v3832
      %v3898 = vunpack.c.l.b16 %v3833
      %v3899 = vunpack.c.h.b16 %v3833
      %v3900 = vunpack.c.l.b16 %v3834
      %v3901 = vunpack.c.h.b16 %v3834
      %v3902 = vunpack.c.l.b16 %v3835
      %v3903 = vunpack.c.h.b16 %v3835
      %v3904 = vunpack.c.l.b16 %v3836
      %v3905 = vunpack.c.h.b16 %v3836
      %v3906 = vunpack.c.l.b16 %v3837
      %v3907 = vunpack.c.h.b16 %v3837
      %v3908 = vunpack.c.l.b16 %v3838
      %v3909 = vunpack.c.h.b16 %v3838
      %v3910 = vunpack.c.l.b16 %v3839
      %v3911 = vunpack.c.h.b16 %v3839
      %v3912 = vunpack.c.l.b16 %v3840
      %v3913 = vunpack.c.h.b16 %v3840
      %v3914 = vunpack.c.l.b16 %v3841
      %v3915 = vpack.c.b16 %v3867, %v3867
      %v3916 = vpack.c.b16 %v3868, %v3868
      %v3917 = vpack.c.b16 %v3869, %v3869
      %v3918 = vpack.c.b16 %v3870, %v3870
      %v3919 = vpack.c.b16 %v3871, %v3871
      %v3920 = vpack.c.b16 %v3872, %v3872
      %v3921 = vpack.c.b16 %v3873, %v3873
      %v3922 = vpack.c.b16 %v3874, %v3874
      %v3923 = vpack.c.b16 %v3875, %v3875
      %v3924 = vpack.c.b16 %v3876, %v3876
      %v3925 = vpack.c.b16 %v3877, %v3877
      %v3926 = vpack.c.b16 %v3878, %v3878
      %v3927 = vpack.c.b16 %v3879, %v3879
      %v3928 = vpack.c.b16 %v3880, %v3880
      %v3929 = vpack.c.b16 %v3881, %v3881
      %v3930 = vpack.c.b16 %v3882, %v3882
      %v3931 = vpack.c.b16 %v3883, %v3883
      %v3932 = vpack.c.b16 %v3884, %v3884
      %v3933 = vpack.c.b16 %v3885, %v3885
      %v3934 = vpack.c.b16 %v3886, %v3886
      %v3935 = vpack.c.b16 %v3887, %v3887
      %v3936 = vpack.c.b16 %v3888, %v3888
      %v3937 = vpack.c.b16 %v3889, %v3889
      %v3938 = vpack.c.b16 %v3890, %v3890
      %v3939 = vpack.c.b16 %v3891, %v3891
      %v3940 = vpack.c.b16 %v3892, %v3892
      %v3941 = vpack.c.b16 %v3893, %v3893
      %v3942 = vpack.c.b16 %v3894, %v3894
      %v3943 = vpack.c.b16 %v3895, %v3895
      %v3944 = vpack.c.b16 %v3896, %v3896
      %v3945 = vpack.c.b16 %v3897, %v3897
      %v3946 = vpack.c.b16 %v3898, %v3898
      %v3947 = vpack.c.b16 %v3899, %v3899
      %v3948 = vpack.c.b16 %v3900, %v3900
      %v3949 = vpack.c.b16 %v3901, %v3901
      %v3950 = vpack.c.b16 %v3902, %v3902
      %v3951 = vpack.c.b16 %v3903, %v3903
      %v3952 = vpack.c.b16 %v3904, %v3904
      %v3953 = vpack.c.b16 %v3905, %v3905
      %v3954 = vpack.c.b16 %v3906, %v3906
      %v3955 = vpack.c.b16 %v3907, %v3907
      %v3956 = vpack.c.b16 %v3908, %v3908
      %v3957 = vpack.c.b16 %v3909, %v3909
      %v3958 = vpack.c.b16 %v3910, %v3910
      %v3959 = vpack.c.b16 %v3911, %v3911
      %v3960 = vpack.c.b16 %v3912, %v3912
      %v3961 = vpack.c.b16 %v3913, %v3913
      %v3962 = vpack.c.b16 %v3914, %v3914
      %vm3963 = vsmask.f32 3328
      %vm3964 = vsmask.f32 7440
      %vm3965 = vmor %vm3963, %vm3964
      %v3967 = vshrl.u32 %v3915, 16
      %v3969 = vrot.slane %v3967, 4
      %v3970 = vshll.u32 %v3915, 16
      %v3972 = vrot.slane %v3970, 5
      %v3973 = vor.u32 %v3969, %v3972
      %v3974 = vrot.slane %v3973, 4
      %v3976 = vshll.u32 %v3916, 16
      %v3978 = vrot.slane %v3976, 5
      %v3979 = vsel %vm3965, %v3974, %v3978
      %v3980 = vshrl.u32 %v3916, 16
      %v3982 = vrot.slane %v3980, 4
      %v3983 = vor.u32 %v3982, %v3978
      %v3984 = vrot.slane %v3983, 4
      %v3986 = vshll.u32 %v3917, 16
      %v3988 = vrot.slane %v3986, 5
      %v3989 = vsel %vm3965, %v3984, %v3988
      %v3991 = vshrl.u32 %v3918, 16
      %v3993 = vrot.slane %v3991, 4
      %v3994 = vshll.u32 %v3918, 16
      %v3996 = vrot.slane %v3994, 5
      %v3997 = vor.u32 %v3993, %v3996
      %v3998 = vrot.slane %v3997, 4
      %v4000 = vshll.u32 %v3919, 16
      %v4002 = vrot.slane %v4000, 5
      %v4003 = vsel %vm3965, %v3998, %v4002
      %v4004 = vshrl.u32 %v3919, 16
      %v4006 = vrot.slane %v4004, 4
      %v4007 = vor.u32 %v4006, %v4002
      %v4008 = vrot.slane %v4007, 4
      %v4010 = vshll.u32 %v3920, 16
      %v4012 = vrot.slane %v4010, 5
      %v4013 = vsel %vm3965, %v4008, %v4012
      %v4015 = vshrl.u32 %v3921, 16
      %v4017 = vrot.slane %v4015, 4
      %v4018 = vshll.u32 %v3921, 16
      %v4020 = vrot.slane %v4018, 5
      %v4021 = vor.u32 %v4017, %v4020
      %v4022 = vrot.slane %v4021, 4
      %v4024 = vshll.u32 %v3922, 16
      %v4026 = vrot.slane %v4024, 5
      %v4027 = vsel %vm3965, %v4022, %v4026
      %v4028 = vshrl.u32 %v3922, 16
      %v4030 = vrot.slane %v4028, 4
      %v4031 = vor.u32 %v4030, %v4026
      %v4032 = vrot.slane %v4031, 4
      %v4034 = vshll.u32 %v3923, 16
      %v4036 = vrot.slane %v4034, 5
      %v4037 = vsel %vm3965, %v4032, %v4036
      %v4039 = vshrl.u32 %v3924, 16
      %v4041 = vrot.slane %v4039, 4
      %v4042 = vshll.u32 %v3924, 16
      %v4044 = vrot.slane %v4042, 5
      %v4045 = vor.u32 %v4041, %v4044
      %v4046 = vrot.slane %v4045, 4
      %v4048 = vshll.u32 %v3925, 16
      %v4050 = vrot.slane %v4048, 5
      %v4051 = vsel %vm3965, %v4046, %v4050
      %v4052 = vshrl.u32 %v3925, 16
      %v4054 = vrot.slane %v4052, 4
      %v4055 = vor.u32 %v4054, %v4050
      %v4056 = vrot.slane %v4055, 4
      %v4058 = vshll.u32 %v3926, 16
      %v4060 = vrot.slane %v4058, 5
      %v4061 = vsel %vm3965, %v4056, %v4060
      %v4063 = vshrl.u32 %v3927, 16
      %v4065 = vrot.slane %v4063, 4
      %v4066 = vshll.u32 %v3927, 16
      %v4068 = vrot.slane %v4066, 5
      %v4069 = vor.u32 %v4065, %v4068
      %v4070 = vrot.slane %v4069, 4
      %v4072 = vshll.u32 %v3928, 16
      %v4074 = vrot.slane %v4072, 5
      %v4075 = vsel %vm3965, %v4070, %v4074
      %v4076 = vshrl.u32 %v3928, 16
      %v4078 = vrot.slane %v4076, 4
      %v4079 = vor.u32 %v4078, %v4074
      %v4080 = vrot.slane %v4079, 4
      %v4082 = vshll.u32 %v3929, 16
      %v4084 = vrot.slane %v4082, 5
      %v4085 = vsel %vm3965, %v4080, %v4084
      %v4087 = vshrl.u32 %v3930, 16
      %v4089 = vrot.slane %v4087, 4
      %v4090 = vshll.u32 %v3930, 16
      %v4092 = vrot.slane %v4090, 5
      %v4093 = vor.u32 %v4089, %v4092
      %v4094 = vrot.slane %v4093, 4
      %v4096 = vshll.u32 %v3931, 16
      %v4098 = vrot.slane %v4096, 5
      %v4099 = vsel %vm3965, %v4094, %v4098
      %v4100 = vshrl.u32 %v3931, 16
      %v4102 = vrot.slane %v4100, 4
      %v4103 = vor.u32 %v4102, %v4098
      %v4104 = vrot.slane %v4103, 4
      %v4106 = vshll.u32 %v3932, 16
      %v4108 = vrot.slane %v4106, 5
      %v4109 = vsel %vm3965, %v4104, %v4108
      %v4111 = vshrl.u32 %v3933, 16
      %v4113 = vrot.slane %v4111, 4
      %v4114 = vshll.u32 %v3933, 16
      %v4116 = vrot.slane %v4114, 5
      %v4117 = vor.u32 %v4113, %v4116
      %v4118 = vrot.slane %v4117, 4
      %v4120 = vshll.u32 %v3934, 16
      %v4122 = vrot.slane %v4120, 5
      %v4123 = vsel %vm3965, %v4118, %v4122
      %v4124 = vshrl.u32 %v3934, 16
      %v4126 = vrot.slane %v4124, 4
      %v4127 = vor.u32 %v4126, %v4122
      %v4128 = vrot.slane %v4127, 4
      %v4130 = vshll.u32 %v3935, 16
      %v4132 = vrot.slane %v4130, 5
      %v4133 = vsel %vm3965, %v4128, %v4132
      %v4135 = vshrl.u32 %v3936, 16
      %v4137 = vrot.slane %v4135, 4
      %v4138 = vshll.u32 %v3936, 16
      %v4140 = vrot.slane %v4138, 5
      %v4141 = vor.u32 %v4137, %v4140
      %v4142 = vrot.slane %v4141, 4
      %v4144 = vshll.u32 %v3937, 16
      %v4146 = vrot.slane %v4144, 5
      %v4147 = vsel %vm3965, %v4142, %v4146
      %v4148 = vshrl.u32 %v3937, 16
      %v4150 = vrot.slane %v4148, 4
      %v4151 = vor.u32 %v4150, %v4146
      %v4152 = vrot.slane %v4151, 4
      %v4154 = vshll.u32 %v3938, 16
      %v4156 = vrot.slane %v4154, 5
      %v4157 = vsel %vm3965, %v4152, %v4156
      %v4159 = vshrl.u32 %v3939, 16
      %v4161 = vrot.slane %v4159, 4
      %v4162 = vshll.u32 %v3939, 16
      %v4164 = vrot.slane %v4162, 5
      %v4165 = vor.u32 %v4161, %v4164
      %v4166 = vrot.slane %v4165, 4
      %v4168 = vshll.u32 %v3940, 16
      %v4170 = vrot.slane %v4168, 5
      %v4171 = vsel %vm3965, %v4166, %v4170
      %v4172 = vshrl.u32 %v3940, 16
      %v4174 = vrot.slane %v4172, 4
      %v4175 = vor.u32 %v4174, %v4170
      %v4176 = vrot.slane %v4175, 4
      %v4178 = vshll.u32 %v3941, 16
      %v4180 = vrot.slane %v4178, 5
      %v4181 = vsel %vm3965, %v4176, %v4180
      %v4183 = vshrl.u32 %v3942, 16
      %v4185 = vrot.slane %v4183, 4
      %v4186 = vshll.u32 %v3942, 16
      %v4188 = vrot.slane %v4186, 5
      %v4189 = vor.u32 %v4185, %v4188
      %v4190 = vrot.slane %v4189, 4
      %v4192 = vshll.u32 %v3943, 16
      %v4194 = vrot.slane %v4192, 5
      %v4195 = vsel %vm3965, %v4190, %v4194
      %v4196 = vshrl.u32 %v3943, 16
      %v4198 = vrot.slane %v4196, 4
      %v4199 = vor.u32 %v4198, %v4194
      %v4200 = vrot.slane %v4199, 4
      %v4202 = vshll.u32 %v3944, 16
      %v4204 = vrot.slane %v4202, 5
      %v4205 = vsel %vm3965, %v4200, %v4204
      %v4207 = vshrl.u32 %v3945, 16
      %v4209 = vrot.slane %v4207, 4
      %v4210 = vshll.u32 %v3945, 16
      %v4212 = vrot.slane %v4210, 5
      %v4213 = vor.u32 %v4209, %v4212
      %v4214 = vrot.slane %v4213, 4
      %v4216 = vshll.u32 %v3946, 16
      %v4218 = vrot.slane %v4216, 5
      %v4219 = vsel %vm3965, %v4214, %v4218
      %v4220 = vshrl.u32 %v3946, 16
      %v4222 = vrot.slane %v4220, 4
      %v4223 = vor.u32 %v4222, %v4218
      %v4224 = vrot.slane %v4223, 4
      %v4226 = vshll.u32 %v3947, 16
      %v4228 = vrot.slane %v4226, 5
      %v4229 = vsel %vm3965, %v4224, %v4228
      %v4231 = vshrl.u32 %v3948, 16
      %v4233 = vrot.slane %v4231, 4
      %v4234 = vshll.u32 %v3948, 16
      %v4236 = vrot.slane %v4234, 5
      %v4237 = vor.u32 %v4233, %v4236
      %v4238 = vrot.slane %v4237, 4
      %v4240 = vshll.u32 %v3949, 16
      %v4242 = vrot.slane %v4240, 5
      %v4243 = vsel %vm3965, %v4238, %v4242
      %v4244 = vshrl.u32 %v3949, 16
      %v4246 = vrot.slane %v4244, 4
      %v4247 = vor.u32 %v4246, %v4242
      %v4248 = vrot.slane %v4247, 4
      %v4250 = vshll.u32 %v3950, 16
      %v4252 = vrot.slane %v4250, 5
      %v4253 = vsel %vm3965, %v4248, %v4252
      %v4255 = vshrl.u32 %v3951, 16
      %v4257 = vrot.slane %v4255, 4
      %v4258 = vshll.u32 %v3951, 16
      %v4260 = vrot.slane %v4258, 5
      %v4261 = vor.u32 %v4257, %v4260
      %v4262 = vrot.slane %v4261, 4
      %v4264 = vshll.u32 %v3952, 16
      %v4266 = vrot.slane %v4264, 5
      %v4267 = vsel %vm3965, %v4262, %v4266
      %v4268 = vshrl.u32 %v3952, 16
      %v4270 = vrot.slane %v4268, 4
      %v4271 = vor.u32 %v4270, %v4266
      %v4272 = vrot.slane %v4271, 4
      %v4274 = vshll.u32 %v3953, 16
      %v4276 = vrot.slane %v4274, 5
      %v4277 = vsel %vm3965, %v4272, %v4276
      %v4279 = vshrl.u32 %v3954, 16
      %v4281 = vrot.slane %v4279, 4
      %v4282 = vshll.u32 %v3954, 16
      %v4284 = vrot.slane %v4282, 5
      %v4285 = vor.u32 %v4281, %v4284
      %v4286 = vrot.slane %v4285, 4
      %v4288 = vshll.u32 %v3955, 16
      %v4290 = vrot.slane %v4288, 5
      %v4291 = vsel %vm3965, %v4286, %v4290
      %v4292 = vshrl.u32 %v3955, 16
      %v4294 = vrot.slane %v4292, 4
      %v4295 = vor.u32 %v4294, %v4290
      %v4296 = vrot.slane %v4295, 4
      %v4298 = vshll.u32 %v3956, 16
      %v4300 = vrot.slane %v4298, 5
      %v4301 = vsel %vm3965, %v4296, %v4300
      %v4303 = vshrl.u32 %v3957, 16
      %v4305 = vrot.slane %v4303, 4
      %v4306 = vshll.u32 %v3957, 16
      %v4308 = vrot.slane %v4306, 5
      %v4309 = vor.u32 %v4305, %v4308
      %v4310 = vrot.slane %v4309, 4
      %v4312 = vshll.u32 %v3958, 16
      %v4314 = vrot.slane %v4312, 5
      %v4315 = vsel %vm3965, %v4310, %v4314
      %v4316 = vshrl.u32 %v3958, 16
      %v4318 = vrot.slane %v4316, 4
      %v4319 = vor.u32 %v4318, %v4314
      %v4320 = vrot.slane %v4319, 4
      %v4322 = vshll.u32 %v3959, 16
      %v4324 = vrot.slane %v4322, 5
      %v4325 = vsel %vm3965, %v4320, %v4324
      %v4327 = vshrl.u32 %v3960, 16
      %v4329 = vrot.slane %v4327, 4
      %v4330 = vshll.u32 %v3960, 16
      %v4332 = vrot.slane %v4330, 5
      %v4333 = vor.u32 %v4329, %v4332
      %v4334 = vrot.slane %v4333, 4
      %v4336 = vshll.u32 %v3961, 16
      %v4338 = vrot.slane %v4336, 5
      %v4339 = vsel %vm3965, %v4334, %v4338
      %v4340 = vshrl.u32 %v3961, 16
      %v4342 = vrot.slane %v4340, 4
      %v4343 = vor.u32 %v4342, %v4338
      %v4344 = vrot.slane %v4343, 4
      %v4346 = vshll.u32 %v3962, 16
      %v4348 = vrot.slane %v4346, 5
      %v4349 = vsel %vm3965, %v4344, %v4348
      %v4382 = vld [vmem:[%s4] sm:$0x1]
      %v4384 = vlaneseq
      %v4385 = vshrl.u32 %v4384, 7
      %v4386 = vsub.s32 0, %v4385
      %v4387 = vrot.slane %v4382, %v4386
      %v4389 = vadd.f32 %v3785, %v4387
      %v4390 = vadd.f32 %v3786, %v4387
      %v4391 = vadd.f32 %v3787, %v4387
      %v4392 = vadd.f32 %v3788, %v4387
      %v4393 = vadd.f32 %v3789, %v4387
      %v4394 = vadd.f32 %v3790, %v4387
      %v4395 = vadd.f32 %v3791, %v4387
      %v4396 = vadd.f32 %v3792, %v4387
      %v4397 = vadd.f32 %v3793, %v4387
      %v4398 = vadd.f32 %v3794, %v4387
      %v4399 = vadd.f32 %v3795, %v4387
      %v4400 = vadd.f32 %v3796, %v4387
      %v4401 = vadd.f32 %v3797, %v4387
      %v4402 = vadd.f32 %v3798, %v4387
      %v4403 = vadd.f32 %v3799, %v4387
      %v4404 = vadd.f32 %v3800, %v4387
      %v4405 = vadd.f32 %v3801, %v4387
      %v4406 = vadd.f32 %v3802, %v4387
      %v4407 = vadd.f32 %v3803, %v4387
      %v4408 = vadd.f32 %v3804, %v4387
      %v4409 = vadd.f32 %v3805, %v4387
      %v4410 = vadd.f32 %v3806, %v4387
      %v4411 = vadd.f32 %v3807, %v4387
      %v4412 = vadd.f32 %v3808, %v4387
      %v4413 = vadd.f32 %v3809, %v4387
      %v4414 = vadd.f32 %v3810, %v4387
      %v4415 = vadd.f32 %v3811, %v4387
      %v4416 = vadd.f32 %v3812, %v4387
      %v4417 = vadd.f32 %v3813, %v4387
      %v4418 = vadd.f32 %v3814, %v4387
      %v4419 = vadd.f32 %v3815, %v4387
      %v4420 = vadd.f32 %v3816, %v4387
      %v4421 = vunpack.c.l.bf16 %v3979
      %v4422 = vunpack.c.l.bf16 %v3989
      %v4423 = vunpack.c.l.bf16 %v4003
      %v4424 = vunpack.c.l.bf16 %v4013
      %v4425 = vunpack.c.l.bf16 %v4027
      %v4426 = vunpack.c.l.bf16 %v4037
      %v4427 = vunpack.c.l.bf16 %v4051
      %v4428 = vunpack.c.l.bf16 %v4061
      %v4429 = vunpack.c.l.bf16 %v4075
      %v4430 = vunpack.c.l.bf16 %v4085
      %v4431 = vunpack.c.l.bf16 %v4099
      %v4432 = vunpack.c.l.bf16 %v4109
      %v4433 = vunpack.c.l.bf16 %v4123
      %v4434 = vunpack.c.l.bf16 %v4133
      %v4435 = vunpack.c.l.bf16 %v4147
      %v4436 = vunpack.c.l.bf16 %v4157
      %v4437 = vunpack.c.l.bf16 %v4171
      %v4438 = vunpack.c.l.bf16 %v4181
      %v4439 = vunpack.c.l.bf16 %v4195
      %v4440 = vunpack.c.l.bf16 %v4205
      %v4441 = vunpack.c.l.bf16 %v4219
      %v4442 = vunpack.c.l.bf16 %v4229
      %v4443 = vunpack.c.l.bf16 %v4243
      %v4444 = vunpack.c.l.bf16 %v4253
      %v4445 = vunpack.c.l.bf16 %v4267
      %v4446 = vunpack.c.l.bf16 %v4277
      %v4447 = vunpack.c.l.bf16 %v4291
      %v4448 = vunpack.c.l.bf16 %v4301
      %v4449 = vunpack.c.l.bf16 %v4315
      %v4450 = vunpack.c.l.bf16 %v4325
      %v4451 = vunpack.c.l.bf16 %v4339
      %v4452 = vunpack.c.l.bf16 %v4349
      %v4453 = vadd.f32 %v4389, %v4421
      %v4454 = vadd.f32 %v4390, %v4422
      %v4455 = vadd.f32 %v4391, %v4423
      %v4456 = vadd.f32 %v4392, %v4424
      %v4457 = vadd.f32 %v4393, %v4425
      %v4458 = vadd.f32 %v4394, %v4426
      %v4459 = vadd.f32 %v4395, %v4427
      %v4460 = vadd.f32 %v4396, %v4428
      %v4461 = vadd.f32 %v4397, %v4429
      %v4462 = vadd.f32 %v4398, %v4430
      %v4463 = vadd.f32 %v4399, %v4431
      %v4464 = vadd.f32 %v4400, %v4432
      %v4465 = vadd.f32 %v4401, %v4433
      %v4466 = vadd.f32 %v4402, %v4434
      %v4467 = vadd.f32 %v4403, %v4435
      %v4468 = vadd.f32 %v4404, %v4436
      %v4469 = vadd.f32 %v4405, %v4437
      %v4470 = vadd.f32 %v4406, %v4438
      %v4471 = vadd.f32 %v4407, %v4439
      %v4472 = vadd.f32 %v4408, %v4440
      %v4473 = vadd.f32 %v4409, %v4441
      %v4474 = vadd.f32 %v4410, %v4442
      %v4475 = vadd.f32 %v4411, %v4443
      %v4476 = vadd.f32 %v4412, %v4444
      %v4477 = vadd.f32 %v4413, %v4445
      %v4478 = vadd.f32 %v4414, %v4446
      %v4479 = vadd.f32 %v4415, %v4447
      %v4480 = vadd.f32 %v4416, %v4448
      %v4481 = vadd.f32 %v4417, %v4449
      %v4482 = vadd.f32 %v4418, %v4450
      %v4483 = vadd.f32 %v4419, %v4451
      %v4484 = vadd.f32 %v4420, %v4452
      %v4485 = vmax.f32 %v4453, -60.0
      %v4486 = vmax.f32 %v4454, -60.0
      %v4487 = vmax.f32 %v4455, -60.0
      %v4488 = vmax.f32 %v4456, -60.0
      %v4489 = vmax.f32 %v4457, -60.0
      %v4490 = vmax.f32 %v4458, -60.0
      %v4491 = vmax.f32 %v4459, -60.0
      %v4492 = vmax.f32 %v4460, -60.0
      %v4493 = vmax.f32 %v4461, -60.0
      %v4494 = vmax.f32 %v4462, -60.0
      %v4495 = vmax.f32 %v4463, -60.0
      %v4496 = vmax.f32 %v4464, -60.0
      %v4497 = vmax.f32 %v4465, -60.0
      %v4498 = vmax.f32 %v4466, -60.0
      %v4499 = vmax.f32 %v4467, -60.0
      %v4500 = vmax.f32 %v4468, -60.0
      %v4501 = vmax.f32 %v4469, -60.0
      %v4502 = vmax.f32 %v4470, -60.0
      %v4503 = vmax.f32 %v4471, -60.0
      %v4504 = vmax.f32 %v4472, -60.0
      %v4505 = vmax.f32 %v4473, -60.0
      %v4506 = vmax.f32 %v4474, -60.0
      %v4507 = vmax.f32 %v4475, -60.0
      %v4508 = vmax.f32 %v4476, -60.0
      %v4509 = vmax.f32 %v4477, -60.0
      %v4510 = vmax.f32 %v4478, -60.0
      %v4511 = vmax.f32 %v4479, -60.0
      %v4512 = vmax.f32 %v4480, -60.0
      %v4513 = vmax.f32 %v4481, -60.0
      %v4514 = vmax.f32 %v4482, -60.0
      %v4515 = vmax.f32 %v4483, -60.0
      %v4516 = vmax.f32 %v4484, -60.0
      %v4517 = vsub.f32 0.0, %v4485
      %v4518 = vsub.f32 0.0, %v4486
      %v4519 = vsub.f32 0.0, %v4487
      %v4520 = vsub.f32 0.0, %v4488
      %v4521 = vsub.f32 0.0, %v4489
      %v4522 = vsub.f32 0.0, %v4490
      %v4523 = vsub.f32 0.0, %v4491
      %v4524 = vsub.f32 0.0, %v4492
      %v4525 = vsub.f32 0.0, %v4493
      %v4526 = vsub.f32 0.0, %v4494
      %v4527 = vsub.f32 0.0, %v4495
      %v4528 = vsub.f32 0.0, %v4496
      %v4529 = vsub.f32 0.0, %v4497
      %v4530 = vsub.f32 0.0, %v4498
      %v4531 = vsub.f32 0.0, %v4499
      %v4532 = vsub.f32 0.0, %v4500
      %v4533 = vsub.f32 0.0, %v4501
      %v4534 = vsub.f32 0.0, %v4502
      %v4535 = vsub.f32 0.0, %v4503
      %v4536 = vsub.f32 0.0, %v4504
      %v4537 = vsub.f32 0.0, %v4505
      %v4538 = vsub.f32 0.0, %v4506
      %v4539 = vsub.f32 0.0, %v4507
      %v4540 = vsub.f32 0.0, %v4508
      %v4541 = vsub.f32 0.0, %v4509
      %v4542 = vsub.f32 0.0, %v4510
      %v4543 = vsub.f32 0.0, %v4511
      %v4544 = vsub.f32 0.0, %v4512
      %v4545 = vsub.f32 0.0, %v4513
      %v4546 = vsub.f32 0.0, %v4514
      %v4547 = vsub.f32 0.0, %v4515
      %v4548 = vsub.f32 0.0, %v4516
      %v4549 = vmul.f32 %v4517, 1.442695
      %v4550 = vpow.pop %v4549
      %v4551 = vmul.f32 %v4518, 1.442695
      %v4552 = vpow.pop %v4551
      %v4553 = vmul.f32 %v4519, 1.442695
      %v4554 = vpow.pop %v4553
      %v4555 = vmul.f32 %v4520, 1.442695
      %v4556 = vpow.pop %v4555
      %v4557 = vmul.f32 %v4521, 1.442695
      %v4558 = vpow.pop %v4557
      %v4559 = vmul.f32 %v4522, 1.442695
      %v4560 = vpow.pop %v4559
      %v4561 = vmul.f32 %v4523, 1.442695
      %v4562 = vpow.pop %v4561
      %v4563 = vmul.f32 %v4524, 1.442695
      %v4564 = vpow.pop %v4563
      %v4565 = vmul.f32 %v4525, 1.442695
      %v4566 = vpow.pop %v4565
      %v4567 = vmul.f32 %v4526, 1.442695
      %v4568 = vpow.pop %v4567
      %v4569 = vmul.f32 %v4527, 1.442695
      %v4570 = vpow.pop %v4569
      %v4571 = vmul.f32 %v4528, 1.442695
      %v4572 = vpow.pop %v4571
      %v4573 = vmul.f32 %v4529, 1.442695
      %v4574 = vpow.pop %v4573
      %v4575 = vmul.f32 %v4530, 1.442695
      %v4576 = vpow.pop %v4575
      %v4577 = vmul.f32 %v4531, 1.442695
      %v4578 = vpow.pop %v4577
      %v4579 = vmul.f32 %v4532, 1.442695
      %v4580 = vpow.pop %v4579
      %v4581 = vmul.f32 %v4533, 1.442695
      %v4582 = vpow.pop %v4581
      %v4583 = vmul.f32 %v4534, 1.442695
      %v4584 = vpow.pop %v4583
      %v4585 = vmul.f32 %v4535, 1.442695
      %v4586 = vpow.pop %v4585
      %v4587 = vmul.f32 %v4536, 1.442695
      %v4588 = vpow.pop %v4587
      %v4589 = vmul.f32 %v4537, 1.442695
      %v4590 = vpow.pop %v4589
      %v4591 = vmul.f32 %v4538, 1.442695
      %v4592 = vpow.pop %v4591
      %v4593 = vmul.f32 %v4539, 1.442695
      %v4594 = vpow.pop %v4593
      %v4595 = vmul.f32 %v4540, 1.442695
      %v4596 = vpow.pop %v4595
      %v4597 = vmul.f32 %v4541, 1.442695
      %v4598 = vpow.pop %v4597
      %v4599 = vmul.f32 %v4542, 1.442695
      %v4600 = vpow.pop %v4599
      %v4601 = vmul.f32 %v4543, 1.442695
      %v4602 = vpow.pop %v4601
      %v4603 = vmul.f32 %v4544, 1.442695
      %v4604 = vpow.pop %v4603
      %v4605 = vmul.f32 %v4545, 1.442695
      %v4606 = vpow.pop %v4605
      %v4607 = vmul.f32 %v4546, 1.442695
      %v4608 = vpow.pop %v4607
      %v4609 = vmul.f32 %v4547, 1.442695
      %v4610 = vpow.pop %v4609
      %v4611 = vmul.f32 %v4548, 1.442695
      %v4612 = vpow.pop %v4611
      %v4613 = vadd.f32 %v4550, 1.0
      %v4614 = vadd.f32 %v4552, 1.0
      %v4615 = vadd.f32 %v4554, 1.0
      %v4616 = vadd.f32 %v4556, 1.0
      %v4617 = vadd.f32 %v4558, 1.0
      %v4618 = vadd.f32 %v4560, 1.0
      %v4619 = vadd.f32 %v4562, 1.0
      %v4620 = vadd.f32 %v4564, 1.0
      %v4621 = vadd.f32 %v4566, 1.0
      %v4622 = vadd.f32 %v4568, 1.0
      %v4623 = vadd.f32 %v4570, 1.0
      %v4624 = vadd.f32 %v4572, 1.0
      %v4625 = vadd.f32 %v4574, 1.0
      %v4626 = vadd.f32 %v4576, 1.0
      %v4627 = vadd.f32 %v4578, 1.0
      %v4628 = vadd.f32 %v4580, 1.0
      %v4629 = vadd.f32 %v4582, 1.0
      %v4630 = vadd.f32 %v4584, 1.0
      %v4631 = vadd.f32 %v4586, 1.0
      %v4632 = vadd.f32 %v4588, 1.0
      %v4633 = vadd.f32 %v4590, 1.0
      %v4634 = vadd.f32 %v4592, 1.0
      %v4635 = vadd.f32 %v4594, 1.0
      %v4636 = vadd.f32 %v4596, 1.0
      %v4637 = vadd.f32 %v4598, 1.0
      %v4638 = vadd.f32 %v4600, 1.0
      %v4639 = vadd.f32 %v4602, 1.0
      %v4640 = vadd.f32 %v4604, 1.0
      %v4641 = vadd.f32 %v4606, 1.0
      %v4642 = vadd.f32 %v4608, 1.0
      %v4643 = vadd.f32 %v4610, 1.0
      %v4644 = vadd.f32 %v4612, 1.0
      %v4645 = vrcp.pop %v4613
      %v4646 = vrcp.pop %v4614
      %v4647 = vrcp.pop %v4615
      %v4648 = vrcp.pop %v4616
      %v4649 = vrcp.pop %v4617
      %v4650 = vrcp.pop %v4618
      %v4651 = vrcp.pop %v4619
      %v4652 = vrcp.pop %v4620
      %v4653 = vrcp.pop %v4621
      %v4654 = vrcp.pop %v4622
      %v4655 = vrcp.pop %v4623
      %v4656 = vrcp.pop %v4624
      %v4657 = vrcp.pop %v4625
      %v4658 = vrcp.pop %v4626
      %v4659 = vrcp.pop %v4627
      %v4660 = vrcp.pop %v4628
      %v4661 = vrcp.pop %v4629
      %v4662 = vrcp.pop %v4630
      %v4663 = vrcp.pop %v4631
      %v4664 = vrcp.pop %v4632
      %v4665 = vrcp.pop %v4633
      %v4666 = vrcp.pop %v4634
      %v4667 = vrcp.pop %v4635
      %v4668 = vrcp.pop %v4636
      %v4669 = vrcp.pop %v4637
      %v4670 = vrcp.pop %v4638
      %v4671 = vrcp.pop %v4639
      %v4672 = vrcp.pop %v4640
      %v4673 = vrcp.pop %v4641
      %v4674 = vrcp.pop %v4642
      %v4675 = vrcp.pop %v4643
      %v4676 = vrcp.pop %v4644
      %v4677 = vmul.f32 %v4453, %v4645
      %v4678 = vmul.f32 %v4454, %v4646
      %v4679 = vmul.f32 %v4455, %v4647
      %v4680 = vmul.f32 %v4456, %v4648
      %v4681 = vmul.f32 %v4457, %v4649
      %v4682 = vmul.f32 %v4458, %v4650
      %v4683 = vmul.f32 %v4459, %v4651
      %v4684 = vmul.f32 %v4460, %v4652
      %v4685 = vmul.f32 %v4461, %v4653
      %v4686 = vmul.f32 %v4462, %v4654
      %v4687 = vmul.f32 %v4463, %v4655
      %v4688 = vmul.f32 %v4464, %v4656
      %v4689 = vmul.f32 %v4465, %v4657
      %v4690 = vmul.f32 %v4466, %v4658
      %v4691 = vmul.f32 %v4467, %v4659
      %v4692 = vmul.f32 %v4468, %v4660
      %v4693 = vmul.f32 %v4469, %v4661
      %v4694 = vmul.f32 %v4470, %v4662
      %v4695 = vmul.f32 %v4471, %v4663
      %v4696 = vmul.f32 %v4472, %v4664
      %v4697 = vmul.f32 %v4473, %v4665
      %v4698 = vmul.f32 %v4474, %v4666
      %v4699 = vmul.f32 %v4475, %v4667
      %v4700 = vmul.f32 %v4476, %v4668
      %v4701 = vmul.f32 %v4477, %v4669
      %v4702 = vmul.f32 %v4478, %v4670
      %v4703 = vmul.f32 %v4479, %v4671
      %v4704 = vmul.f32 %v4480, %v4672
      %v4705 = vmul.f32 %v4481, %v4673
      %v4706 = vmul.f32 %v4482, %v4674
      %v4707 = vmul.f32 %v4483, %v4675
      %v4708 = vmul.f32 %v4484, %v4676
      %v4709 = vpack.c.bf16 %v4678, %v4677
      %v4710 = vpack.c.bf16 %v4680, %v4679
      %v4711 = vpack.c.bf16 %v4682, %v4681
      %v4712 = vpack.c.bf16 %v4684, %v4683
      %v4713 = vpack.c.bf16 %v4686, %v4685
      %v4714 = vpack.c.bf16 %v4688, %v4687
      %v4715 = vpack.c.bf16 %v4690, %v4689
      %v4716 = vpack.c.bf16 %v4692, %v4691
      %v4717 = vpack.c.bf16 %v4694, %v4693
      %v4718 = vpack.c.bf16 %v4696, %v4695
      %v4719 = vpack.c.bf16 %v4698, %v4697
      %v4720 = vpack.c.bf16 %v4700, %v4699
      %v4721 = vpack.c.bf16 %v4702, %v4701
      %v4722 = vpack.c.bf16 %v4704, %v4703
      %v4723 = vpack.c.bf16 %v4706, %v4705
      %v4724 = vpack.c.bf16 %v4708, %v4707
      %v4741 = vunpack.c.l.b16 %v4709
      %v4742 = vunpack.c.h.b16 %v4709
      %v4743 = vunpack.c.l.b16 %v4710
      %v4744 = vunpack.c.h.b16 %v4710
      %v4745 = vunpack.c.l.b16 %v4711
      %v4746 = vunpack.c.h.b16 %v4711
      %v4747 = vunpack.c.l.b16 %v4712
      %v4748 = vunpack.c.h.b16 %v4712
      %v4749 = vunpack.c.l.b16 %v4713
      %v4750 = vunpack.c.h.b16 %v4713
      %v4751 = vunpack.c.l.b16 %v4714
      %v4752 = vunpack.c.h.b16 %v4714
      %v4753 = vunpack.c.l.b16 %v4715
      %v4754 = vunpack.c.h.b16 %v4715
      %v4755 = vunpack.c.l.b16 %v4716
      %v4756 = vunpack.c.h.b16 %v4716
      %v4757 = vunpack.c.l.b16 %v4717
      %v4758 = vunpack.c.h.b16 %v4717
      %v4759 = vunpack.c.l.b16 %v4718
      %v4760 = vunpack.c.h.b16 %v4718
      %v4761 = vunpack.c.l.b16 %v4719
      %v4762 = vunpack.c.h.b16 %v4719
      %v4763 = vunpack.c.l.b16 %v4720
      %v4764 = vunpack.c.h.b16 %v4720
      %v4765 = vunpack.c.l.b16 %v4721
      %v4766 = vunpack.c.h.b16 %v4721
      %v4767 = vunpack.c.l.b16 %v4722
      %v4768 = vunpack.c.h.b16 %v4722
      %v4769 = vunpack.c.l.b16 %v4723
      %v4770 = vunpack.c.h.b16 %v4723
      %v4771 = vunpack.c.l.b16 %v4724
      %v4772 = vunpack.c.h.b16 %v4724
      %v4773 = vpack.c.b16 %v4741, %v4741
      %v4774 = vpack.c.b16 %v4742, %v4742
      %v4775 = vpack.c.b16 %v4743, %v4743
      %v4776 = vpack.c.b16 %v4744, %v4744
      %v4777 = vpack.c.b16 %v4745, %v4745
      %v4778 = vpack.c.b16 %v4746, %v4746
      %v4779 = vpack.c.b16 %v4747, %v4747
      %v4780 = vpack.c.b16 %v4748, %v4748
      %v4781 = vpack.c.b16 %v4749, %v4749
      %v4782 = vpack.c.b16 %v4750, %v4750
      %v4783 = vpack.c.b16 %v4751, %v4751
      %v4784 = vpack.c.b16 %v4752, %v4752
      %v4785 = vpack.c.b16 %v4753, %v4753
      %v4786 = vpack.c.b16 %v4754, %v4754
      %v4787 = vpack.c.b16 %v4755, %v4755
      %v4788 = vpack.c.b16 %v4756, %v4756
      %v4789 = vpack.c.b16 %v4757, %v4757
      %v4790 = vpack.c.b16 %v4758, %v4758
      %v4791 = vpack.c.b16 %v4759, %v4759
      %v4792 = vpack.c.b16 %v4760, %v4760
      %v4793 = vpack.c.b16 %v4761, %v4761
      %v4794 = vpack.c.b16 %v4762, %v4762
      %v4795 = vpack.c.b16 %v4763, %v4763
      %v4796 = vpack.c.b16 %v4764, %v4764
      %v4797 = vpack.c.b16 %v4765, %v4765
      %v4798 = vpack.c.b16 %v4766, %v4766
      %v4799 = vpack.c.b16 %v4767, %v4767
      %v4800 = vpack.c.b16 %v4768, %v4768
      %v4801 = vpack.c.b16 %v4769, %v4769
      %v4802 = vpack.c.b16 %v4770, %v4770
      %v4803 = vpack.c.b16 %v4771, %v4771
      %v4804 = vpack.c.b16 %v4772, %v4772
      %4837 = vst [vmem:[%s255] sm:$0xf] %v4773
      %4838 = vst [vmem:[%s255 + $0x4] sm:$0xf] %v4774
      %4839 = vst [vmem:[%s255 + $0x8] sm:$0xf] %v4775
      %4840 = vst [vmem:[%s255 + $0xc] sm:$0xf] %v4776
      %4841 = vst [vmem:[%s255 + $0x10] sm:$0xf] %v4777
      %4842 = vst [vmem:[%s255 + $0x14] sm:$0xf] %v4778
      %4843 = vst [vmem:[%s255 + $0x18] sm:$0xf] %v4779
      %4844 = vst [vmem:[%s255 + $0x1c] sm:$0xf] %v4780
      %4845 = vst [vmem:[%s255 + $0x20] sm:$0xf] %v4781
      %4846 = vst [vmem:[%s255 + $0x24] sm:$0xf] %v4782
      %4847 = vst [vmem:[%s255 + $0x28] sm:$0xf] %v4783
      %4848 = vst [vmem:[%s255 + $0x2c] sm:$0xf] %v4784
      %4849 = vst [vmem:[%s255 + $0x30] sm:$0xf] %v4785
      %4850 = vst [vmem:[%s255 + $0x34] sm:$0xf] %v4786
      %4851 = vst [vmem:[%s255 + $0x38] sm:$0xf] %v4787
      %4852 = vst [vmem:[%s255 + $0x3c] sm:$0xf] %v4788
      %4853 = vst [vmem:[%s255 + $0x40] sm:$0xf] %v4789
      %4854 = vst [vmem:[%s255 + $0x44] sm:$0xf] %v4790
      %4855 = vst [vmem:[%s255 + $0x48] sm:$0xf] %v4791
      %4856 = vst [vmem:[%s255 + $0x4c] sm:$0xf] %v4792
      %4857 = vst [vmem:[%s255 + $0x50] sm:$0xf] %v4793
      %4858 = vst [vmem:[%s255 + $0x54] sm:$0xf] %v4794
      %4859 = vst [vmem:[%s255 + $0x58] sm:$0xf] %v4795
      %4860 = vst [vmem:[%s255 + $0x5c] sm:$0xf] %v4796
      %4861 = vst [vmem:[%s255 + $0x60] sm:$0xf] %v4797
      %4862 = vst [vmem:[%s255 + $0x64] sm:$0xf] %v4798
      %4863 = vst [vmem:[%s255 + $0x68] sm:$0xf] %v4799
      %4864 = vst [vmem:[%s255 + $0x6c] sm:$0xf] %v4800
      %4865 = vst [vmem:[%s255 + $0x70] sm:$0xf] %v4801
      %4866 = vst [vmem:[%s255 + $0x74] sm:$0xf] %v4802
      %4867 = vst [vmem:[%s255 + $0x78] sm:$0xf] %v4803
      %4868 = vst [vmem:[%s255 + $0x7c] sm:$0xf] %v4804
      %s4869 = smul.u32 16, %s21
      %p4870 = scmp.lt.s32.totalorder %s20, 1
      %s4871 = scalar_select %p4870, %s20, 1
      %p4872 = scmp.lt.s32.totalorder %s4869, 15
      %s4873 = scalar_select %p4872, %s4869, 15
      %s4874 = smul.addr %s4873, 2
      %s4875 = smul.addr %s4871, 32
      %s4876 = sadd.s32 %s4874, %s4875
      %s4877 = smul.addr %s4876, 4
      %s4878 = scalar_lea.vmem %s5, %s4877
      // Predicated region
      $region41: #{res_conv_block.1} parent=39 // pred_check
        %p4879 = pneg %p160
      $region42: #{res_conv_block.1} parent=39 // pred_check_branch
        %4881 = sbr.rel (%p4879) target = $region44
      $region43: #{res_conv_block.1} parent=39 // pred_region
        %s4882 = smul.u32 16, %s21
      $region44: #{res_conv_block.1} parent=39 // pred_fallthru
        _
    $region40: #{res_conv_block.1} parent=5 // pred_fallthru
      _
    %p4883 = scmp.le.s32.totalorder 2, %s11
    // Predicated region
    $region45: #{res_conv_block.1} parent=5 // pred_check
      %p4884 = pneg %p4883
    $region46: #{res_conv_block.1} parent=5 // pred_check_branch
      %4886 = sbr.rel (%p4884) target = $region48
    $region47: #{res_conv_block.1} parent=5 // pred_region
      %s4887 = ssub.s32 %s11, 2
      // Predicated region
      $region49: #{res_conv_block.1} parent=47 // pred_check
        %p4888 = pneg %p166
      $region50: #{res_conv_block.1} parent=47 // pred_check_branch
        %4890 = sbr.rel (%p4888) target = $region52
      $region51: #{res_conv_block.1} parent=47 // pred_region
        %s4891 = smul.u32 16, %s23
        %p4892 = scmp.lt.s32.totalorder %s22, 1
        %s4893 = scalar_select %p4892, %s22, 1
        %p4894 = scmp.lt.s32.totalorder %s4891, 15
        %s4895 = scalar_select %p4894, %s4891, 15
        %s4896 = smul.addr %s4895, 2
        %s4897 = smul.addr %s4893, 32
        %s4898 = sadd.s32 %s4896, %s4897
        %s4899 = smul.addr %s4898, 4
        %s4900 = scalar_lea.vmem %s5, %s4899
      $region52: #{res_conv_block.1} parent=47 // pred_fallthru
        _
    $region48: #{res_conv_block.1} parent=5 // pred_fallthru
      _
  $region6: #{res_conv_block.1} parent=0 // loop_footer
    %s15 = sadd.s32 1, %s11
  $region7: #{res_conv_block.1} parent=0 // loop_footer_branch
    %10 = sbr.rel target = $region3
  $region8: #{res_conv_block.1} parent=0 // loop_exit
    _

</llo_original>
